<compile_context>
chip_gen: v5e
topology: v5e:2x2
jax: 0.10.0
libtpu: 0.0.40
codegen_flags: <defaults>
</compile_context>

<pallas_src>
import functools

import jax
import jax.numpy as jnp
from jax import lax
from jax.experimental import pallas as pl
from jax.experimental.pallas import tpu as pltpu


def _dfc_kl_kernel(x_ref, cluster_ref, count_ref, *,
                   stage_num: int, num_cluster: int, fea_size: int):
    """One grid step == one image; runs the whole stage_num loop on-chip.

    x_ref:       (1, C, N)   f32  features, channels on sublanes, pixels on lanes
    cluster_ref: (1, 1, N)   i32  final (relabeled) cluster id per pixel (lane-dense)
    count_ref:   (1, 1, 128) i32  number of surviving clusters, broadcast on lanes
    """
    x = x_ref[0].astype(jnp.float32)                       # (C, N)
    C, N = x.shape
    K = num_cluster
    sqrt = int(round(K ** 0.5))
    step = fea_size // sqrt

    # torch.where(x == 0, 1e-6, x): one VPU select, fused here (no wrapper op).
    x = jnp.where(x == 0.0, jnp.float32(1e-6), x)

    # Loop-invariant pieces, hoisted once.
    xT = x.T                                               # (N, C) segment-sum RHS
    k_ids = lax.broadcasted_iota(jnp.int32, (K, N), 0)     # cluster (sublane) index
    n_ids = lax.broadcasted_iota(jnp.int32, (K, N), 1)     # pixel (lane) index
    neg_big = jnp.float32(-1e18)                           # dead-prototype sentinel

    # Initial prototypes = x at the static grid pixels.  gidx is built from an
    # iota with compare/add only (no vector int div, no host constants), and
    # proto0 = onehot0 @ x.T reuses the same segment-sum path as the loop body.
    ki = lax.broadcasted_iota(jnp.int32, (K, 1), 0)
    row = jnp.zeros((K, 1), jnp.int32)
    for i in range(1, sqrt):
        row = row + (ki >= i * sqrt).astype(jnp.int32)     # row = ki // sqrt
    col = ki - row * sqrt                                  # col = ki %  sqrt
    gidx = row * (step * fea_size) + col * step            # flat pixel index (K, 1)
    onehot0 = (n_ids == gidx).astype(jnp.float32)          # (K, N)
    sums0 = lax.dot_general(onehot0, xT, (((1,), (0,)), ((), ())),
                            preferred_element_type=jnp.float32)       # (K, C)
    counts0 = jnp.ones((K, 1), jnp.float32)                # one pixel per prototype

    def body(_, carry):
        sums, counts, _ = carry
        active = counts > 0.0                              # (K, 1)
        # logp = log(mean) = log(sum) - log(count); dead rows get -1e18 so they
        # can never win the argmax below (x > 0), with no f32 overflow risk.
        logp = jnp.where(
            active,
            jnp.log(jnp.maximum(sums, 1e-30)) - jnp.log(jnp.maximum(counts, 1.0)),
            neg_big)                                       # (K, C)

        # cross[k, n] = sum_c logp[k, c] * x[c, n]: depth-C VPU broadcast-MACs
        # (exact f32; keeps the MXU free for the 256-deep segment-sum matmul).
        cross = logp[:, 0:1] * x[0:1, :]
        for c in range(1, C):
            cross = cross + logp[:, c:c + 1] * x[c:c + 1, :]           # (K, N)

        # argmin_k KL(x_n || p_k) == argmax_k cross[k, n] (x*log x is k-invariant),
        # first-index tie-break == torch.min over the compacted prototype list.
        max_val = jnp.max(cross, axis=0, keepdims=True)    # (1, N)
        cluster = jnp.min(jnp.where(cross >= max_val, k_ids, K),
                          axis=0, keepdims=True).astype(jnp.int32)     # (1, N)

        # Per-cluster sums (MXU, contraction depth N) and counts (XLU lane-reduce).
        onehot = (cluster == k_ids).astype(jnp.float32)    # (K, N)
        # TODO(synk): xT is loop-invariant; if the bundle dump shows one MXU
        # weight push per stage, hoist it with pltpu.matmul_push_rhs/acc_lhs/pop.
        sums_new = lax.dot_general(onehot, xT, (((1,), (0,)), ((), ())),
                                   preferred_element_type=jnp.float32)  # (K, C)
        counts_new = jnp.sum(onehot, axis=1, keepdims=True)              # (K, 1)
        return sums_new, counts_new, cluster

    cluster0 = jnp.zeros((1, N), jnp.int32)
    _, counts, cluster = lax.fori_loop(0, stage_num, body,
                                       (sums0, counts0, cluster0), unroll=True)

    # Final relabeling: new id = rank of the assigned prototype among survivors,
    # exactly the `cluster[cluster == idx_] = nonzero(idx == idx_)` loop.
    active_i = (counts > 0.0).astype(jnp.int32)            # (K, 1)
    below = (k_ids < cluster).astype(jnp.int32)            # (K, N)
    new_cluster = jnp.sum(below * active_i, axis=0, keepdims=True)      # (1, N)

    cluster_ref[0] = new_cluster.astype(jnp.int32)
    n_active = jnp.sum(active_i, axis=0, keepdims=True)    # (1, 1)
    count_ref[0] = jnp.broadcast_to(n_active, (1, 128))    # lane-dense scalar row


@functools.partial(jax.jit, static_argnames=("number_cluster", "stage_num", "fea_size"))
def dfc_kl(x, *, number_cluster: int = 16, stage_num: int = 10, fea_size: int = 16):
    """Pallas implementation of DFC_KL.forward, batched over a leading axis.

    x: (B, C, H, W) or (C, H, W) non-negative features.
    Returns (cluster: (B, H*W) int32, num_clusters: (B,) int32); squeezed if the
    input was unbatched.  Everything stays on device; the caller syncs.
    """
    single = (x.ndim == 3)
    if single:
        x = x[None]
    B, C, H, W = x.shape
    assert H == fea_size and W == fea_size, "module assumes h == w == fea_size"
    sqrt = int(round(number_cluster ** 0.5))
    assert sqrt * sqrt == number_cluster and fea_size % sqrt == 0
    N = H * W
    K = number_cluster

    # Channels-major flatten is free (no transpose); everything else is in-kernel.
    xf = x.reshape(B, C, N).astype(jnp.float32)

    kernel = functools.partial(_dfc_kl_kernel, stage_num=stage_num,
                               num_cluster=K, fea_size=fea_size)

    cost = pl.CostEstimate(
        flops=int(B * stage_num * (4 * K * C * N + 8 * K * N)),
        transcendentals=int(B * stage_num * 2 * K * C),
        bytes_accessed=int(B * (C * N * 4 + N * 4 + 128 * 4)))

    cluster3d, count3d = pl.pallas_call(
        kernel,
        out_shape=(jax.ShapeDtypeStruct((B, 1, N), jnp.int32),
                   jax.ShapeDtypeStruct((B, 1, 128), jnp.int32)),
        grid=(B,),
        in_specs=[pl.BlockSpec((1, C, N), lambda b: (b, 0, 0))],
        out_specs=(pl.BlockSpec((1, 1, N), lambda b: (b, 0, 0)),
                   pl.BlockSpec((1, 1, 128), lambda b: (b, 0, 0))),
        compiler_params=pltpu.CompilerParams(
            dimension_semantics=("parallel",)),     # v7x: images split across both TCs
        cost_estimate=cost,
    )(xf)

    cluster = cluster3d.reshape(B, N)
    count = count3d[:, 0, 0]
    if single:
        return cluster[0], count[0]
    return cluster, count


if __name__ == "__main__":
    key = jax.random.PRNGKey(0)
    B, C, fea_size = 2, 8, 16   # h == w == fea_size (module indexes grid into h*w)
    number_cluster, stage_num = 16, 10

    # Non-negative features (CAM-like), as required by the KL distance.
    x = jax.random.uniform(key, (B, C, fea_size, fea_size), dtype=jnp.float32)

    cluster, count = dfc_kl(x, number_cluster=number_cluster,
                            stage_num=stage_num, fea_size=fea_size)
    cluster, count = jax.block_until_ready((cluster, count))

    # Basic semantic invariants of the module's output, per image.
    assert cluster.shape == (B, fea_size * fea_size)
    assert cluster.dtype == jnp.int32
    assert count.shape == (B,)
    for b in range(B):
        nb = int(count[b])      # host sync only here, at the caller's discretion
        assert 1 <= nb <= number_cluster
        assert int(cluster[b].min()) == 0
        assert int(cluster[b].max()) == nb - 1

    print("KERNEL_OK")
</pallas_src>

<mosaic_0001>
module attributes {stable_mosaic.version = 11 : i64} {
  func.func @_dfc_kl_kernel(%arg0: i32, %arg1: memref<1x8x256xf32, #tpu.memory_space<vmem>>, %arg2: memref<1x1x256xi32, #tpu.memory_space<vmem>>, %arg3: memref<1x1x128xi32, #tpu.memory_space<vmem>>) attributes {dimension_semantics = [#tpu.dimension_semantics<parallel>], iteration_bounds = array<i64: 2>, scalar_prefetch = 0 : i64, scratch_operands = 0 : i64, tpu.core_type = #tpu.core_type<tc>, window_params = [{transform_indices = @transform_0, window_bounds = array<i64: 1, 8, 256>}, {transform_indices = @transform_1, window_bounds = array<i64: 1, 1, 256>}, {transform_indices = @transform_2, window_bounds = array<i64: 1, 1, 128>}]} {
    %c0 = arith.constant 0 : index
    %c0_0 = arith.constant 0 : index
    %c0_1 = arith.constant 0 : index
    %0 = vector.load %arg1[%c0, %c0_0, %c0_1] : memref<1x8x256xf32, #tpu.memory_space<vmem>>, vector<1x8x256xf32>
    %1 = vector.shape_cast %0 : vector<1x8x256xf32> to vector<8x256xf32>
    %cst = arith.constant 0.000000e+00 : f32
    %2 = vector.broadcast %cst : f32 to vector<8x256xf32>
    %3 = arith.cmpf oeq, %1, %2 : vector<8x256xf32>
    %cst_2 = arith.constant 9.99999997E-7 : f32
    %4 = vector.broadcast %cst_2 : f32 to vector<8x256xf32>
    %5 = arith.select %3, %4, %1 : vector<8x256xi1>, vector<8x256xf32>
    %6 = tpu.transpose %5, [1, 0] : vector<8x256xf32> -> vector<256x8xf32>
    %7 = tpu.iota {dimensions = array<i32: 0>} : vector<16x256xi32>
    %8 = tpu.iota {dimensions = array<i32: 1>} : vector<16x256xi32>
    %9 = tpu.iota {dimensions = array<i32: 0>} : vector<16x1xi32>
    %c0_i32 = arith.constant 0 : i32
    %10 = vector.broadcast %c0_i32 : i32 to vector<16x1xi32>
    %c4_i32 = arith.constant 4 : i32
    %11 = vector.broadcast %c4_i32 : i32 to vector<16x1xi32>
    %12 = arith.cmpi sge, %9, %11 : vector<16x1xi32>
    %13 = arith.extui %12 : vector<16x1xi1> to vector<16x1xi32>
    %14 = arith.addi %10, %13 : vector<16x1xi32>
    %c8_i32 = arith.constant 8 : i32
    %15 = vector.broadcast %c8_i32 : i32 to vector<16x1xi32>
    %16 = arith.cmpi sge, %9, %15 : vector<16x1xi32>
    %17 = arith.extui %16 : vector<16x1xi1> to vector<16x1xi32>
    %18 = arith.addi %14, %17 : vector<16x1xi32>
    %c12_i32 = arith.constant 12 : i32
    %19 = vector.broadcast %c12_i32 : i32 to vector<16x1xi32>
    %20 = arith.cmpi sge, %9, %19 : vector<16x1xi32>
    %21 = arith.extui %20 : vector<16x1xi1> to vector<16x1xi32>
    %22 = arith.addi %18, %21 : vector<16x1xi32>
    %c4_i32_3 = arith.constant 4 : i32
    %23 = vector.broadcast %c4_i32_3 : i32 to vector<16x1xi32>
    %24 = arith.muli %22, %23 : vector<16x1xi32>
    %25 = arith.subi %9, %24 : vector<16x1xi32>
    %c64_i32 = arith.constant 64 : i32
    %26 = vector.broadcast %c64_i32 : i32 to vector<16x1xi32>
    %27 = arith.muli %22, %26 : vector<16x1xi32>
    %c4_i32_4 = arith.constant 4 : i32
    %28 = vector.broadcast %c4_i32_4 : i32 to vector<16x1xi32>
    %29 = arith.muli %25, %28 : vector<16x1xi32>
    %30 = arith.addi %27, %29 : vector<16x1xi32>
    %31 = vector.broadcast %30 : vector<16x1xi32> to vector<16x256xi32>
    %32 = arith.cmpi eq, %8, %31 : vector<16x256xi32>
    %33 = arith.extui %32 : vector<16x256xi1> to vector<16x256xi32>
    %34 = arith.sitofp %33 : vector<16x256xi32> to vector<16x256xf32>
    %cst_5 = arith.constant dense<0.000000e+00> : vector<16x8xf32>
    %35 = tpu.matmul %34, %6, %cst_5 {dimension_numbers = #tpu.dot_dimension_numbers<[1], [0], [0], [1], [0, 0, 1, 1], [], []>} : vector<16x256xf32>, vector<256x8xf32>, vector<16x8xf32> -> vector<16x8xf32>
    %cst_6 = arith.constant 1.000000e+00 : f32
    %36 = vector.broadcast %cst_6 : f32 to vector<16x1xf32>
    %c0_i32_7 = arith.constant 0 : i32
    %37 = vector.broadcast %c0_i32_7 : i32 to vector<1x256xi32>
    %cst_8 = arith.constant -9.99999984E+17 : f32
    %c0_i32_9 = arith.constant 0 : i32
    %cst_10 = arith.constant 0.000000e+00 : f32
    %38 = vector.broadcast %cst_10 : f32 to vector<16x1xf32>
    %39 = arith.cmpf ogt, %36, %38 : vector<16x1xf32>
    %cst_11 = arith.constant 1.000000e-30 : f32
    %40 = vector.broadcast %cst_11 : f32 to vector<16x8xf32>
    %41 = arith.maximumf %35, %40 : vector<16x8xf32>
    %42 = math.log %41 : vector<16x8xf32>
    %cst_12 = arith.constant 1.000000e+00 : f32
    %43 = vector.broadcast %cst_12 : f32 to vector<16x1xf32>
    %44 = arith.maximumf %36, %43 : vector<16x1xf32>
    %45 = math.log %44 : vector<16x1xf32>
    %46 = vector.broadcast %45 : vector<16x1xf32> to vector<16x8xf32>
    %47 = arith.subf %42, %46 : vector<16x8xf32>
    %48 = vector.shape_cast %39 : vector<16x1xi1> to vector<16x1xi1>
    %49 = vector.broadcast %48 : vector<16x1xi1> to vector<16x8xi1>
    %50 = vector.broadcast %cst_8 : f32 to vector<16x8xf32>
    %51 = arith.select %49, %47, %50 : vector<16x8xi1>, vector<16x8xf32>
    %52 = vector.extract_strided_slice %51 {offsets = [0, 0], sizes = [16, 1], strides = [1, 1]} : vector<16x8xf32> to vector<16x1xf32>
    %53 = vector.extract_strided_slice %5 {offsets = [0, 0], sizes = [1, 256], strides = [1, 1]} : vector<8x256xf32> to vector<1x256xf32>
    %54 = vector.broadcast %52 : vector<16x1xf32> to vector<16x256xf32>
    %55 = vector.broadcast %53 : vector<1x256xf32> to vector<16x256xf32>
    %56 = arith.mulf %54, %55 : vector<16x256xf32>
    %57 = vector.extract_strided_slice %51 {offsets = [0, 1], sizes = [16, 1], strides = [1, 1]} : vector<16x8xf32> to vector<16x1xf32>
    %58 = vector.extract_strided_slice %5 {offsets = [1, 0], sizes = [1, 256], strides = [1, 1]} : vector<8x256xf32> to vector<1x256xf32>
    %59 = vector.broadcast %57 : vector<16x1xf32> to vector<16x256xf32>
    %60 = vector.broadcast %58 : vector<1x256xf32> to vector<16x256xf32>
    %61 = arith.mulf %59, %60 : vector<16x256xf32>
    %62 = arith.addf %56, %61 : vector<16x256xf32>
    %63 = vector.extract_strided_slice %51 {offsets = [0, 2], sizes = [16, 1], strides = [1, 1]} : vector<16x8xf32> to vector<16x1xf32>
    %64 = vector.extract_strided_slice %5 {offsets = [2, 0], sizes = [1, 256], strides = [1, 1]} : vector<8x256xf32> to vector<1x256xf32>
    %65 = vector.broadcast %63 : vector<16x1xf32> to vector<16x256xf32>
    %66 = vector.broadcast %64 : vector<1x256xf32> to vector<16x256xf32>
    %67 = arith.mulf %65, %66 : vector<16x256xf32>
    %68 = arith.addf %62, %67 : vector<16x256xf32>
    %69 = vector.extract_strided_slice %51 {offsets = [0, 3], sizes = [16, 1], strides = [1, 1]} : vector<16x8xf32> to vector<16x1xf32>
    %70 = vector.extract_strided_slice %5 {offsets = [3, 0], sizes = [1, 256], strides = [1, 1]} : vector<8x256xf32> to vector<1x256xf32>
    %71 = vector.broadcast %69 : vector<16x1xf32> to vector<16x256xf32>
    %72 = vector.broadcast %70 : vector<1x256xf32> to vector<16x256xf32>
    %73 = arith.mulf %71, %72 : vector<16x256xf32>
    %74 = arith.addf %68, %73 : vector<16x256xf32>
    %75 = vector.extract_strided_slice %51 {offsets = [0, 4], sizes = [16, 1], strides = [1, 1]} : vector<16x8xf32> to vector<16x1xf32>
    %76 = vector.extract_strided_slice %5 {offsets = [4, 0], sizes = [1, 256], strides = [1, 1]} : vector<8x256xf32> to vector<1x256xf32>
    %77 = vector.broadcast %75 : vector<16x1xf32> to vector<16x256xf32>
    %78 = vector.broadcast %76 : vector<1x256xf32> to vector<16x256xf32>
    %79 = arith.mulf %77, %78 : vector<16x256xf32>
    %80 = arith.addf %74, %79 : vector<16x256xf32>
    %81 = vector.extract_strided_slice %51 {offsets = [0, 5], sizes = [16, 1], strides = [1, 1]} : vector<16x8xf32> to vector<16x1xf32>
    %82 = vector.extract_strided_slice %5 {offsets = [5, 0], sizes = [1, 256], strides = [1, 1]} : vector<8x256xf32> to vector<1x256xf32>
    %83 = vector.broadcast %81 : vector<16x1xf32> to vector<16x256xf32>
    %84 = vector.broadcast %82 : vector<1x256xf32> to vector<16x256xf32>
    %85 = arith.mulf %83, %84 : vector<16x256xf32>
    %86 = arith.addf %80, %85 : vector<16x256xf32>
    %87 = vector.extract_strided_slice %51 {offsets = [0, 6], sizes = [16, 1], strides = [1, 1]} : vector<16x8xf32> to vector<16x1xf32>
    %88 = vector.extract_strided_slice %5 {offsets = [6, 0], sizes = [1, 256], strides = [1, 1]} : vector<8x256xf32> to vector<1x256xf32>
    %89 = vector.broadcast %87 : vector<16x1xf32> to vector<16x256xf32>
    %90 = vector.broadcast %88 : vector<1x256xf32> to vector<16x256xf32>
    %91 = arith.mulf %89, %90 : vector<16x256xf32>
    %92 = arith.addf %86, %91 : vector<16x256xf32>
    %93 = vector.extract_strided_slice %51 {offsets = [0, 7], sizes = [16, 1], strides = [1, 1]} : vector<16x8xf32> to vector<16x1xf32>
    %94 = vector.extract_strided_slice %5 {offsets = [7, 0], sizes = [1, 256], strides = [1, 1]} : vector<8x256xf32> to vector<1x256xf32>
    %95 = vector.broadcast %93 : vector<16x1xf32> to vector<16x256xf32>
    %96 = vector.broadcast %94 : vector<1x256xf32> to vector<16x256xf32>
    %97 = arith.mulf %95, %96 : vector<16x256xf32>
    %98 = arith.addf %92, %97 : vector<16x256xf32>
    %cst_13 = arith.constant dense<0xFF800000> : vector<256xf32>
    %99 = vector.multi_reduction <maximumf>, %98, %cst_13 [0] : vector<16x256xf32> to vector<256xf32>
    %100 = vector.shape_cast %99 : vector<256xf32> to vector<1x256xf32>
    %101 = vector.broadcast %100 : vector<1x256xf32> to vector<16x256xf32>
    %102 = arith.cmpf oge, %98, %101 : vector<16x256xf32>
    %c16_i32 = arith.constant 16 : i32
    %103 = vector.broadcast %c16_i32 : i32 to vector<16x256xi32>
    %104 = arith.select %102, %7, %103 : vector<16x256xi1>, vector<16x256xi32>
    %cst_14 = arith.constant dense<2147483647> : vector<256xi32>
    %105 = vector.multi_reduction <minsi>, %104, %cst_14 [0] : vector<16x256xi32> to vector<256xi32>
    %106 = vector.shape_cast %105 : vector<256xi32> to vector<1x256xi32>
    %107 = vector.broadcast %106 : vector<1x256xi32> to vector<16x256xi32>
    %108 = arith.cmpi eq, %107, %7 : vector<16x256xi32>
    %109 = arith.extui %108 : vector<16x256xi1> to vector<16x256xi32>
    %110 = arith.sitofp %109 : vector<16x256xi32> to vector<16x256xf32>
    %cst_15 = arith.constant dense<0.000000e+00> : vector<16x8xf32>
    %111 = tpu.matmul %110, %6, %cst_15 {dimension_numbers = #tpu.dot_dimension_numbers<[1], [0], [0], [1], [0, 0, 1, 1], [], []>} : vector<16x256xf32>, vector<256x8xf32>, vector<16x8xf32> -> vector<16x8xf32>
    %cst_16 = arith.constant dense<0.000000e+00> : vector<16xf32>
    %112 = vector.multi_reduction <add>, %110, %cst_16 [1] : vector<16x256xf32> to vector<16xf32>
    %113 = vector.shape_cast %112 : vector<16xf32> to vector<16x1xf32>
    %c1_i32 = arith.constant 1 : i32
    %cst_17 = arith.constant 0.000000e+00 : f32
    %114 = vector.broadcast %cst_17 : f32 to vector<16x1xf32>
    %115 = arith.cmpf ogt, %113, %114 : vector<16x1xf32>
    %cst_18 = arith.constant 1.000000e-30 : f32
    %116 = vector.broadcast %cst_18 : f32 to vector<16x8xf32>
    %117 = arith.maximumf %111, %116 : vector<16x8xf32>
    %118 = math.log %117 : vector<16x8xf32>
    %cst_19 = arith.constant 1.000000e+00 : f32
    %119 = vector.broadcast %cst_19 : f32 to vector<16x1xf32>
    %120 = arith.maximumf %113, %119 : vector<16x1xf32>
    %121 = math.log %120 : vector<16x1xf32>
    %122 = vector.broadcast %121 : vector<16x1xf32> to vector<16x8xf32>
    %123 = arith.subf %118, %122 : vector<16x8xf32>
    %124 = vector.shape_cast %115 : vector<16x1xi1> to vector<16x1xi1>
    %125 = vector.broadcast %124 : vector<16x1xi1> to vector<16x8xi1>
    %126 = vector.broadcast %cst_8 : f32 to vector<16x8xf32>
    %127 = arith.select %125, %123, %126 : vector<16x8xi1>, vector<16x8xf32>
    %128 = vector.extract_strided_slice %127 {offsets = [0, 0], sizes = [16, 1], strides = [1, 1]} : vector<16x8xf32> to vector<16x1xf32>
    %129 = vector.extract_strided_slice %5 {offsets = [0, 0], sizes = [1, 256], strides = [1, 1]} : vector<8x256xf32> to vector<1x256xf32>
    %130 = vector.broadcast %128 : vector<16x1xf32> to vector<16x256xf32>
    %131 = vector.broadcast %129 : vector<1x256xf32> to vector<16x256xf32>
    %132 = arith.mulf %130, %131 : vector<16x256xf32>
    %133 = vector.extract_strided_slice %127 {offsets = [0, 1], sizes = [16, 1], strides = [1, 1]} : vector<16x8xf32> to vector<16x1xf32>
    %134 = vector.extract_strided_slice %5 {offsets = [1, 0], sizes = [1, 256], strides = [1, 1]} : vector<8x256xf32> to vector<1x256xf32>
    %135 = vector.broadcast %133 : vector<16x1xf32> to vector<16x256xf32>
    %136 = vector.broadcast %134 : vector<1x256xf32> to vector<16x256xf32>
    %137 = arith.mulf %135, %136 : vector<16x256xf32>
    %138 = arith.addf %132, %137 : vector<16x256xf32>
    %139 = vector.extract_strided_slice %127 {offsets = [0, 2], sizes = [16, 1], strides = [1, 1]} : vector<16x8xf32> to vector<16x1xf32>
    %140 = vector.extract_strided_slice %5 {offsets = [2, 0], sizes = [1, 256], strides = [1, 1]} : vector<8x256xf32> to vector<1x256xf32>
    %141 = vector.broadcast %139 : vector<16x1xf32> to vector<16x256xf32>
    %142 = vector.broadcast %140 : vector<1x256xf32> to vector<16x256xf32>
    %143 = arith.mulf %141, %142 : vector<16x256xf32>
    %144 = arith.addf %138, %143 : vector<16x256xf32>
    %145 = vector.extract_strided_slice %127 {offsets = [0, 3], sizes = [16, 1], strides = [1, 1]} : vector<16x8xf32> to vector<16x1xf32>
    %146 = vector.extract_strided_slice %5 {offsets = [3, 0], sizes = [1, 256], strides = [1, 1]} : vector<8x256xf32> to vector<1x256xf32>
    %147 = vector.broadcast %145 : vector<16x1xf32> to vector<16x256xf32>
    %148 = vector.broadcast %146 : vector<1x256xf32> to vector<16x256xf32>
    %149 = arith.mulf %147, %148 : vector<16x256xf32>
    %150 = arith.addf %144, %149 : vector<16x256xf32>
    %151 = vector.extract_strided_slice %127 {offsets = [0, 4], sizes = [16, 1], strides = [1, 1]} : vector<16x8xf32> to vector<16x1xf32>
    %152 = vector.extract_strided_slice %5 {offsets = [4, 0], sizes = [1, 256], strides = [1, 1]} : vector<8x256xf32> to vector<1x256xf32>
    %153 = vector.broadcast %151 : vector<16x1xf32> to vector<16x256xf32>
    %154 = vector.broadcast %152 : vector<1x256xf32> to vector<16x256xf32>
    %155 = arith.mulf %153, %154 : vector<16x256xf32>
    %156 = arith.addf %150, %155 : vector<16x256xf32>
    %157 = vector.extract_strided_slice %127 {offsets = [0, 5], sizes = [16, 1], strides = [1, 1]} : vector<16x8xf32> to vector<16x1xf32>
    %158 = vector.extract_strided_slice %5 {offsets = [5, 0], sizes = [1, 256], strides = [1, 1]} : vector<8x256xf32> to vector<1x256xf32>
    %159 = vector.broadcast %157 : vector<16x1xf32> to vector<16x256xf32>
    %160 = vector.broadcast %158 : vector<1x256xf32> to vector<16x256xf32>
    %161 = arith.mulf %159, %160 : vector<16x256xf32>
    %162 = arith.addf %156, %161 : vector<16x256xf32>
    %163 = vector.extract_strided_slice %127 {offsets = [0, 6], sizes = [16, 1], strides = [1, 1]} : vector<16x8xf32> to vector<16x1xf32>
    %164 = vector.extract_strided_slice %5 {offsets = [6, 0], sizes = [1, 256], strides = [1, 1]} : vector<8x256xf32> to vector<1x256xf32>
    %165 = vector.broadcast %163 : vector<16x1xf32> to vector<16x256xf32>
    %166 = vector.broadcast %164 : vector<1x256xf32> to vector<16x256xf32>
    %167 = arith.mulf %165, %166 : vector<16x256xf32>
    %168 = arith.addf %162, %167 : vector<16x256xf32>
    %169 = vector.extract_strided_slice %127 {offsets = [0, 7], sizes = [16, 1], strides = [1, 1]} : vector<16x8xf32> to vector<16x1xf32>
    %170 = vector.extract_strided_slice %5 {offsets = [7, 0], sizes = [1, 256], strides = [1, 1]} : vector<8x256xf32> to vector<1x256xf32>
    %171 = vector.broadcast %169 : vector<16x1xf32> to vector<16x256xf32>
    %172 = vector.broadcast %170 : vector<1x256xf32> to vector<16x256xf32>
    %173 = arith.mulf %171, %172 : vector<16x256xf32>
    %174 = arith.addf %168, %173 : vector<16x256xf32>
    %cst_20 = arith.constant dense<0xFF800000> : vector<256xf32>
    %175 = vector.multi_reduction <maximumf>, %174, %cst_20 [0] : vector<16x256xf32> to vector<256xf32>
    %176 = vector.shape_cast %175 : vector<256xf32> to vector<1x256xf32>
    %177 = vector.broadcast %176 : vector<1x256xf32> to vector<16x256xf32>
    %178 = arith.cmpf oge, %174, %177 : vector<16x256xf32>
    %c16_i32_21 = arith.constant 16 : i32
    %179 = vector.broadcast %c16_i32_21 : i32 to vector<16x256xi32>
    %180 = arith.select %178, %7, %179 : vector<16x256xi1>, vector<16x256xi32>
    %cst_22 = arith.constant dense<2147483647> : vector<256xi32>
    %181 = vector.multi_reduction <minsi>, %180, %cst_22 [0] : vector<16x256xi32> to vector<256xi32>
    %182 = vector.shape_cast %181 : vector<256xi32> to vector<1x256xi32>
    %183 = vector.broadcast %182 : vector<1x256xi32> to vector<16x256xi32>
    %184 = arith.cmpi eq, %183, %7 : vector<16x256xi32>
    %185 = arith.extui %184 : vector<16x256xi1> to vector<16x256xi32>
    %186 = arith.sitofp %185 : vector<16x256xi32> to vector<16x256xf32>
    %cst_23 = arith.constant dense<0.000000e+00> : vector<16x8xf32>
    %187 = tpu.matmul %186, %6, %cst_23 {dimension_numbers = #tpu.dot_dimension_numbers<[1], [0], [0], [1], [0, 0, 1, 1], [], []>} : vector<16x256xf32>, vector<256x8xf32>, vector<16x8xf32> -> vector<16x8xf32>
    %cst_24 = arith.constant dense<0.000000e+00> : vector<16xf32>
    %188 = vector.multi_reduction <add>, %186, %cst_24 [1] : vector<16x256xf32> to vector<16xf32>
    %189 = vector.shape_cast %188 : vector<16xf32> to vector<16x1xf32>
    %c2_i32 = arith.constant 2 : i32
    %cst_25 = arith.constant 0.000000e+00 : f32
    %190 = vector.broadcast %cst_25 : f32 to vector<16x1xf32>
    %191 = arith.cmpf ogt, %189, %190 : vector<16x1xf32>
    %cst_26 = arith.constant 1.000000e-30 : f32
    %192 = vector.broadcast %cst_26 : f32 to vector<16x8xf32>
    %193 = arith.maximumf %187, %192 : vector<16x8xf32>
    %194 = math.log %193 : vector<16x8xf32>
    %cst_27 = arith.constant 1.000000e+00 : f32
    %195 = vector.broadcast %cst_27 : f32 to vector<16x1xf32>
    %196 = arith.maximumf %189, %195 : vector<16x1xf32>
    %197 = math.log %196 : vector<16x1xf32>
    %198 = vector.broadcast %197 : vector<16x1xf32> to vector<16x8xf32>
    %199 = arith.subf %194, %198 : vector<16x8xf32>
    %200 = vector.shape_cast %191 : vector<16x1xi1> to vector<16x1xi1>
    %201 = vector.broadcast %200 : vector<16x1xi1> to vector<16x8xi1>
    %202 = vector.broadcast %cst_8 : f32 to vector<16x8xf32>
    %203 = arith.select %201, %199, %202 : vector<16x8xi1>, vector<16x8xf32>
    %204 = vector.extract_strided_slice %203 {offsets = [0, 0], sizes = [16, 1], strides = [1, 1]} : vector<16x8xf32> to vector<16x1xf32>
    %205 = vector.extract_strided_slice %5 {offsets = [0, 0], sizes = [1, 256], strides = [1, 1]} : vector<8x256xf32> to vector<1x256xf32>
    %206 = vector.broadcast %204 : vector<16x1xf32> to vector<16x256xf32>
    %207 = vector.broadcast %205 : vector<1x256xf32> to vector<16x256xf32>
    %208 = arith.mulf %206, %207 : vector<16x256xf32>
    %209 = vector.extract_strided_slice %203 {offsets = [0, 1], sizes = [16, 1], strides = [1, 1]} : vector<16x8xf32> to vector<16x1xf32>
    %210 = vector.extract_strided_slice %5 {offsets = [1, 0], sizes = [1, 256], strides = [1, 1]} : vector<8x256xf32> to vector<1x256xf32>
    %211 = vector.broadcast %209 : vector<16x1xf32> to vector<16x256xf32>
    %212 = vector.broadcast %210 : vector<1x256xf32> to vector<16x256xf32>
    %213 = arith.mulf %211, %212 : vector<16x256xf32>
    %214 = arith.addf %208, %213 : vector<16x256xf32>
    %215 = vector.extract_strided_slice %203 {offsets = [0, 2], sizes = [16, 1], strides = [1, 1]} : vector<16x8xf32> to vector<16x1xf32>
    %216 = vector.extract_strided_slice %5 {offsets = [2, 0], sizes = [1, 256], strides = [1, 1]} : vector<8x256xf32> to vector<1x256xf32>
    %217 = vector.broadcast %215 : vector<16x1xf32> to vector<16x256xf32>
    %218 = vector.broadcast %216 : vector<1x256xf32> to vector<16x256xf32>
    %219 = arith.mulf %217, %218 : vector<16x256xf32>
    %220 = arith.addf %214, %219 : vector<16x256xf32>
    %221 = vector.extract_strided_slice %203 {offsets = [0, 3], sizes = [16, 1], strides = [1, 1]} : vector<16x8xf32> to vector<16x1xf32>
    %222 = vector.extract_strided_slice %5 {offsets = [3, 0], sizes = [1, 256], strides = [1, 1]} : vector<8x256xf32> to vector<1x256xf32>
    %223 = vector.broadcast %221 : vector<16x1xf32> to vector<16x256xf32>
    %224 = vector.broadcast %222 : vector<1x256xf32> to vector<16x256xf32>
    %225 = arith.mulf %223, %224 : vector<16x256xf32>
    %226 = arith.addf %220, %225 : vector<16x256xf32>
    %227 = vector.extract_strided_slice %203 {offsets = [0, 4], sizes = [16, 1], strides = [1, 1]} : vector<16x8xf32> to vector<16x1xf32>
    %228 = vector.extract_strided_slice %5 {offsets = [4, 0], sizes = [1, 256], strides = [1, 1]} : vector<8x256xf32> to vector<1x256xf32>
    %229 = vector.broadcast %227 : vector<16x1xf32> to vector<16x256xf32>
    %230 = vector.broadcast %228 : vector<1x256xf32> to vector<16x256xf32>
    %231 = arith.mulf %229, %230 : vector<16x256xf32>
    %232 = arith.addf %226, %231 : vector<16x256xf32>
    %233 = vector.extract_strided_slice %203 {offsets = [0, 5], sizes = [16, 1], strides = [1, 1]} : vector<16x8xf32> to vector<16x1xf32>
    %234 = vector.extract_strided_slice %5 {offsets = [5, 0], sizes = [1, 256], strides = [1, 1]} : vector<8x256xf32> to vector<1x256xf32>
    %235 = vector.broadcast %233 : vector<16x1xf32> to vector<16x256xf32>
    %236 = vector.broadcast %234 : vector<1x256xf32> to vector<16x256xf32>
    %237 = arith.mulf %235, %236 : vector<16x256xf32>
    %238 = arith.addf %232, %237 : vector<16x256xf32>
    %239 = vector.extract_strided_slice %203 {offsets = [0, 6], sizes = [16, 1], strides = [1, 1]} : vector<16x8xf32> to vector<16x1xf32>
    %240 = vector.extract_strided_slice %5 {offsets = [6, 0], sizes = [1, 256], strides = [1, 1]} : vector<8x256xf32> to vector<1x256xf32>
    %241 = vector.broadcast %239 : vector<16x1xf32> to vector<16x256xf32>
    %242 = vector.broadcast %240 : vector<1x256xf32> to vector<16x256xf32>
    %243 = arith.mulf %241, %242 : vector<16x256xf32>
    %244 = arith.addf %238, %243 : vector<16x256xf32>
    %245 = vector.extract_strided_slice %203 {offsets = [0, 7], sizes = [16, 1], strides = [1, 1]} : vector<16x8xf32> to vector<16x1xf32>
    %246 = vector.extract_strided_slice %5 {offsets = [7, 0], sizes = [1, 256], strides = [1, 1]} : vector<8x256xf32> to vector<1x256xf32>
    %247 = vector.broadcast %245 : vector<16x1xf32> to vector<16x256xf32>
    %248 = vector.broadcast %246 : vector<1x256xf32> to vector<16x256xf32>
    %249 = arith.mulf %247, %248 : vector<16x256xf32>
    %250 = arith.addf %244, %249 : vector<16x256xf32>
    %cst_28 = arith.constant dense<0xFF800000> : vector<256xf32>
    %251 = vector.multi_reduction <maximumf>, %250, %cst_28 [0] : vector<16x256xf32> to vector<256xf32>
    %252 = vector.shape_cast %251 : vector<256xf32> to vector<1x256xf32>
    %253 = vector.broadcast %252 : vector<1x256xf32> to vector<16x256xf32>
    %254 = arith.cmpf oge, %250, %253 : vector<16x256xf32>
    %c16_i32_29 = arith.constant 16 : i32
    %255 = vector.broadcast %c16_i32_29 : i32 to vector<16x256xi32>
    %256 = arith.select %254, %7, %255 : vector<16x256xi1>, vector<16x256xi32>
    %cst_30 = arith.constant dense<2147483647> : vector<256xi32>
    %257 = vector.multi_reduction <minsi>, %256, %cst_30 [0] : vector<16x256xi32> to vector<256xi32>
    %258 = vector.shape_cast %257 : vector<256xi32> to vector<1x256xi32>
    %259 = vector.broadcast %258 : vector<1x256xi32> to vector<16x256xi32>
    %260 = arith.cmpi eq, %259, %7 : vector<16x256xi32>
    %261 = arith.extui %260 : vector<16x256xi1> to vector<16x256xi32>
    %262 = arith.sitofp %261 : vector<16x256xi32> to vector<16x256xf32>
    %cst_31 = arith.constant dense<0.000000e+00> : vector<16x8xf32>
    %263 = tpu.matmul %262, %6, %cst_31 {dimension_numbers = #tpu.dot_dimension_numbers<[1], [0], [0], [1], [0, 0, 1, 1], [], []>} : vector<16x256xf32>, vector<256x8xf32>, vector<16x8xf32> -> vector<16x8xf32>
    %cst_32 = arith.constant dense<0.000000e+00> : vector<16xf32>
    %264 = vector.multi_reduction <add>, %262, %cst_32 [1] : vector<16x256xf32> to vector<16xf32>
    %265 = vector.shape_cast %264 : vector<16xf32> to vector<16x1xf32>
    %c3_i32 = arith.constant 3 : i32
    %cst_33 = arith.constant 0.000000e+00 : f32
    %266 = vector.broadcast %cst_33 : f32 to vector<16x1xf32>
    %267 = arith.cmpf ogt, %265, %266 : vector<16x1xf32>
    %cst_34 = arith.constant 1.000000e-30 : f32
    %268 = vector.broadcast %cst_34 : f32 to vector<16x8xf32>
    %269 = arith.maximumf %263, %268 : vector<16x8xf32>
    %270 = math.log %269 : vector<16x8xf32>
    %cst_35 = arith.constant 1.000000e+00 : f32
    %271 = vector.broadcast %cst_35 : f32 to vector<16x1xf32>
    %272 = arith.maximumf %265, %271 : vector<16x1xf32>
    %273 = math.log %272 : vector<16x1xf32>
    %274 = vector.broadcast %273 : vector<16x1xf32> to vector<16x8xf32>
    %275 = arith.subf %270, %274 : vector<16x8xf32>
    %276 = vector.shape_cast %267 : vector<16x1xi1> to vector<16x1xi1>
    %277 = vector.broadcast %276 : vector<16x1xi1> to vector<16x8xi1>
    %278 = vector.broadcast %cst_8 : f32 to vector<16x8xf32>
    %279 = arith.select %277, %275, %278 : vector<16x8xi1>, vector<16x8xf32>
    %280 = vector.extract_strided_slice %279 {offsets = [0, 0], sizes = [16, 1], strides = [1, 1]} : vector<16x8xf32> to vector<16x1xf32>
    %281 = vector.extract_strided_slice %5 {offsets = [0, 0], sizes = [1, 256], strides = [1, 1]} : vector<8x256xf32> to vector<1x256xf32>
    %282 = vector.broadcast %280 : vector<16x1xf32> to vector<16x256xf32>
    %283 = vector.broadcast %281 : vector<1x256xf32> to vector<16x256xf32>
    %284 = arith.mulf %282, %283 : vector<16x256xf32>
    %285 = vector.extract_strided_slice %279 {offsets = [0, 1], sizes = [16, 1], strides = [1, 1]} : vector<16x8xf32> to vector<16x1xf32>
    %286 = vector.extract_strided_slice %5 {offsets = [1, 0], sizes = [1, 256], strides = [1, 1]} : vector<8x256xf32> to vector<1x256xf32>
    %287 = vector.broadcast %285 : vector<16x1xf32> to vector<16x256xf32>
    %288 = vector.broadcast %286 : vector<1x256xf32> to vector<16x256xf32>
    %289 = arith.mulf %287, %288 : vector<16x256xf32>
    %290 = arith.addf %284, %289 : vector<16x256xf32>
    %291 = vector.extract_strided_slice %279 {offsets = [0, 2], sizes = [16, 1], strides = [1, 1]} : vector<16x8xf32> to vector<16x1xf32>
    %292 = vector.extract_strided_slice %5 {offsets = [2, 0], sizes = [1, 256], strides = [1, 1]} : vector<8x256xf32> to vector<1x256xf32>
    %293 = vector.broadcast %291 : vector<16x1xf32> to vector<16x256xf32>
    %294 = vector.broadcast %292 : vector<1x256xf32> to vector<16x256xf32>
    %295 = arith.mulf %293, %294 : vector<16x256xf32>
    %296 = arith.addf %290, %295 : vector<16x256xf32>
    %297 = vector.extract_strided_slice %279 {offsets = [0, 3], sizes = [16, 1], strides = [1, 1]} : vector<16x8xf32> to vector<16x1xf32>
    %298 = vector.extract_strided_slice %5 {offsets = [3, 0], sizes = [1, 256], strides = [1, 1]} : vector<8x256xf32> to vector<1x256xf32>
    %299 = vector.broadcast %297 : vector<16x1xf32> to vector<16x256xf32>
    %300 = vector.broadcast %298 : vector<1x256xf32> to vector<16x256xf32>
    %301 = arith.mulf %299, %300 : vector<16x256xf32>
    %302 = arith.addf %296, %301 : vector<16x256xf32>
    %303 = vector.extract_strided_slice %279 {offsets = [0, 4], sizes = [16, 1], strides = [1, 1]} : vector<16x8xf32> to vector<16x1xf32>
    %304 = vector.extract_strided_slice %5 {offsets = [4, 0], sizes = [1, 256], strides = [1, 1]} : vector<8x256xf32> to vector<1x256xf32>
    %305 = vector.broadcast %303 : vector<16x1xf32> to vector<16x256xf32>
    %306 = vector.broadcast %304 : vector<1x256xf32> to vector<16x256xf32>
    %307 = arith.mulf %305, %306 : vector<16x256xf32>
    %308 = arith.addf %302, %307 : vector<16x256xf32>
    %309 = vector.extract_strided_slice %279 {offsets = [0, 5], sizes = [16, 1], strides = [1, 1]} : vector<16x8xf32> to vector<16x1xf32>
    %310 = vector.extract_strided_slice %5 {offsets = [5, 0], sizes = [1, 256], strides = [1, 1]} : vector<8x256xf32> to vector<1x256xf32>
    %311 = vector.broadcast %309 : vector<16x1xf32> to vector<16x256xf32>
    %312 = vector.broadcast %310 : vector<1x256xf32> to vector<16x256xf32>
    %313 = arith.mulf %311, %312 : vector<16x256xf32>
    %314 = arith.addf %308, %313 : vector<16x256xf32>
    %315 = vector.extract_strided_slice %279 {offsets = [0, 6], sizes = [16, 1], strides = [1, 1]} : vector<16x8xf32> to vector<16x1xf32>
    %316 = vector.extract_strided_slice %5 {offsets = [6, 0], sizes = [1, 256], strides = [1, 1]} : vector<8x256xf32> to vector<1x256xf32>
    %317 = vector.broadcast %315 : vector<16x1xf32> to vector<16x256xf32>
    %318 = vector.broadcast %316 : vector<1x256xf32> to vector<16x256xf32>
    %319 = arith.mulf %317, %318 : vector<16x256xf32>
    %320 = arith.addf %314, %319 : vector<16x256xf32>
    %321 = vector.extract_strided_slice %279 {offsets = [0, 7], sizes = [16, 1], strides = [1, 1]} : vector<16x8xf32> to vector<16x1xf32>
    %322 = vector.extract_strided_slice %5 {offsets = [7, 0], sizes = [1, 256], strides = [1, 1]} : vector<8x256xf32> to vector<1x256xf32>
    %323 = vector.broadcast %321 : vector<16x1xf32> to vector<16x256xf32>
    %324 = vector.broadcast %322 : vector<1x256xf32> to vector<16x256xf32>
    %325 = arith.mulf %323, %324 : vector<16x256xf32>
    %326 = arith.addf %320, %325 : vector<16x256xf32>
    %cst_36 = arith.constant dense<0xFF800000> : vector<256xf32>
    %327 = vector.multi_reduction <maximumf>, %326, %cst_36 [0] : vector<16x256xf32> to vector<256xf32>
    %328 = vector.shape_cast %327 : vector<256xf32> to vector<1x256xf32>
    %329 = vector.broadcast %328 : vector<1x256xf32> to vector<16x256xf32>
    %330 = arith.cmpf oge, %326, %329 : vector<16x256xf32>
    %c16_i32_37 = arith.constant 16 : i32
    %331 = vector.broadcast %c16_i32_37 : i32 to vector<16x256xi32>
    %332 = arith.select %330, %7, %331 : vector<16x256xi1>, vector<16x256xi32>
    %cst_38 = arith.constant dense<2147483647> : vector<256xi32>
    %333 = vector.multi_reduction <minsi>, %332, %cst_38 [0] : vector<16x256xi32> to vector<256xi32>
    %334 = vector.shape_cast %333 : vector<256xi32> to vector<1x256xi32>
    %335 = vector.broadcast %334 : vector<1x256xi32> to vector<16x256xi32>
    %336 = arith.cmpi eq, %335, %7 : vector<16x256xi32>
    %337 = arith.extui %336 : vector<16x256xi1> to vector<16x256xi32>
    %338 = arith.sitofp %337 : vector<16x256xi32> to vector<16x256xf32>
    %cst_39 = arith.constant dense<0.000000e+00> : vector<16x8xf32>
    %339 = tpu.matmul %338, %6, %cst_39 {dimension_numbers = #tpu.dot_dimension_numbers<[1], [0], [0], [1], [0, 0, 1, 1], [], []>} : vector<16x256xf32>, vector<256x8xf32>, vector<16x8xf32> -> vector<16x8xf32>
    %cst_40 = arith.constant dense<0.000000e+00> : vector<16xf32>
    %340 = vector.multi_reduction <add>, %338, %cst_40 [1] : vector<16x256xf32> to vector<16xf32>
    %341 = vector.shape_cast %340 : vector<16xf32> to vector<16x1xf32>
    %c4_i32_41 = arith.constant 4 : i32
    %cst_42 = arith.constant 0.000000e+00 : f32
    %342 = vector.broadcast %cst_42 : f32 to vector<16x1xf32>
    %343 = arith.cmpf ogt, %341, %342 : vector<16x1xf32>
    %cst_43 = arith.constant 1.000000e-30 : f32
    %344 = vector.broadcast %cst_43 : f32 to vector<16x8xf32>
    %345 = arith.maximumf %339, %344 : vector<16x8xf32>
    %346 = math.log %345 : vector<16x8xf32>
    %cst_44 = arith.constant 1.000000e+00 : f32
    %347 = vector.broadcast %cst_44 : f32 to vector<16x1xf32>
    %348 = arith.maximumf %341, %347 : vector<16x1xf32>
    %349 = math.log %348 : vector<16x1xf32>
    %350 = vector.broadcast %349 : vector<16x1xf32> to vector<16x8xf32>
    %351 = arith.subf %346, %350 : vector<16x8xf32>
    %352 = vector.shape_cast %343 : vector<16x1xi1> to vector<16x1xi1>
    %353 = vector.broadcast %352 : vector<16x1xi1> to vector<16x8xi1>
    %354 = vector.broadcast %cst_8 : f32 to vector<16x8xf32>
    %355 = arith.select %353, %351, %354 : vector<16x8xi1>, vector<16x8xf32>
    %356 = vector.extract_strided_slice %355 {offsets = [0, 0], sizes = [16, 1], strides = [1, 1]} : vector<16x8xf32> to vector<16x1xf32>
    %357 = vector.extract_strided_slice %5 {offsets = [0, 0], sizes = [1, 256], strides = [1, 1]} : vector<8x256xf32> to vector<1x256xf32>
    %358 = vector.broadcast %356 : vector<16x1xf32> to vector<16x256xf32>
    %359 = vector.broadcast %357 : vector<1x256xf32> to vector<16x256xf32>
    %360 = arith.mulf %358, %359 : vector<16x256xf32>
    %361 = vector.extract_strided_slice %355 {offsets = [0, 1], sizes = [16, 1], strides = [1, 1]} : vector<16x8xf32> to vector<16x1xf32>
    %362 = vector.extract_strided_slice %5 {offsets = [1, 0], sizes = [1, 256], strides = [1, 1]} : vector<8x256xf32> to vector<1x256xf32>
    %363 = vector.broadcast %361 : vector<16x1xf32> to vector<16x256xf32>
    %364 = vector.broadcast %362 : vector<1x256xf32> to vector<16x256xf32>
    %365 = arith.mulf %363, %364 : vector<16x256xf32>
    %366 = arith.addf %360, %365 : vector<16x256xf32>
    %367 = vector.extract_strided_slice %355 {offsets = [0, 2], sizes = [16, 1], strides = [1, 1]} : vector<16x8xf32> to vector<16x1xf32>
    %368 = vector.extract_strided_slice %5 {offsets = [2, 0], sizes = [1, 256], strides = [1, 1]} : vector<8x256xf32> to vector<1x256xf32>
    %369 = vector.broadcast %367 : vector<16x1xf32> to vector<16x256xf32>
    %370 = vector.broadcast %368 : vector<1x256xf32> to vector<16x256xf32>
    %371 = arith.mulf %369, %370 : vector<16x256xf32>
    %372 = arith.addf %366, %371 : vector<16x256xf32>
    %373 = vector.extract_strided_slice %355 {offsets = [0, 3], sizes = [16, 1], strides = [1, 1]} : vector<16x8xf32> to vector<16x1xf32>
    %374 = vector.extract_strided_slice %5 {offsets = [3, 0], sizes = [1, 256], strides = [1, 1]} : vector<8x256xf32> to vector<1x256xf32>
    %375 = vector.broadcast %373 : vector<16x1xf32> to vector<16x256xf32>
    %376 = vector.broadcast %374 : vector<1x256xf32> to vector<16x256xf32>
    %377 = arith.mulf %375, %376 : vector<16x256xf32>
    %378 = arith.addf %372, %377 : vector<16x256xf32>
    %379 = vector.extract_strided_slice %355 {offsets = [0, 4], sizes = [16, 1], strides = [1, 1]} : vector<16x8xf32> to vector<16x1xf32>
    %380 = vector.extract_strided_slice %5 {offsets = [4, 0], sizes = [1, 256], strides = [1, 1]} : vector<8x256xf32> to vector<1x256xf32>
    %381 = vector.broadcast %379 : vector<16x1xf32> to vector<16x256xf32>
    %382 = vector.broadcast %380 : vector<1x256xf32> to vector<16x256xf32>
    %383 = arith.mulf %381, %382 : vector<16x256xf32>
    %384 = arith.addf %378, %383 : vector<16x256xf32>
    %385 = vector.extract_strided_slice %355 {offsets = [0, 5], sizes = [16, 1], strides = [1, 1]} : vector<16x8xf32> to vector<16x1xf32>
    %386 = vector.extract_strided_slice %5 {offsets = [5, 0], sizes = [1, 256], strides = [1, 1]} : vector<8x256xf32> to vector<1x256xf32>
    %387 = vector.broadcast %385 : vector<16x1xf32> to vector<16x256xf32>
    %388 = vector.broadcast %386 : vector<1x256xf32> to vector<16x256xf32>
    %389 = arith.mulf %387, %388 : vector<16x256xf32>
    %390 = arith.addf %384, %389 : vector<16x256xf32>
    %391 = vector.extract_strided_slice %355 {offsets = [0, 6], sizes = [16, 1], strides = [1, 1]} : vector<16x8xf32> to vector<16x1xf32>
    %392 = vector.extract_strided_slice %5 {offsets = [6, 0], sizes = [1, 256], strides = [1, 1]} : vector<8x256xf32> to vector<1x256xf32>
    %393 = vector.broadcast %391 : vector<16x1xf32> to vector<16x256xf32>
    %394 = vector.broadcast %392 : vector<1x256xf32> to vector<16x256xf32>
    %395 = arith.mulf %393, %394 : vector<16x256xf32>
    %396 = arith.addf %390, %395 : vector<16x256xf32>
    %397 = vector.extract_strided_slice %355 {offsets = [0, 7], sizes = [16, 1], strides = [1, 1]} : vector<16x8xf32> to vector<16x1xf32>
    %398 = vector.extract_strided_slice %5 {offsets = [7, 0], sizes = [1, 256], strides = [1, 1]} : vector<8x256xf32> to vector<1x256xf32>
    %399 = vector.broadcast %397 : vector<16x1xf32> to vector<16x256xf32>
    %400 = vector.broadcast %398 : vector<1x256xf32> to vector<16x256xf32>
    %401 = arith.mulf %399, %400 : vector<16x256xf32>
    %402 = arith.addf %396, %401 : vector<16x256xf32>
    %cst_45 = arith.constant dense<0xFF800000> : vector<256xf32>
    %403 = vector.multi_reduction <maximumf>, %402, %cst_45 [0] : vector<16x256xf32> to vector<256xf32>
    %404 = vector.shape_cast %403 : vector<256xf32> to vector<1x256xf32>
    %405 = vector.broadcast %404 : vector<1x256xf32> to vector<16x256xf32>
    %406 = arith.cmpf oge, %402, %405 : vector<16x256xf32>
    %c16_i32_46 = arith.constant 16 : i32
    %407 = vector.broadcast %c16_i32_46 : i32 to vector<16x256xi32>
    %408 = arith.select %406, %7, %407 : vector<16x256xi1>, vector<16x256xi32>
    %cst_47 = arith.constant dense<2147483647> : vector<256xi32>
    %409 = vector.multi_reduction <minsi>, %408, %cst_47 [0] : vector<16x256xi32> to vector<256xi32>
    %410 = vector.shape_cast %409 : vector<256xi32> to vector<1x256xi32>
    %411 = vector.broadcast %410 : vector<1x256xi32> to vector<16x256xi32>
    %412 = arith.cmpi eq, %411, %7 : vector<16x256xi32>
    %413 = arith.extui %412 : vector<16x256xi1> to vector<16x256xi32>
    %414 = arith.sitofp %413 : vector<16x256xi32> to vector<16x256xf32>
    %cst_48 = arith.constant dense<0.000000e+00> : vector<16x8xf32>
    %415 = tpu.matmul %414, %6, %cst_48 {dimension_numbers = #tpu.dot_dimension_numbers<[1], [0], [0], [1], [0, 0, 1, 1], [], []>} : vector<16x256xf32>, vector<256x8xf32>, vector<16x8xf32> -> vector<16x8xf32>
    %cst_49 = arith.constant dense<0.000000e+00> : vector<16xf32>
    %416 = vector.multi_reduction <add>, %414, %cst_49 [1] : vector<16x256xf32> to vector<16xf32>
    %417 = vector.shape_cast %416 : vector<16xf32> to vector<16x1xf32>
    %c5_i32 = arith.constant 5 : i32
    %cst_50 = arith.constant 0.000000e+00 : f32
    %418 = vector.broadcast %cst_50 : f32 to vector<16x1xf32>
    %419 = arith.cmpf ogt, %417, %418 : vector<16x1xf32>
    %cst_51 = arith.constant 1.000000e-30 : f32
    %420 = vector.broadcast %cst_51 : f32 to vector<16x8xf32>
    %421 = arith.maximumf %415, %420 : vector<16x8xf32>
    %422 = math.log %421 : vector<16x8xf32>
    %cst_52 = arith.constant 1.000000e+00 : f32
    %423 = vector.broadcast %cst_52 : f32 to vector<16x1xf32>
    %424 = arith.maximumf %417, %423 : vector<16x1xf32>
    %425 = math.log %424 : vector<16x1xf32>
    %426 = vector.broadcast %425 : vector<16x1xf32> to vector<16x8xf32>
    %427 = arith.subf %422, %426 : vector<16x8xf32>
    %428 = vector.shape_cast %419 : vector<16x1xi1> to vector<16x1xi1>
    %429 = vector.broadcast %428 : vector<16x1xi1> to vector<16x8xi1>
    %430 = vector.broadcast %cst_8 : f32 to vector<16x8xf32>
    %431 = arith.select %429, %427, %430 : vector<16x8xi1>, vector<16x8xf32>
    %432 = vector.extract_strided_slice %431 {offsets = [0, 0], sizes = [16, 1], strides = [1, 1]} : vector<16x8xf32> to vector<16x1xf32>
    %433 = vector.extract_strided_slice %5 {offsets = [0, 0], sizes = [1, 256], strides = [1, 1]} : vector<8x256xf32> to vector<1x256xf32>
    %434 = vector.broadcast %432 : vector<16x1xf32> to vector<16x256xf32>
    %435 = vector.broadcast %433 : vector<1x256xf32> to vector<16x256xf32>
    %436 = arith.mulf %434, %435 : vector<16x256xf32>
    %437 = vector.extract_strided_slice %431 {offsets = [0, 1], sizes = [16, 1], strides = [1, 1]} : vector<16x8xf32> to vector<16x1xf32>
    %438 = vector.extract_strided_slice %5 {offsets = [1, 0], sizes = [1, 256], strides = [1, 1]} : vector<8x256xf32> to vector<1x256xf32>
    %439 = vector.broadcast %437 : vector<16x1xf32> to vector<16x256xf32>
    %440 = vector.broadcast %438 : vector<1x256xf32> to vector<16x256xf32>
    %441 = arith.mulf %439, %440 : vector<16x256xf32>
    %442 = arith.addf %436, %441 : vector<16x256xf32>
    %443 = vector.extract_strided_slice %431 {offsets = [0, 2], sizes = [16, 1], strides = [1, 1]} : vector<16x8xf32> to vector<16x1xf32>
    %444 = vector.extract_strided_slice %5 {offsets = [2, 0], sizes = [1, 256], strides = [1, 1]} : vector<8x256xf32> to vector<1x256xf32>
    %445 = vector.broadcast %443 : vector<16x1xf32> to vector<16x256xf32>
    %446 = vector.broadcast %444 : vector<1x256xf32> to vector<16x256xf32>
    %447 = arith.mulf %445, %446 : vector<16x256xf32>
    %448 = arith.addf %442, %447 : vector<16x256xf32>
    %449 = vector.extract_strided_slice %431 {offsets = [0, 3], sizes = [16, 1], strides = [1, 1]} : vector<16x8xf32> to vector<16x1xf32>
    %450 = vector.extract_strided_slice %5 {offsets = [3, 0], sizes = [1, 256], strides = [1, 1]} : vector<8x256xf32> to vector<1x256xf32>
    %451 = vector.broadcast %449 : vector<16x1xf32> to vector<16x256xf32>
    %452 = vector.broadcast %450 : vector<1x256xf32> to vector<16x256xf32>
    %453 = arith.mulf %451, %452 : vector<16x256xf32>
    %454 = arith.addf %448, %453 : vector<16x256xf32>
    %455 = vector.extract_strided_slice %431 {offsets = [0, 4], sizes = [16, 1], strides = [1, 1]} : vector<16x8xf32> to vector<16x1xf32>
    %456 = vector.extract_strided_slice %5 {offsets = [4, 0], sizes = [1, 256], strides = [1, 1]} : vector<8x256xf32> to vector<1x256xf32>
    %457 = vector.broadcast %455 : vector<16x1xf32> to vector<16x256xf32>
    %458 = vector.broadcast %456 : vector<1x256xf32> to vector<16x256xf32>
    %459 = arith.mulf %457, %458 : vector<16x256xf32>
    %460 = arith.addf %454, %459 : vector<16x256xf32>
    %461 = vector.extract_strided_slice %431 {offsets = [0, 5], sizes = [16, 1], strides = [1, 1]} : vector<16x8xf32> to vector<16x1xf32>
    %462 = vector.extract_strided_slice %5 {offsets = [5, 0], sizes = [1, 256], strides = [1, 1]} : vector<8x256xf32> to vector<1x256xf32>
    %463 = vector.broadcast %461 : vector<16x1xf32> to vector<16x256xf32>
    %464 = vector.broadcast %462 : vector<1x256xf32> to vector<16x256xf32>
    %465 = arith.mulf %463, %464 : vector<16x256xf32>
    %466 = arith.addf %460, %465 : vector<16x256xf32>
    %467 = vector.extract_strided_slice %431 {offsets = [0, 6], sizes = [16, 1], strides = [1, 1]} : vector<16x8xf32> to vector<16x1xf32>
    %468 = vector.extract_strided_slice %5 {offsets = [6, 0], sizes = [1, 256], strides = [1, 1]} : vector<8x256xf32> to vector<1x256xf32>
    %469 = vector.broadcast %467 : vector<16x1xf32> to vector<16x256xf32>
    %470 = vector.broadcast %468 : vector<1x256xf32> to vector<16x256xf32>
    %471 = arith.mulf %469, %470 : vector<16x256xf32>
    %472 = arith.addf %466, %471 : vector<16x256xf32>
    %473 = vector.extract_strided_slice %431 {offsets = [0, 7], sizes = [16, 1], strides = [1, 1]} : vector<16x8xf32> to vector<16x1xf32>
    %474 = vector.extract_strided_slice %5 {offsets = [7, 0], sizes = [1, 256], strides = [1, 1]} : vector<8x256xf32> to vector<1x256xf32>
    %475 = vector.broadcast %473 : vector<16x1xf32> to vector<16x256xf32>
    %476 = vector.broadcast %474 : vector<1x256xf32> to vector<16x256xf32>
    %477 = arith.mulf %475, %476 : vector<16x256xf32>
    %478 = arith.addf %472, %477 : vector<16x256xf32>
    %cst_53 = arith.constant dense<0xFF800000> : vector<256xf32>
    %479 = vector.multi_reduction <maximumf>, %478, %cst_53 [0] : vector<16x256xf32> to vector<256xf32>
    %480 = vector.shape_cast %479 : vector<256xf32> to vector<1x256xf32>
    %481 = vector.broadcast %480 : vector<1x256xf32> to vector<16x256xf32>
    %482 = arith.cmpf oge, %478, %481 : vector<16x256xf32>
    %c16_i32_54 = arith.constant 16 : i32
    %483 = vector.broadcast %c16_i32_54 : i32 to vector<16x256xi32>
    %484 = arith.select %482, %7, %483 : vector<16x256xi1>, vector<16x256xi32>
    %cst_55 = arith.constant dense<2147483647> : vector<256xi32>
    %485 = vector.multi_reduction <minsi>, %484, %cst_55 [0] : vector<16x256xi32> to vector<256xi32>
    %486 = vector.shape_cast %485 : vector<256xi32> to vector<1x256xi32>
    %487 = vector.broadcast %486 : vector<1x256xi32> to vector<16x256xi32>
    %488 = arith.cmpi eq, %487, %7 : vector<16x256xi32>
    %489 = arith.extui %488 : vector<16x256xi1> to vector<16x256xi32>
    %490 = arith.sitofp %489 : vector<16x256xi32> to vector<16x256xf32>
    %cst_56 = arith.constant dense<0.000000e+00> : vector<16x8xf32>
    %491 = tpu.matmul %490, %6, %cst_56 {dimension_numbers = #tpu.dot_dimension_numbers<[1], [0], [0], [1], [0, 0, 1, 1], [], []>} : vector<16x256xf32>, vector<256x8xf32>, vector<16x8xf32> -> vector<16x8xf32>
    %cst_57 = arith.constant dense<0.000000e+00> : vector<16xf32>
    %492 = vector.multi_reduction <add>, %490, %cst_57 [1] : vector<16x256xf32> to vector<16xf32>
    %493 = vector.shape_cast %492 : vector<16xf32> to vector<16x1xf32>
    %c6_i32 = arith.constant 6 : i32
    %cst_58 = arith.constant 0.000000e+00 : f32
    %494 = vector.broadcast %cst_58 : f32 to vector<16x1xf32>
    %495 = arith.cmpf ogt, %493, %494 : vector<16x1xf32>
    %cst_59 = arith.constant 1.000000e-30 : f32
    %496 = vector.broadcast %cst_59 : f32 to vector<16x8xf32>
    %497 = arith.maximumf %491, %496 : vector<16x8xf32>
    %498 = math.log %497 : vector<16x8xf32>
    %cst_60 = arith.constant 1.000000e+00 : f32
    %499 = vector.broadcast %cst_60 : f32 to vector<16x1xf32>
    %500 = arith.maximumf %493, %499 : vector<16x1xf32>
    %501 = math.log %500 : vector<16x1xf32>
    %502 = vector.broadcast %501 : vector<16x1xf32> to vector<16x8xf32>
    %503 = arith.subf %498, %502 : vector<16x8xf32>
    %504 = vector.shape_cast %495 : vector<16x1xi1> to vector<16x1xi1>
    %505 = vector.broadcast %504 : vector<16x1xi1> to vector<16x8xi1>
    %506 = vector.broadcast %cst_8 : f32 to vector<16x8xf32>
    %507 = arith.select %505, %503, %506 : vector<16x8xi1>, vector<16x8xf32>
    %508 = vector.extract_strided_slice %507 {offsets = [0, 0], sizes = [16, 1], strides = [1, 1]} : vector<16x8xf32> to vector<16x1xf32>
    %509 = vector.extract_strided_slice %5 {offsets = [0, 0], sizes = [1, 256], strides = [1, 1]} : vector<8x256xf32> to vector<1x256xf32>
    %510 = vector.broadcast %508 : vector<16x1xf32> to vector<16x256xf32>
    %511 = vector.broadcast %509 : vector<1x256xf32> to vector<16x256xf32>
    %512 = arith.mulf %510, %511 : vector<16x256xf32>
    %513 = vector.extract_strided_slice %507 {offsets = [0, 1], sizes = [16, 1], strides = [1, 1]} : vector<16x8xf32> to vector<16x1xf32>
    %514 = vector.extract_strided_slice %5 {offsets = [1, 0], sizes = [1, 256], strides = [1, 1]} : vector<8x256xf32> to vector<1x256xf32>
    %515 = vector.broadcast %513 : vector<16x1xf32> to vector<16x256xf32>
    %516 = vector.broadcast %514 : vector<1x256xf32> to vector<16x256xf32>
    %517 = arith.mulf %515, %516 : vector<16x256xf32>
    %518 = arith.addf %512, %517 : vector<16x256xf32>
    %519 = vector.extract_strided_slice %507 {offsets = [0, 2], sizes = [16, 1], strides = [1, 1]} : vector<16x8xf32> to vector<16x1xf32>
    %520 = vector.extract_strided_slice %5 {offsets = [2, 0], sizes = [1, 256], strides = [1, 1]} : vector<8x256xf32> to vector<1x256xf32>
    %521 = vector.broadcast %519 : vector<16x1xf32> to vector<16x256xf32>
    %522 = vector.broadcast %520 : vector<1x256xf32> to vector<16x256xf32>
    %523 = arith.mulf %521, %522 : vector<16x256xf32>
    %524 = arith.addf %518, %523 : vector<16x256xf32>
    %525 = vector.extract_strided_slice %507 {offsets = [0, 3], sizes = [16, 1], strides = [1, 1]} : vector<16x8xf32> to vector<16x1xf32>
    %526 = vector.extract_strided_slice %5 {offsets = [3, 0], sizes = [1, 256], strides = [1, 1]} : vector<8x256xf32> to vector<1x256xf32>
    %527 = vector.broadcast %525 : vector<16x1xf32> to vector<16x256xf32>
    %528 = vector.broadcast %526 : vector<1x256xf32> to vector<16x256xf32>
    %529 = arith.mulf %527, %528 : vector<16x256xf32>
    %530 = arith.addf %524, %529 : vector<16x256xf32>
    %531 = vector.extract_strided_slice %507 {offsets = [0, 4], sizes = [16, 1], strides = [1, 1]} : vector<16x8xf32> to vector<16x1xf32>
    %532 = vector.extract_strided_slice %5 {offsets = [4, 0], sizes = [1, 256], strides = [1, 1]} : vector<8x256xf32> to vector<1x256xf32>
    %533 = vector.broadcast %531 : vector<16x1xf32> to vector<16x256xf32>
    %534 = vector.broadcast %532 : vector<1x256xf32> to vector<16x256xf32>
    %535 = arith.mulf %533, %534 : vector<16x256xf32>
    %536 = arith.addf %530, %535 : vector<16x256xf32>
    %537 = vector.extract_strided_slice %507 {offsets = [0, 5], sizes = [16, 1], strides = [1, 1]} : vector<16x8xf32> to vector<16x1xf32>
    %538 = vector.extract_strided_slice %5 {offsets = [5, 0], sizes = [1, 256], strides = [1, 1]} : vector<8x256xf32> to vector<1x256xf32>
    %539 = vector.broadcast %537 : vector<16x1xf32> to vector<16x256xf32>
    %540 = vector.broadcast %538 : vector<1x256xf32> to vector<16x256xf32>
    %541 = arith.mulf %539, %540 : vector<16x256xf32>
    %542 = arith.addf %536, %541 : vector<16x256xf32>
    %543 = vector.extract_strided_slice %507 {offsets = [0, 6], sizes = [16, 1], strides = [1, 1]} : vector<16x8xf32> to vector<16x1xf32>
    %544 = vector.extract_strided_slice %5 {offsets = [6, 0], sizes = [1, 256], strides = [1, 1]} : vector<8x256xf32> to vector<1x256xf32>
    %545 = vector.broadcast %543 : vector<16x1xf32> to vector<16x256xf32>
    %546 = vector.broadcast %544 : vector<1x256xf32> to vector<16x256xf32>
    %547 = arith.mulf %545, %546 : vector<16x256xf32>
    %548 = arith.addf %542, %547 : vector<16x256xf32>
    %549 = vector.extract_strided_slice %507 {offsets = [0, 7], sizes = [16, 1], strides = [1, 1]} : vector<16x8xf32> to vector<16x1xf32>
    %550 = vector.extract_strided_slice %5 {offsets = [7, 0], sizes = [1, 256], strides = [1, 1]} : vector<8x256xf32> to vector<1x256xf32>
    %551 = vector.broadcast %549 : vector<16x1xf32> to vector<16x256xf32>
    %552 = vector.broadcast %550 : vector<1x256xf32> to vector<16x256xf32>
    %553 = arith.mulf %551, %552 : vector<16x256xf32>
    %554 = arith.addf %548, %553 : vector<16x256xf32>
    %cst_61 = arith.constant dense<0xFF800000> : vector<256xf32>
    %555 = vector.multi_reduction <maximumf>, %554, %cst_61 [0] : vector<16x256xf32> to vector<256xf32>
    %556 = vector.shape_cast %555 : vector<256xf32> to vector<1x256xf32>
    %557 = vector.broadcast %556 : vector<1x256xf32> to vector<16x256xf32>
    %558 = arith.cmpf oge, %554, %557 : vector<16x256xf32>
    %c16_i32_62 = arith.constant 16 : i32
    %559 = vector.broadcast %c16_i32_62 : i32 to vector<16x256xi32>
    %560 = arith.select %558, %7, %559 : vector<16x256xi1>, vector<16x256xi32>
    %cst_63 = arith.constant dense<2147483647> : vector<256xi32>
    %561 = vector.multi_reduction <minsi>, %560, %cst_63 [0] : vector<16x256xi32> to vector<256xi32>
    %562 = vector.shape_cast %561 : vector<256xi32> to vector<1x256xi32>
    %563 = vector.broadcast %562 : vector<1x256xi32> to vector<16x256xi32>
    %564 = arith.cmpi eq, %563, %7 : vector<16x256xi32>
    %565 = arith.extui %564 : vector<16x256xi1> to vector<16x256xi32>
    %566 = arith.sitofp %565 : vector<16x256xi32> to vector<16x256xf32>
    %cst_64 = arith.constant dense<0.000000e+00> : vector<16x8xf32>
    %567 = tpu.matmul %566, %6, %cst_64 {dimension_numbers = #tpu.dot_dimension_numbers<[1], [0], [0], [1], [0, 0, 1, 1], [], []>} : vector<16x256xf32>, vector<256x8xf32>, vector<16x8xf32> -> vector<16x8xf32>
    %cst_65 = arith.constant dense<0.000000e+00> : vector<16xf32>
    %568 = vector.multi_reduction <add>, %566, %cst_65 [1] : vector<16x256xf32> to vector<16xf32>
    %569 = vector.shape_cast %568 : vector<16xf32> to vector<16x1xf32>
    %c7_i32 = arith.constant 7 : i32
    %cst_66 = arith.constant 0.000000e+00 : f32
    %570 = vector.broadcast %cst_66 : f32 to vector<16x1xf32>
    %571 = arith.cmpf ogt, %569, %570 : vector<16x1xf32>
    %cst_67 = arith.constant 1.000000e-30 : f32
    %572 = vector.broadcast %cst_67 : f32 to vector<16x8xf32>
    %573 = arith.maximumf %567, %572 : vector<16x8xf32>
    %574 = math.log %573 : vector<16x8xf32>
    %cst_68 = arith.constant 1.000000e+00 : f32
    %575 = vector.broadcast %cst_68 : f32 to vector<16x1xf32>
    %576 = arith.maximumf %569, %575 : vector<16x1xf32>
    %577 = math.log %576 : vector<16x1xf32>
    %578 = vector.broadcast %577 : vector<16x1xf32> to vector<16x8xf32>
    %579 = arith.subf %574, %578 : vector<16x8xf32>
    %580 = vector.shape_cast %571 : vector<16x1xi1> to vector<16x1xi1>
    %581 = vector.broadcast %580 : vector<16x1xi1> to vector<16x8xi1>
    %582 = vector.broadcast %cst_8 : f32 to vector<16x8xf32>
    %583 = arith.select %581, %579, %582 : vector<16x8xi1>, vector<16x8xf32>
    %584 = vector.extract_strided_slice %583 {offsets = [0, 0], sizes = [16, 1], strides = [1, 1]} : vector<16x8xf32> to vector<16x1xf32>
    %585 = vector.extract_strided_slice %5 {offsets = [0, 0], sizes = [1, 256], strides = [1, 1]} : vector<8x256xf32> to vector<1x256xf32>
    %586 = vector.broadcast %584 : vector<16x1xf32> to vector<16x256xf32>
    %587 = vector.broadcast %585 : vector<1x256xf32> to vector<16x256xf32>
    %588 = arith.mulf %586, %587 : vector<16x256xf32>
    %589 = vector.extract_strided_slice %583 {offsets = [0, 1], sizes = [16, 1], strides = [1, 1]} : vector<16x8xf32> to vector<16x1xf32>
    %590 = vector.extract_strided_slice %5 {offsets = [1, 0], sizes = [1, 256], strides = [1, 1]} : vector<8x256xf32> to vector<1x256xf32>
    %591 = vector.broadcast %589 : vector<16x1xf32> to vector<16x256xf32>
    %592 = vector.broadcast %590 : vector<1x256xf32> to vector<16x256xf32>
    %593 = arith.mulf %591, %592 : vector<16x256xf32>
    %594 = arith.addf %588, %593 : vector<16x256xf32>
    %595 = vector.extract_strided_slice %583 {offsets = [0, 2], sizes = [16, 1], strides = [1, 1]} : vector<16x8xf32> to vector<16x1xf32>
    %596 = vector.extract_strided_slice %5 {offsets = [2, 0], sizes = [1, 256], strides = [1, 1]} : vector<8x256xf32> to vector<1x256xf32>
    %597 = vector.broadcast %595 : vector<16x1xf32> to vector<16x256xf32>
    %598 = vector.broadcast %596 : vector<1x256xf32> to vector<16x256xf32>
    %599 = arith.mulf %597, %598 : vector<16x256xf32>
    %600 = arith.addf %594, %599 : vector<16x256xf32>
    %601 = vector.extract_strided_slice %583 {offsets = [0, 3], sizes = [16, 1], strides = [1, 1]} : vector<16x8xf32> to vector<16x1xf32>
    %602 = vector.extract_strided_slice %5 {offsets = [3, 0], sizes = [1, 256], strides = [1, 1]} : vector<8x256xf32> to vector<1x256xf32>
    %603 = vector.broadcast %601 : vector<16x1xf32> to vector<16x256xf32>
    %604 = vector.broadcast %602 : vector<1x256xf32> to vector<16x256xf32>
    %605 = arith.mulf %603, %604 : vector<16x256xf32>
    %606 = arith.addf %600, %605 : vector<16x256xf32>
    %607 = vector.extract_strided_slice %583 {offsets = [0, 4], sizes = [16, 1], strides = [1, 1]} : vector<16x8xf32> to vector<16x1xf32>
    %608 = vector.extract_strided_slice %5 {offsets = [4, 0], sizes = [1, 256], strides = [1, 1]} : vector<8x256xf32> to vector<1x256xf32>
    %609 = vector.broadcast %607 : vector<16x1xf32> to vector<16x256xf32>
    %610 = vector.broadcast %608 : vector<1x256xf32> to vector<16x256xf32>
    %611 = arith.mulf %609, %610 : vector<16x256xf32>
    %612 = arith.addf %606, %611 : vector<16x256xf32>
    %613 = vector.extract_strided_slice %583 {offsets = [0, 5], sizes = [16, 1], strides = [1, 1]} : vector<16x8xf32> to vector<16x1xf32>
    %614 = vector.extract_strided_slice %5 {offsets = [5, 0], sizes = [1, 256], strides = [1, 1]} : vector<8x256xf32> to vector<1x256xf32>
    %615 = vector.broadcast %613 : vector<16x1xf32> to vector<16x256xf32>
    %616 = vector.broadcast %614 : vector<1x256xf32> to vector<16x256xf32>
    %617 = arith.mulf %615, %616 : vector<16x256xf32>
    %618 = arith.addf %612, %617 : vector<16x256xf32>
    %619 = vector.extract_strided_slice %583 {offsets = [0, 6], sizes = [16, 1], strides = [1, 1]} : vector<16x8xf32> to vector<16x1xf32>
    %620 = vector.extract_strided_slice %5 {offsets = [6, 0], sizes = [1, 256], strides = [1, 1]} : vector<8x256xf32> to vector<1x256xf32>
    %621 = vector.broadcast %619 : vector<16x1xf32> to vector<16x256xf32>
    %622 = vector.broadcast %620 : vector<1x256xf32> to vector<16x256xf32>
    %623 = arith.mulf %621, %622 : vector<16x256xf32>
    %624 = arith.addf %618, %623 : vector<16x256xf32>
    %625 = vector.extract_strided_slice %583 {offsets = [0, 7], sizes = [16, 1], strides = [1, 1]} : vector<16x8xf32> to vector<16x1xf32>
    %626 = vector.extract_strided_slice %5 {offsets = [7, 0], sizes = [1, 256], strides = [1, 1]} : vector<8x256xf32> to vector<1x256xf32>
    %627 = vector.broadcast %625 : vector<16x1xf32> to vector<16x256xf32>
    %628 = vector.broadcast %626 : vector<1x256xf32> to vector<16x256xf32>
    %629 = arith.mulf %627, %628 : vector<16x256xf32>
    %630 = arith.addf %624, %629 : vector<16x256xf32>
    %cst_69 = arith.constant dense<0xFF800000> : vector<256xf32>
    %631 = vector.multi_reduction <maximumf>, %630, %cst_69 [0] : vector<16x256xf32> to vector<256xf32>
    %632 = vector.shape_cast %631 : vector<256xf32> to vector<1x256xf32>
    %633 = vector.broadcast %632 : vector<1x256xf32> to vector<16x256xf32>
    %634 = arith.cmpf oge, %630, %633 : vector<16x256xf32>
    %c16_i32_70 = arith.constant 16 : i32
    %635 = vector.broadcast %c16_i32_70 : i32 to vector<16x256xi32>
    %636 = arith.select %634, %7, %635 : vector<16x256xi1>, vector<16x256xi32>
    %cst_71 = arith.constant dense<2147483647> : vector<256xi32>
    %637 = vector.multi_reduction <minsi>, %636, %cst_71 [0] : vector<16x256xi32> to vector<256xi32>
    %638 = vector.shape_cast %637 : vector<256xi32> to vector<1x256xi32>
    %639 = vector.broadcast %638 : vector<1x256xi32> to vector<16x256xi32>
    %640 = arith.cmpi eq, %639, %7 : vector<16x256xi32>
    %641 = arith.extui %640 : vector<16x256xi1> to vector<16x256xi32>
    %642 = arith.sitofp %641 : vector<16x256xi32> to vector<16x256xf32>
    %cst_72 = arith.constant dense<0.000000e+00> : vector<16x8xf32>
    %643 = tpu.matmul %642, %6, %cst_72 {dimension_numbers = #tpu.dot_dimension_numbers<[1], [0], [0], [1], [0, 0, 1, 1], [], []>} : vector<16x256xf32>, vector<256x8xf32>, vector<16x8xf32> -> vector<16x8xf32>
    %cst_73 = arith.constant dense<0.000000e+00> : vector<16xf32>
    %644 = vector.multi_reduction <add>, %642, %cst_73 [1] : vector<16x256xf32> to vector<16xf32>
    %645 = vector.shape_cast %644 : vector<16xf32> to vector<16x1xf32>
    %c8_i32_74 = arith.constant 8 : i32
    %cst_75 = arith.constant 0.000000e+00 : f32
    %646 = vector.broadcast %cst_75 : f32 to vector<16x1xf32>
    %647 = arith.cmpf ogt, %645, %646 : vector<16x1xf32>
    %cst_76 = arith.constant 1.000000e-30 : f32
    %648 = vector.broadcast %cst_76 : f32 to vector<16x8xf32>
    %649 = arith.maximumf %643, %648 : vector<16x8xf32>
    %650 = math.log %649 : vector<16x8xf32>
    %cst_77 = arith.constant 1.000000e+00 : f32
    %651 = vector.broadcast %cst_77 : f32 to vector<16x1xf32>
    %652 = arith.maximumf %645, %651 : vector<16x1xf32>
    %653 = math.log %652 : vector<16x1xf32>
    %654 = vector.broadcast %653 : vector<16x1xf32> to vector<16x8xf32>
    %655 = arith.subf %650, %654 : vector<16x8xf32>
    %656 = vector.shape_cast %647 : vector<16x1xi1> to vector<16x1xi1>
    %657 = vector.broadcast %656 : vector<16x1xi1> to vector<16x8xi1>
    %658 = vector.broadcast %cst_8 : f32 to vector<16x8xf32>
    %659 = arith.select %657, %655, %658 : vector<16x8xi1>, vector<16x8xf32>
    %660 = vector.extract_strided_slice %659 {offsets = [0, 0], sizes = [16, 1], strides = [1, 1]} : vector<16x8xf32> to vector<16x1xf32>
    %661 = vector.extract_strided_slice %5 {offsets = [0, 0], sizes = [1, 256], strides = [1, 1]} : vector<8x256xf32> to vector<1x256xf32>
    %662 = vector.broadcast %660 : vector<16x1xf32> to vector<16x256xf32>
    %663 = vector.broadcast %661 : vector<1x256xf32> to vector<16x256xf32>
    %664 = arith.mulf %662, %663 : vector<16x256xf32>
    %665 = vector.extract_strided_slice %659 {offsets = [0, 1], sizes = [16, 1], strides = [1, 1]} : vector<16x8xf32> to vector<16x1xf32>
    %666 = vector.extract_strided_slice %5 {offsets = [1, 0], sizes = [1, 256], strides = [1, 1]} : vector<8x256xf32> to vector<1x256xf32>
    %667 = vector.broadcast %665 : vector<16x1xf32> to vector<16x256xf32>
    %668 = vector.broadcast %666 : vector<1x256xf32> to vector<16x256xf32>
    %669 = arith.mulf %667, %668 : vector<16x256xf32>
    %670 = arith.addf %664, %669 : vector<16x256xf32>
    %671 = vector.extract_strided_slice %659 {offsets = [0, 2], sizes = [16, 1], strides = [1, 1]} : vector<16x8xf32> to vector<16x1xf32>
    %672 = vector.extract_strided_slice %5 {offsets = [2, 0], sizes = [1, 256], strides = [1, 1]} : vector<8x256xf32> to vector<1x256xf32>
    %673 = vector.broadcast %671 : vector<16x1xf32> to vector<16x256xf32>
    %674 = vector.broadcast %672 : vector<1x256xf32> to vector<16x256xf32>
    %675 = arith.mulf %673, %674 : vector<16x256xf32>
    %676 = arith.addf %670, %675 : vector<16x256xf32>
    %677 = vector.extract_strided_slice %659 {offsets = [0, 3], sizes = [16, 1], strides = [1, 1]} : vector<16x8xf32> to vector<16x1xf32>
    %678 = vector.extract_strided_slice %5 {offsets = [3, 0], sizes = [1, 256], strides = [1, 1]} : vector<8x256xf32> to vector<1x256xf32>
    %679 = vector.broadcast %677 : vector<16x1xf32> to vector<16x256xf32>
    %680 = vector.broadcast %678 : vector<1x256xf32> to vector<16x256xf32>
    %681 = arith.mulf %679, %680 : vector<16x256xf32>
    %682 = arith.addf %676, %681 : vector<16x256xf32>
    %683 = vector.extract_strided_slice %659 {offsets = [0, 4], sizes = [16, 1], strides = [1, 1]} : vector<16x8xf32> to vector<16x1xf32>
    %684 = vector.extract_strided_slice %5 {offsets = [4, 0], sizes = [1, 256], strides = [1, 1]} : vector<8x256xf32> to vector<1x256xf32>
    %685 = vector.broadcast %683 : vector<16x1xf32> to vector<16x256xf32>
    %686 = vector.broadcast %684 : vector<1x256xf32> to vector<16x256xf32>
    %687 = arith.mulf %685, %686 : vector<16x256xf32>
    %688 = arith.addf %682, %687 : vector<16x256xf32>
    %689 = vector.extract_strided_slice %659 {offsets = [0, 5], sizes = [16, 1], strides = [1, 1]} : vector<16x8xf32> to vector<16x1xf32>
    %690 = vector.extract_strided_slice %5 {offsets = [5, 0], sizes = [1, 256], strides = [1, 1]} : vector<8x256xf32> to vector<1x256xf32>
    %691 = vector.broadcast %689 : vector<16x1xf32> to vector<16x256xf32>
    %692 = vector.broadcast %690 : vector<1x256xf32> to vector<16x256xf32>
    %693 = arith.mulf %691, %692 : vector<16x256xf32>
    %694 = arith.addf %688, %693 : vector<16x256xf32>
    %695 = vector.extract_strided_slice %659 {offsets = [0, 6], sizes = [16, 1], strides = [1, 1]} : vector<16x8xf32> to vector<16x1xf32>
    %696 = vector.extract_strided_slice %5 {offsets = [6, 0], sizes = [1, 256], strides = [1, 1]} : vector<8x256xf32> to vector<1x256xf32>
    %697 = vector.broadcast %695 : vector<16x1xf32> to vector<16x256xf32>
    %698 = vector.broadcast %696 : vector<1x256xf32> to vector<16x256xf32>
    %699 = arith.mulf %697, %698 : vector<16x256xf32>
    %700 = arith.addf %694, %699 : vector<16x256xf32>
    %701 = vector.extract_strided_slice %659 {offsets = [0, 7], sizes = [16, 1], strides = [1, 1]} : vector<16x8xf32> to vector<16x1xf32>
    %702 = vector.extract_strided_slice %5 {offsets = [7, 0], sizes = [1, 256], strides = [1, 1]} : vector<8x256xf32> to vector<1x256xf32>
    %703 = vector.broadcast %701 : vector<16x1xf32> to vector<16x256xf32>
    %704 = vector.broadcast %702 : vector<1x256xf32> to vector<16x256xf32>
    %705 = arith.mulf %703, %704 : vector<16x256xf32>
    %706 = arith.addf %700, %705 : vector<16x256xf32>
    %cst_78 = arith.constant dense<0xFF800000> : vector<256xf32>
    %707 = vector.multi_reduction <maximumf>, %706, %cst_78 [0] : vector<16x256xf32> to vector<256xf32>
    %708 = vector.shape_cast %707 : vector<256xf32> to vector<1x256xf32>
    %709 = vector.broadcast %708 : vector<1x256xf32> to vector<16x256xf32>
    %710 = arith.cmpf oge, %706, %709 : vector<16x256xf32>
    %c16_i32_79 = arith.constant 16 : i32
    %711 = vector.broadcast %c16_i32_79 : i32 to vector<16x256xi32>
    %712 = arith.select %710, %7, %711 : vector<16x256xi1>, vector<16x256xi32>
    %cst_80 = arith.constant dense<2147483647> : vector<256xi32>
    %713 = vector.multi_reduction <minsi>, %712, %cst_80 [0] : vector<16x256xi32> to vector<256xi32>
    %714 = vector.shape_cast %713 : vector<256xi32> to vector<1x256xi32>
    %715 = vector.broadcast %714 : vector<1x256xi32> to vector<16x256xi32>
    %716 = arith.cmpi eq, %715, %7 : vector<16x256xi32>
    %717 = arith.extui %716 : vector<16x256xi1> to vector<16x256xi32>
    %718 = arith.sitofp %717 : vector<16x256xi32> to vector<16x256xf32>
    %cst_81 = arith.constant dense<0.000000e+00> : vector<16x8xf32>
    %719 = tpu.matmul %718, %6, %cst_81 {dimension_numbers = #tpu.dot_dimension_numbers<[1], [0], [0], [1], [0, 0, 1, 1], [], []>} : vector<16x256xf32>, vector<256x8xf32>, vector<16x8xf32> -> vector<16x8xf32>
    %cst_82 = arith.constant dense<0.000000e+00> : vector<16xf32>
    %720 = vector.multi_reduction <add>, %718, %cst_82 [1] : vector<16x256xf32> to vector<16xf32>
    %721 = vector.shape_cast %720 : vector<16xf32> to vector<16x1xf32>
    %c9_i32 = arith.constant 9 : i32
    %cst_83 = arith.constant 0.000000e+00 : f32
    %722 = vector.broadcast %cst_83 : f32 to vector<16x1xf32>
    %723 = arith.cmpf ogt, %721, %722 : vector<16x1xf32>
    %cst_84 = arith.constant 1.000000e-30 : f32
    %724 = vector.broadcast %cst_84 : f32 to vector<16x8xf32>
    %725 = arith.maximumf %719, %724 : vector<16x8xf32>
    %726 = math.log %725 : vector<16x8xf32>
    %cst_85 = arith.constant 1.000000e+00 : f32
    %727 = vector.broadcast %cst_85 : f32 to vector<16x1xf32>
    %728 = arith.maximumf %721, %727 : vector<16x1xf32>
    %729 = math.log %728 : vector<16x1xf32>
    %730 = vector.broadcast %729 : vector<16x1xf32> to vector<16x8xf32>
    %731 = arith.subf %726, %730 : vector<16x8xf32>
    %732 = vector.shape_cast %723 : vector<16x1xi1> to vector<16x1xi1>
    %733 = vector.broadcast %732 : vector<16x1xi1> to vector<16x8xi1>
    %734 = vector.broadcast %cst_8 : f32 to vector<16x8xf32>
    %735 = arith.select %733, %731, %734 : vector<16x8xi1>, vector<16x8xf32>
    %736 = vector.extract_strided_slice %735 {offsets = [0, 0], sizes = [16, 1], strides = [1, 1]} : vector<16x8xf32> to vector<16x1xf32>
    %737 = vector.extract_strided_slice %5 {offsets = [0, 0], sizes = [1, 256], strides = [1, 1]} : vector<8x256xf32> to vector<1x256xf32>
    %738 = vector.broadcast %736 : vector<16x1xf32> to vector<16x256xf32>
    %739 = vector.broadcast %737 : vector<1x256xf32> to vector<16x256xf32>
    %740 = arith.mulf %738, %739 : vector<16x256xf32>
    %741 = vector.extract_strided_slice %735 {offsets = [0, 1], sizes = [16, 1], strides = [1, 1]} : vector<16x8xf32> to vector<16x1xf32>
    %742 = vector.extract_strided_slice %5 {offsets = [1, 0], sizes = [1, 256], strides = [1, 1]} : vector<8x256xf32> to vector<1x256xf32>
    %743 = vector.broadcast %741 : vector<16x1xf32> to vector<16x256xf32>
    %744 = vector.broadcast %742 : vector<1x256xf32> to vector<16x256xf32>
    %745 = arith.mulf %743, %744 : vector<16x256xf32>
    %746 = arith.addf %740, %745 : vector<16x256xf32>
    %747 = vector.extract_strided_slice %735 {offsets = [0, 2], sizes = [16, 1], strides = [1, 1]} : vector<16x8xf32> to vector<16x1xf32>
    %748 = vector.extract_strided_slice %5 {offsets = [2, 0], sizes = [1, 256], strides = [1, 1]} : vector<8x256xf32> to vector<1x256xf32>
    %749 = vector.broadcast %747 : vector<16x1xf32> to vector<16x256xf32>
    %750 = vector.broadcast %748 : vector<1x256xf32> to vector<16x256xf32>
    %751 = arith.mulf %749, %750 : vector<16x256xf32>
    %752 = arith.addf %746, %751 : vector<16x256xf32>
    %753 = vector.extract_strided_slice %735 {offsets = [0, 3], sizes = [16, 1], strides = [1, 1]} : vector<16x8xf32> to vector<16x1xf32>
    %754 = vector.extract_strided_slice %5 {offsets = [3, 0], sizes = [1, 256], strides = [1, 1]} : vector<8x256xf32> to vector<1x256xf32>
    %755 = vector.broadcast %753 : vector<16x1xf32> to vector<16x256xf32>
    %756 = vector.broadcast %754 : vector<1x256xf32> to vector<16x256xf32>
    %757 = arith.mulf %755, %756 : vector<16x256xf32>
    %758 = arith.addf %752, %757 : vector<16x256xf32>
    %759 = vector.extract_strided_slice %735 {offsets = [0, 4], sizes = [16, 1], strides = [1, 1]} : vector<16x8xf32> to vector<16x1xf32>
    %760 = vector.extract_strided_slice %5 {offsets = [4, 0], sizes = [1, 256], strides = [1, 1]} : vector<8x256xf32> to vector<1x256xf32>
    %761 = vector.broadcast %759 : vector<16x1xf32> to vector<16x256xf32>
    %762 = vector.broadcast %760 : vector<1x256xf32> to vector<16x256xf32>
    %763 = arith.mulf %761, %762 : vector<16x256xf32>
    %764 = arith.addf %758, %763 : vector<16x256xf32>
    %765 = vector.extract_strided_slice %735 {offsets = [0, 5], sizes = [16, 1], strides = [1, 1]} : vector<16x8xf32> to vector<16x1xf32>
    %766 = vector.extract_strided_slice %5 {offsets = [5, 0], sizes = [1, 256], strides = [1, 1]} : vector<8x256xf32> to vector<1x256xf32>
    %767 = vector.broadcast %765 : vector<16x1xf32> to vector<16x256xf32>
    %768 = vector.broadcast %766 : vector<1x256xf32> to vector<16x256xf32>
    %769 = arith.mulf %767, %768 : vector<16x256xf32>
    %770 = arith.addf %764, %769 : vector<16x256xf32>
    %771 = vector.extract_strided_slice %735 {offsets = [0, 6], sizes = [16, 1], strides = [1, 1]} : vector<16x8xf32> to vector<16x1xf32>
    %772 = vector.extract_strided_slice %5 {offsets = [6, 0], sizes = [1, 256], strides = [1, 1]} : vector<8x256xf32> to vector<1x256xf32>
    %773 = vector.broadcast %771 : vector<16x1xf32> to vector<16x256xf32>
    %774 = vector.broadcast %772 : vector<1x256xf32> to vector<16x256xf32>
    %775 = arith.mulf %773, %774 : vector<16x256xf32>
    %776 = arith.addf %770, %775 : vector<16x256xf32>
    %777 = vector.extract_strided_slice %735 {offsets = [0, 7], sizes = [16, 1], strides = [1, 1]} : vector<16x8xf32> to vector<16x1xf32>
    %778 = vector.extract_strided_slice %5 {offsets = [7, 0], sizes = [1, 256], strides = [1, 1]} : vector<8x256xf32> to vector<1x256xf32>
    %779 = vector.broadcast %777 : vector<16x1xf32> to vector<16x256xf32>
    %780 = vector.broadcast %778 : vector<1x256xf32> to vector<16x256xf32>
    %781 = arith.mulf %779, %780 : vector<16x256xf32>
    %782 = arith.addf %776, %781 : vector<16x256xf32>
    %cst_86 = arith.constant dense<0xFF800000> : vector<256xf32>
    %783 = vector.multi_reduction <maximumf>, %782, %cst_86 [0] : vector<16x256xf32> to vector<256xf32>
    %784 = vector.shape_cast %783 : vector<256xf32> to vector<1x256xf32>
    %785 = vector.broadcast %784 : vector<1x256xf32> to vector<16x256xf32>
    %786 = arith.cmpf oge, %782, %785 : vector<16x256xf32>
    %c16_i32_87 = arith.constant 16 : i32
    %787 = vector.broadcast %c16_i32_87 : i32 to vector<16x256xi32>
    %788 = arith.select %786, %7, %787 : vector<16x256xi1>, vector<16x256xi32>
    %cst_88 = arith.constant dense<2147483647> : vector<256xi32>
    %789 = vector.multi_reduction <minsi>, %788, %cst_88 [0] : vector<16x256xi32> to vector<256xi32>
    %790 = vector.shape_cast %789 : vector<256xi32> to vector<1x256xi32>
    %791 = vector.broadcast %790 : vector<1x256xi32> to vector<16x256xi32>
    %792 = arith.cmpi eq, %791, %7 : vector<16x256xi32>
    %793 = arith.extui %792 : vector<16x256xi1> to vector<16x256xi32>
    %794 = arith.sitofp %793 : vector<16x256xi32> to vector<16x256xf32>
    %cst_89 = arith.constant dense<0.000000e+00> : vector<16x8xf32>
    %795 = tpu.matmul %794, %6, %cst_89 {dimension_numbers = #tpu.dot_dimension_numbers<[1], [0], [0], [1], [0, 0, 1, 1], [], []>} : vector<16x256xf32>, vector<256x8xf32>, vector<16x8xf32> -> vector<16x8xf32>
    %cst_90 = arith.constant dense<0.000000e+00> : vector<16xf32>
    %796 = vector.multi_reduction <add>, %794, %cst_90 [1] : vector<16x256xf32> to vector<16xf32>
    %797 = vector.shape_cast %796 : vector<16xf32> to vector<16x1xf32>
    %cst_91 = arith.constant 0.000000e+00 : f32
    %798 = vector.broadcast %cst_91 : f32 to vector<16x1xf32>
    %799 = arith.cmpf ogt, %797, %798 : vector<16x1xf32>
    %800 = arith.extui %799 : vector<16x1xi1> to vector<16x1xi32>
    %801 = vector.broadcast %790 : vector<1x256xi32> to vector<16x256xi32>
    %802 = arith.cmpi slt, %7, %801 : vector<16x256xi32>
    %803 = arith.extui %802 : vector<16x256xi1> to vector<16x256xi32>
    %804 = vector.broadcast %800 : vector<16x1xi32> to vector<16x256xi32>
    %805 = arith.muli %803, %804 : vector<16x256xi32>
    %cst_92 = arith.constant dense<0> : vector<256xi32>
    %806 = vector.multi_reduction <add>, %805, %cst_92 [0] : vector<16x256xi32> to vector<256xi32>
    %807 = vector.shape_cast %806 : vector<256xi32> to vector<1x256xi32>
    %c0_93 = arith.constant 0 : index
    %c0_94 = arith.constant 0 : index
    %c0_95 = arith.constant 0 : index
    %808 = vector.load %arg2[%c0_93, %c0_94, %c0_95] : memref<1x1x256xi32, #tpu.memory_space<vmem>>, vector<1x1x256xi32>
    %809 = vector.shape_cast %808 : vector<1x1x256xi32> to vector<1x256xi32>
    %810 = vector.shape_cast %807 : vector<1x256xi32> to vector<1x1x256xi32>
    tpu.vector_store %arg2[%c0_93, %c0_94, %c0_95], %810 {strides = array<i32>} : memref<1x1x256xi32, #tpu.memory_space<vmem>>, vector<1x1x256xi32>,
    %cst_96 = arith.constant dense<0> : vector<1xi32>
    %811 = vector.multi_reduction <add>, %800, %cst_96 [0] : vector<16x1xi32> to vector<1xi32>
    %812 = vector.shape_cast %811 : vector<1xi32> to vector<1x1xi32>
    %813 = vector.shape_cast %812 : vector<1x1xi32> to vector<1x1xi32>
    %814 = vector.broadcast %813 : vector<1x1xi32> to vector<1x128xi32>
    %c0_97 = arith.constant 0 : index
    %c0_98 = arith.constant 0 : index
    %c0_99 = arith.constant 0 : index
    %815 = vector.load %arg3[%c0_97, %c0_98, %c0_99] : memref<1x1x128xi32, #tpu.memory_space<vmem>>, vector<1x1x128xi32>
    %816 = vector.shape_cast %815 : vector<1x1x128xi32> to vector<1x128xi32>
    %817 = vector.shape_cast %814 : vector<1x128xi32> to vector<1x1x128xi32>
    tpu.vector_store %arg3[%c0_97, %c0_98, %c0_99], %817 {strides = array<i32>} : memref<1x1x128xi32, #tpu.memory_space<vmem>>, vector<1x1x128xi32>,
    return
  }
  func.func @transform_0(%arg0: i32) -> (i32, i32, i32) {
    %c0_i32 = arith.constant 0 : i32
    %c0_i32_0 = arith.constant 0 : i32
    %c0_i32_1 = arith.constant 0 : i32
    return %arg0, %c0_i32, %c0_i32_0 : i32, i32, i32
  }
  func.func @transform_1(%arg0: i32) -> (i32, i32, i32) {
    %c0_i32 = arith.constant 0 : i32
    %c0_i32_0 = arith.constant 0 : i32
    %c0_i32_1 = arith.constant 0 : i32
    return %arg0, %c0_i32, %c0_i32_0 : i32, i32, i32
  }
  func.func @transform_2(%arg0: i32) -> (i32, i32, i32) {
    %c0_i32 = arith.constant 0 : i32
    %c0_i32_0 = arith.constant 0 : i32
    %c0_i32_1 = arith.constant 0 : i32
    return %arg0, %c0_i32, %c0_i32_0 : i32, i32, i32
  }
}

</mosaic_0001>

<llo_original>
// kernel: dfc_kl.1
$region0: #{dfc_kl.1}
  #allocation0 [shape = 'u32[]', space=smem, size = 0x4, offset = 0x4, fixed_abs, tag = 'smem constant byte address 0x4 - core index']
  #allocation1 [shape = 'u32[72,128]{1,0:T(1,128)}', space=vmem, size = 0x9000, scoped, tag = 'internal scratch']
  %s0 = inlined_call_operand.vmem [shape: f32[2,8,256], index: 0, kind: input, shape index: {}]
  %s1 = inlined_call_operand.vmem [shape: s32[2,1,256], index: 1, kind: output, shape index: {0}]
  %s2 = inlined_call_operand.vmem [shape: s32[2,1,128], index: 2, kind: output, shape index: {1}]
  %3 = xla_tuple %s1, %s2
  %s4 = sld [smem:[#allocation0]]
  $region45: #{dfc_kl.1} parent=0
    _
  %s6 = ssub.s32 1, %s4
  %s7 = scalar_select 0, %s6, %s4
  loop: start=0, step=1, limit=4
  $region2: #{dfc_kl.1} parent=0 // loop_pre_header
    _
  $region3: #{dfc_kl.1} parent=0 // loop_header
    %s9 = sphi 0, %s13
    %p10 = scmp.ge.s32.totalorder %s9, 4
    %s19 = sphi 0, %s21
    %s22 = sphi 0, %s19
    %s23 = sphi 0, %s22
    %s39 = sphi 0, %s23
    %s45 = sphi 0, %s47
    %s48 = sphi 0, %s45
    %s49 = sphi 0, %s48
    %s65 = sphi 0, %s49
    %s71 = sphi 0, %s73
    %s74 = sphi 0, %s71
    %s75 = sphi 0, %s74
    %s91 = sphi 0, %s75
  $region4: #{dfc_kl.1} parent=0 // loop_header_branch
    %12 = sbr.rel (%p10) target = $region8
  $region5: #{dfc_kl.1} parent=0 // loop_body
    %s14 = ssub.s32 %s9, 1
    %s15 = ssub.s32 %s9, 2
    %s16 = sadd.s32 %s9, 1
    %s17 = ssub.s32 %s9, %s16
    %p18 = scmp.eq.s32.totalorder %s17, 0
    %s20 = sadd.s32 %s19, 1
    %s21 = scalar_select %p18, %s19, %s20
    %p24 = pneg %p18
    %p25 = scmp.eq.s32.totalorder %s9, 1
    %p26 = por %p24, %p25
    %p27 = scmp.ne.s32.totalorder %s19, %s22
    %p28 = scmp.eq.s32.totalorder %s9, 0
    %p29 = por %p27, %p28
    %p30 = scmp.ne.s32.totalorder %s19, %s22
    %p31 = scmp.eq.s32.totalorder %s14, 1
    %p32 = por %p30, %p31
    %p33 = scmp.ne.s32.totalorder %s22, %s23
    %p34 = scmp.eq.s32.totalorder %s14, 0
    %p35 = por %p33, %p34
    %p36 = scmp.ne.s32.totalorder %s22, %s23
    %p37 = scmp.eq.s32.totalorder %s15, 1
    %p38 = por %p36, %p37
    %p40 = scmp.ne.s32.totalorder %s23, %s39
    %p41 = scmp.eq.s32.totalorder %s15, 0
    %p42 = por %p40, %p41
    %s43 = ssub.s32 %s9, %s16
    %p44 = scmp.eq.s32.totalorder %s43, 0
    %s46 = sadd.s32 %s45, 1
    %s47 = scalar_select %p44, %s45, %s46
    %p50 = pneg %p44
    %p51 = scmp.eq.s32.totalorder %s9, 1
    %p52 = por %p50, %p51
    %p53 = scmp.ne.s32.totalorder %s45, %s48
    %p54 = scmp.eq.s32.totalorder %s9, 0
    %p55 = por %p53, %p54
    %p56 = scmp.ne.s32.totalorder %s45, %s48
    %p57 = scmp.eq.s32.totalorder %s14, 1
    %p58 = por %p56, %p57
    %p59 = scmp.ne.s32.totalorder %s48, %s49
    %p60 = scmp.eq.s32.totalorder %s14, 0
    %p61 = por %p59, %p60
    %p62 = scmp.ne.s32.totalorder %s48, %s49
    %p63 = scmp.eq.s32.totalorder %s15, 1
    %p64 = por %p62, %p63
    %p66 = scmp.ne.s32.totalorder %s49, %s65
    %p67 = scmp.eq.s32.totalorder %s15, 0
    %p68 = por %p66, %p67
    %s69 = ssub.s32 %s9, %s16
    %p70 = scmp.eq.s32.totalorder %s69, 0
    %s72 = sadd.s32 %s71, 1
    %s73 = scalar_select %p70, %s71, %s72
    %p76 = pneg %p70
    %p77 = scmp.eq.s32.totalorder %s9, 1
    %p78 = por %p76, %p77
    %p79 = scmp.ne.s32.totalorder %s71, %s74
    %p80 = scmp.eq.s32.totalorder %s9, 0
    %p81 = por %p79, %p80
    %p82 = scmp.ne.s32.totalorder %s71, %s74
    %p83 = scmp.eq.s32.totalorder %s14, 1
    %p84 = por %p82, %p83
    %p85 = scmp.ne.s32.totalorder %s74, %s75
    %p86 = scmp.eq.s32.totalorder %s14, 0
    %p87 = por %p85, %p86
    %p88 = scmp.ne.s32.totalorder %s74, %s75
    %p89 = scmp.eq.s32.totalorder %s15, 1
    %p90 = por %p88, %p89
    %p92 = scmp.ne.s32.totalorder %s75, %s91
    %p93 = scmp.eq.s32.totalorder %s15, 0
    %p94 = por %p92, %p93
    %p95 = scmp.le.s32.totalorder 1, %s9
    %p96 = scmp.lt.s32.totalorder %s9, 3
    %p97 = pnand %p95, %p96
    %p98 = pneg %p97
    // Predicated region
    $region9: #{dfc_kl.1} parent=5 // pred_check
      _
    $region10: #{dfc_kl.1} parent=5 // pred_check_branch
      %100 = sbr.rel (%p97) target = $region12
    $region11: #{dfc_kl.1} parent=5 // pred_region
      %s101 = ssub.s32 %s9, 1
    $region12: #{dfc_kl.1} parent=5 // pred_fallthru
      _
    %p102 = scmp.lt.s32.totalorder %s9, 2
    // Predicated region
    $region13: #{dfc_kl.1} parent=5 // pred_check
      %p103 = pneg %p102
    $region14: #{dfc_kl.1} parent=5 // pred_check_branch
      %105 = sbr.rel (%p103) target = $region16
    $region15: #{dfc_kl.1} parent=5 // pred_region
      // Predicated region
      $region17: #{dfc_kl.1} parent=15 // pred_check
        %p106 = pneg %p29
      $region18: #{dfc_kl.1} parent=15 // pred_check_branch
        %108 = sbr.rel (%p106) target = $region20
      $region19: #{dfc_kl.1} parent=15 // pred_region
        %p109 = scmp.lt.s32.totalorder %s9, 1
        %s110 = scalar_select %p109, %s9, 1
        %s111 = smul.addr %s110, 2
        %s112 = smul.addr %s111, 8
        %s113 = scalar_lea.vmem %s0, %s112
      $region20: #{dfc_kl.1} parent=15 // pred_fallthru
        _
    $region16: #{dfc_kl.1} parent=5 // pred_fallthru
      _
    %p114 = scmp.le.s32.totalorder 1, %s9
    %p115 = scmp.lt.s32.totalorder %s9, 3
    %p116 = pnand %p114, %p115
    %p117 = pneg %p116
    // Predicated region
    $region21: #{dfc_kl.1} parent=5 // pred_check
      _
    $region22: #{dfc_kl.1} parent=5 // pred_check_branch
      %119 = sbr.rel (%p116) target = $region24
    $region23: #{dfc_kl.1} parent=5 // pred_region
      %s120 = ssub.s32 %s9, 1
      %p121 = scmp.lt.s32.totalorder %s14, 1
      %s122 = scalar_select %p121, %s14, 1
      %s123 = smul.addr %s122, 2
      %s124 = smul.addr %s123, 8
      %s125 = scalar_lea.vmem %s0, %s124
      %p126 = pneg %p35
      %p127 = pneg %p32
      %p128 = pneg %p61
      %p129 = pneg %p58
      %p130 = scmp.lt.s32.totalorder %s14, 1
      %s131 = scalar_select %p130, %s14, 1
      %s132 = smul.addr %s131, 2
      %s133 = scalar_lea.vmem %s1, %s132
      %p134 = pneg %p87
      %p135 = pneg %p84
      %p136 = scmp.lt.s32.totalorder %s14, 1
      %s137 = scalar_select %p136, %s14, 1
      %s138 = scalar_lea.vmem %s2, %s137
      %p139 = scmp.lt.s32.totalorder %s14, 1
      %s140 = scalar_select %p139, %s14, 1
      %s141 = smul.addr %s140, 2
      %s142 = smul.addr %s141, 8
      %s143 = scalar_lea.vmem %s0, %s142
      %p144 = scmp.lt.s32.totalorder %s14, 1
      %s145 = scalar_select %p144, %s14, 1
      %s146 = smul.addr %s145, 2
      %s147 = scalar_lea.vmem %s1, %s146
      %p148 = scmp.lt.s32.totalorder %s14, 1
      %s149 = scalar_select %p148, %s14, 1
      %s150 = scalar_lea.vmem %s2, %s149
      %v151 = vld [vmem:[%s143] sm:$0xff]
      %v152 = vld [vmem:[%s143 + $0x8] sm:$0xff]
      %vm153 = vcmp.eq.f32.partialorder %v151, 0.0
      %vm154 = vcmp.eq.f32.partialorder %v152, 0.0
      %v155 = vsel %vm153, 1e-06, %v151
      %v156 = vsel %vm154, 1e-06, %v152
      %v157 = vlaneseq
      %v158 = vshrl.u32 %v157, 7
      %v159 = vadd.s32 %v158, 8
      %v160 = vlaneseq
      %v161 = vand.u32 %v160, 127
      %v162 = vadd.s32 %v161, 128
      %vm163 = vcmp.ge.s32.totalorder %v158, 4
      %vm164 = vcmp.ge.s32.totalorder %v159, 4
      %v165 = vsel %vm163, 1, 0
      %v166 = vsel %vm164, 1, 0
      %vm167 = vcmp.ge.s32.totalorder %v158, 8
      %vm168 = vcmp.ge.s32.totalorder %v159, 8
      %v169 = vsel %vm167, 1, 0
      %v170 = vsel %vm168, 1, 0
      %v171 = vadd.s32 %v165, %v169
      %v172 = vadd.s32 %v166, %v170
      %vm173 = vcmp.ge.s32.totalorder %v158, 12
      %vm174 = vcmp.ge.s32.totalorder %v159, 12
      %v175 = vsel %vm173, 1, 0
      %v176 = vsel %vm174, 1, 0
      %v177 = vadd.s32 %v171, %v175
      %v178 = vadd.s32 %v172, %v176
      %v179 = vmul.u32 %v177, 4
      %v180 = vmul.u32 %v178, 4
      %v181 = vsub.s32 %v158, %v179
      %v182 = vsub.s32 %v159, %v180
      %v183 = vmul.u32 %v177, 64
      %v184 = vmul.u32 %v178, 64
      %v185 = vmul.u32 %v181, 4
      %v186 = vmul.u32 %v182, 4
      %v187 = vadd.s32 %v183, %v185
      %v188 = vadd.s32 %v184, %v186
      %vm189 = vcmp.eq.s32.totalorder %v161, %v187
      %vm190 = vcmp.eq.s32.totalorder %v162, %v187
      %vm191 = vcmp.eq.s32.totalorder %v161, %v188
      %vm192 = vcmp.eq.s32.totalorder %v162, %v188
      %v193 = vsel %vm189, 1, 0
      %v194 = vsel %vm190, 1, 0
      %v195 = vsel %vm191, 1, 0
      %v196 = vsel %vm192, 1, 0
      %v197 = vcvt.s32.f32 %v193
      %v198 = vcvt.s32.f32 %v194
      %v199 = vcvt.s32.f32 %v195
      %v200 = vcvt.s32.f32 %v196
      %201 = vmatpush.xpose.msra.mxu0 0.0
      %202 = vmatpush.xpose.msra.mxu0 0.0
      %203 = vmatpush.xpose.msra.mxu0 0.0
      %204 = vmatpush.xpose.msra.mxu0 0.0
      %205 = vmatpush.xpose.msra.mxu0 0.0
      %206 = vmatpush.xpose.msra.mxu0 0.0
      %207 = vmatpush.xpose.msra.mxu0 0.0
      %208 = vmatpush.xpose.msra.mxu0 0.0
      %209 = vmatpush.xpose.msra.mxu0 0.0
      %210 = vmatpush.xpose.msra.mxu0 0.0
      %211 = vmatpush.xpose.msra.mxu0 0.0
      %212 = vmatpush.xpose.msra.mxu0 0.0
      %213 = vmatpush.xpose.msra.mxu0 0.0
      %214 = vmatpush.xpose.msra.mxu0 0.0
      %215 = vmatpush.xpose.msra.mxu0 0.0
      %216 = vmatpush.xpose.msra.mxu0 %v155
      %217 = vmatmul.f32.gmra.mxu0 %v197
      %v218 = vpop.f32.mrf.mxu0
      %v219 = vadd.f32 0.0, %v218
      %220 = vmatmul.f32.gmra.mxu0 %v199
      %v221 = vpop.f32.mrf.mxu0
      %v222 = vadd.f32 0.0, %v221
      %223 = vdwg.mxu0
      %224 = vmatpush.xpose.msra.mxu0 0.0
      %225 = vmatpush.xpose.msra.mxu0 0.0
      %226 = vmatpush.xpose.msra.mxu0 0.0
      %227 = vmatpush.xpose.msra.mxu0 0.0
      %228 = vmatpush.xpose.msra.mxu0 0.0
      %229 = vmatpush.xpose.msra.mxu0 0.0
      %230 = vmatpush.xpose.msra.mxu0 0.0
      %231 = vmatpush.xpose.msra.mxu0 0.0
      %232 = vmatpush.xpose.msra.mxu0 0.0
      %233 = vmatpush.xpose.msra.mxu0 0.0
      %234 = vmatpush.xpose.msra.mxu0 0.0
      %235 = vmatpush.xpose.msra.mxu0 0.0
      %236 = vmatpush.xpose.msra.mxu0 0.0
      %237 = vmatpush.xpose.msra.mxu0 0.0
      %238 = vmatpush.xpose.msra.mxu0 0.0
      %239 = vmatpush.xpose.msra.mxu0 %v156
      %240 = vmatmul.f32.gmra.mxu0 %v198
      %v241 = vpop.f32.mrf.mxu0
      %v242 = vadd.f32 %v219, %v241
      %243 = vmatmul.f32.gmra.mxu0 %v200
      %v244 = vpop.f32.mrf.mxu0
      %v245 = vadd.f32 %v222, %v244
      %246 = vdwg.mxu0
      %vm247 = vcmp.gt.f32.partialorder 1.0, 0.0
      %v248 = vmax.f32 %v242, 1e-30
      %v249 = vmax.f32 %v245, 1e-30
      %v250 = vlog2.pop %v248
      %v251 = vmul.f32 %v250, 0.6931472
      %v252 = vlog2.pop %v249
      %v253 = vmul.f32 %v252, 0.6931472
      %v254 = vsel %vm247, 1, 0
      %vm255 = vcmp.eq.s32.totalorder %v254, 1
      %v256 = vsel %vm255, %v251, -1e+18
      %v257 = vsel %vm255, %v253, -1e+18
      %259 = vset.pattern.permute.xlu0 0
      %260 = vperm.xlu0 %259, %v256
      %v261 = vpop.permute.xlu0 %260
      %264 = vset.pattern.permute.xlu0 0
      %265 = vperm.xlu0 %264, %v257
      %v266 = vpop.permute.xlu0 %265
      %v268 = vperm.slane %v155, 0
      %v269 = vperm.slane %v156, 0
      %v270 = vmul.f32 %v261, %v268
      %v271 = vmul.f32 %v261, %v269
      %v272 = vmul.f32 %v266, %v268
      %v273 = vmul.f32 %v266, %v269
      %274 = vset.pattern.permute.xlu0 1
      %275 = vperm.xlu0 %274, %v256
      %v276 = vpop.permute.xlu0 %275
      %278 = vset.pattern.permute.xlu0 1
      %279 = vperm.xlu0 %278, %v257
      %v280 = vpop.permute.xlu0 %279
      %v282 = vperm.slane %v155, 1
      %v283 = vperm.slane %v156, 1
      %v284 = vmul.f32 %v276, %v282
      %v285 = vmul.f32 %v276, %v283
      %v286 = vmul.f32 %v280, %v282
      %v287 = vmul.f32 %v280, %v283
      %v288 = vadd.f32 %v270, %v284
      %v289 = vadd.f32 %v271, %v285
      %v290 = vadd.f32 %v272, %v286
      %v291 = vadd.f32 %v273, %v287
      %292 = vset.pattern.permute.xlu0 2
      %293 = vperm.xlu0 %292, %v256
      %v294 = vpop.permute.xlu0 %293
      %296 = vset.pattern.permute.xlu0 2
      %297 = vperm.xlu0 %296, %v257
      %v298 = vpop.permute.xlu0 %297
      %v300 = vperm.slane %v155, 2
      %v301 = vperm.slane %v156, 2
      %v302 = vmul.f32 %v294, %v300
      %v303 = vmul.f32 %v294, %v301
      %v304 = vmul.f32 %v298, %v300
      %v305 = vmul.f32 %v298, %v301
      %v306 = vadd.f32 %v288, %v302
      %v307 = vadd.f32 %v289, %v303
      %v308 = vadd.f32 %v290, %v304
      %v309 = vadd.f32 %v291, %v305
      %310 = vset.pattern.permute.xlu0 3
      %311 = vperm.xlu0 %310, %v256
      %v312 = vpop.permute.xlu0 %311
      %314 = vset.pattern.permute.xlu0 3
      %315 = vperm.xlu0 %314, %v257
      %v316 = vpop.permute.xlu0 %315
      %v318 = vperm.slane %v155, 3
      %v319 = vperm.slane %v156, 3
      %v320 = vmul.f32 %v312, %v318
      %v321 = vmul.f32 %v312, %v319
      %v322 = vmul.f32 %v316, %v318
      %v323 = vmul.f32 %v316, %v319
      %v324 = vadd.f32 %v306, %v320
      %v325 = vadd.f32 %v307, %v321
      %v326 = vadd.f32 %v308, %v322
      %v327 = vadd.f32 %v309, %v323
      %328 = vset.pattern.permute.xlu0 4
      %329 = vperm.xlu0 %328, %v256
      %v330 = vpop.permute.xlu0 %329
      %332 = vset.pattern.permute.xlu0 4
      %333 = vperm.xlu0 %332, %v257
      %v334 = vpop.permute.xlu0 %333
      %v336 = vperm.slane %v155, 4
      %v337 = vperm.slane %v156, 4
      %v338 = vmul.f32 %v330, %v336
      %v339 = vmul.f32 %v330, %v337
      %v340 = vmul.f32 %v334, %v336
      %v341 = vmul.f32 %v334, %v337
      %v342 = vadd.f32 %v324, %v338
      %v343 = vadd.f32 %v325, %v339
      %v344 = vadd.f32 %v326, %v340
      %v345 = vadd.f32 %v327, %v341
      %346 = vset.pattern.permute.xlu0 5
      %347 = vperm.xlu0 %346, %v256
      %v348 = vpop.permute.xlu0 %347
      %350 = vset.pattern.permute.xlu0 5
      %351 = vperm.xlu0 %350, %v257
      %v352 = vpop.permute.xlu0 %351
      %v354 = vperm.slane %v155, 5
      %v355 = vperm.slane %v156, 5
      %v356 = vmul.f32 %v348, %v354
      %v357 = vmul.f32 %v348, %v355
      %v358 = vmul.f32 %v352, %v354
      %v359 = vmul.f32 %v352, %v355
      %v360 = vadd.f32 %v342, %v356
      %v361 = vadd.f32 %v343, %v357
      %v362 = vadd.f32 %v344, %v358
      %v363 = vadd.f32 %v345, %v359
      %364 = vset.pattern.permute.xlu0 6
      %365 = vperm.xlu0 %364, %v256
      %v366 = vpop.permute.xlu0 %365
      %368 = vset.pattern.permute.xlu0 6
      %369 = vperm.xlu0 %368, %v257
      %v370 = vpop.permute.xlu0 %369
      %v372 = vperm.slane %v155, 6
      %v373 = vperm.slane %v156, 6
      %v374 = vmul.f32 %v366, %v372
      %v375 = vmul.f32 %v366, %v373
      %v376 = vmul.f32 %v370, %v372
      %v377 = vmul.f32 %v370, %v373
      %v378 = vadd.f32 %v360, %v374
      %v379 = vadd.f32 %v361, %v375
      %v380 = vadd.f32 %v362, %v376
      %v381 = vadd.f32 %v363, %v377
      %382 = vset.pattern.permute.xlu0 7
      %383 = vperm.xlu0 %382, %v256
      %v384 = vpop.permute.xlu0 %383
      %386 = vset.pattern.permute.xlu0 7
      %387 = vperm.xlu0 %386, %v257
      %v388 = vpop.permute.xlu0 %387
      %v390 = vperm.slane %v155, 7
      %v391 = vperm.slane %v156, 7
      %v392 = vmul.f32 %v384, %v390
      %v393 = vmul.f32 %v384, %v391
      %v394 = vmul.f32 %v388, %v390
      %v395 = vmul.f32 %v388, %v391
      %v396 = vadd.f32 %v378, %v392
      %v397 = vadd.f32 %v379, %v393
      %v398 = vadd.f32 %v380, %v394
      %v399 = vadd.f32 %v381, %v395
      %v400 = vmax.f32 %v396, %v398
      %v401 = vrot.slane %v400, 4
      %v402 = vmax.f32 %v400, %v401
      %v403 = vrot.slane %v402, 2
      %v404 = vmax.f32 %v402, %v403
      %v405 = vrot.slane %v404, 1
      %v406 = vmax.f32 %v404, %v405
      %v407 = vmax.f32 %v397, %v399
      %v408 = vrot.slane %v407, 4
      %v409 = vmax.f32 %v407, %v408
      %v410 = vrot.slane %v409, 2
      %v411 = vmax.f32 %v409, %v410
      %v412 = vrot.slane %v411, 1
      %v413 = vmax.f32 %v411, %v412
      %vm414 = vcmp.ge.f32.partialorder %v396, %v406
      %vm415 = vcmp.ge.f32.partialorder %v397, %v413
      %vm416 = vcmp.ge.f32.partialorder %v398, %v406
      %vm417 = vcmp.ge.f32.partialorder %v399, %v413
      %v418 = vsel %vm414, %v158, 16
      %v419 = vsel %vm415, %v158, 16
      %v420 = vsel %vm416, %v159, 16
      %v421 = vsel %vm417, %v159, 16
      %vm422 = vcmp.lt.s32.totalorder %v418, %v420
      %v423 = vsel %vm422, %v418, %v420
      %v424 = vrot.slane %v423, 4
      %vm425 = vcmp.lt.s32.totalorder %v423, %v424
      %v426 = vsel %vm425, %v423, %v424
      %v427 = vrot.slane %v426, 2
      %vm428 = vcmp.lt.s32.totalorder %v426, %v427
      %v429 = vsel %vm428, %v426, %v427
      %v430 = vrot.slane %v429, 1
      %vm431 = vcmp.lt.s32.totalorder %v429, %v430
      %v432 = vsel %vm431, %v429, %v430
      %vm433 = vcmp.lt.s32.totalorder %v419, %v421
      %v434 = vsel %vm433, %v419, %v421
      %v435 = vrot.slane %v434, 4
      %vm436 = vcmp.lt.s32.totalorder %v434, %v435
      %v437 = vsel %vm436, %v434, %v435
      %v438 = vrot.slane %v437, 2
      %vm439 = vcmp.lt.s32.totalorder %v437, %v438
      %v440 = vsel %vm439, %v437, %v438
      %v441 = vrot.slane %v440, 1
      %vm442 = vcmp.lt.s32.totalorder %v440, %v441
      %v443 = vsel %vm442, %v440, %v441
      %vm444 = vcmp.eq.s32.totalorder %v432, %v158
      %vm445 = vcmp.eq.s32.totalorder %v443, %v158
      %vm446 = vcmp.eq.s32.totalorder %v432, %v159
      %vm447 = vcmp.eq.s32.totalorder %v443, %v159
      %v448 = vsel %vm444, 1, 0
      %v449 = vsel %vm445, 1, 0
      %v450 = vsel %vm446, 1, 0
      %v451 = vsel %vm447, 1, 0
      %v452 = vcvt.s32.f32 %v448
      %v453 = vcvt.s32.f32 %v449
      %v454 = vcvt.s32.f32 %v450
      %v455 = vcvt.s32.f32 %v451
      %456 = vmatpush.xpose.msra.mxu0 0.0
      %457 = vmatpush.xpose.msra.mxu0 0.0
      %458 = vmatpush.xpose.msra.mxu0 0.0
      %459 = vmatpush.xpose.msra.mxu0 0.0
      %460 = vmatpush.xpose.msra.mxu0 0.0
      %461 = vmatpush.xpose.msra.mxu0 0.0
      %462 = vmatpush.xpose.msra.mxu0 0.0
      %463 = vmatpush.xpose.msra.mxu0 0.0
      %464 = vmatpush.xpose.msra.mxu0 0.0
      %465 = vmatpush.xpose.msra.mxu0 0.0
      %466 = vmatpush.xpose.msra.mxu0 0.0
      %467 = vmatpush.xpose.msra.mxu0 0.0
      %468 = vmatpush.xpose.msra.mxu0 0.0
      %469 = vmatpush.xpose.msra.mxu0 0.0
      %470 = vmatpush.xpose.msra.mxu0 0.0
      %471 = vmatpush.xpose.msra.mxu0 %v155
      %472 = vmatmul.f32.gmra.mxu0 %v452
      %v473 = vpop.f32.mrf.mxu0
      %v474 = vadd.f32 0.0, %v473
      %475 = vmatmul.f32.gmra.mxu0 %v454
      %v476 = vpop.f32.mrf.mxu0
      %v477 = vadd.f32 0.0, %v476
      %478 = vdwg.mxu0
      %479 = vmatpush.xpose.msra.mxu0 0.0
      %480 = vmatpush.xpose.msra.mxu0 0.0
      %481 = vmatpush.xpose.msra.mxu0 0.0
      %482 = vmatpush.xpose.msra.mxu0 0.0
      %483 = vmatpush.xpose.msra.mxu0 0.0
      %484 = vmatpush.xpose.msra.mxu0 0.0
      %485 = vmatpush.xpose.msra.mxu0 0.0
      %486 = vmatpush.xpose.msra.mxu0 0.0
      %487 = vmatpush.xpose.msra.mxu0 0.0
      %488 = vmatpush.xpose.msra.mxu0 0.0
      %489 = vmatpush.xpose.msra.mxu0 0.0
      %490 = vmatpush.xpose.msra.mxu0 0.0
      %491 = vmatpush.xpose.msra.mxu0 0.0
      %492 = vmatpush.xpose.msra.mxu0 0.0
      %493 = vmatpush.xpose.msra.mxu0 0.0
      %494 = vmatpush.xpose.msra.mxu0 %v156
      %495 = vmatmul.f32.gmra.mxu0 %v453
      %v496 = vpop.f32.mrf.mxu0
      %v497 = vadd.f32 %v474, %v496
      %498 = vmatmul.f32.gmra.mxu0 %v455
      %v499 = vpop.f32.mrf.mxu0
      %v500 = vadd.f32 %v477, %v499
      %501 = vdwg.mxu0
      %v502 = vadd.f32 %v452, %v453
      %503 = vadd.xlane.f32.xlu0 %v502
      %v504 = vpop.xlane.xlu0 %503
      %v505 = vadd.f32 %v454, %v455
      %506 = vadd.xlane.f32.xlu0 %v505
      %v507 = vpop.xlane.xlu0 %506
      %vm508 = vcmp.gt.f32.partialorder %v504, 0.0
      %vm509 = vcmp.gt.f32.partialorder %v507, 0.0
      %v510 = vmax.f32 %v497, 1e-30
      %v511 = vmax.f32 %v500, 1e-30
      %v512 = vlog2.pop %v510
      %v513 = vmul.f32 %v512, 0.6931472
      %v514 = vlog2.pop %v511
      %v515 = vmul.f32 %v514, 0.6931472
      %v516 = vmax.f32 %v504, 1.0
      %v517 = vmax.f32 %v507, 1.0
      %v518 = vlog2.pop %v516
      %v519 = vmul.f32 %v518, 0.6931472
      %v520 = vlog2.pop %v517
      %v521 = vmul.f32 %v520, 0.6931472
      %v522 = vsub.f32 %v513, %v519
      %v523 = vsub.f32 %v515, %v521
      %v524 = vsel %vm508, 1, 0
      %v525 = vsel %vm509, 1, 0
      %vm526 = vcmp.eq.s32.totalorder %v524, 1
      %vm527 = vcmp.eq.s32.totalorder %v525, 1
      %v528 = vsel %vm526, %v522, -1e+18
      %v529 = vsel %vm527, %v523, -1e+18
      %531 = vset.pattern.permute.xlu0 0
      %532 = vperm.xlu0 %531, %v528
      %v533 = vpop.permute.xlu0 %532
      %536 = vset.pattern.permute.xlu0 0
      %537 = vperm.xlu0 %536, %v529
      %v538 = vpop.permute.xlu0 %537
      %v540 = vmul.f32 %v533, %v268
      %v541 = vmul.f32 %v533, %v269
      %v542 = vmul.f32 %v538, %v268
      %v543 = vmul.f32 %v538, %v269
      %544 = vset.pattern.permute.xlu0 1
      %545 = vperm.xlu0 %544, %v528
      %v546 = vpop.permute.xlu0 %545
      %548 = vset.pattern.permute.xlu0 1
      %549 = vperm.xlu0 %548, %v529
      %v550 = vpop.permute.xlu0 %549
      %v552 = vmul.f32 %v546, %v282
      %v553 = vmul.f32 %v546, %v283
      %v554 = vmul.f32 %v550, %v282
      %v555 = vmul.f32 %v550, %v283
      %v556 = vadd.f32 %v540, %v552
      %v557 = vadd.f32 %v541, %v553
      %v558 = vadd.f32 %v542, %v554
      %v559 = vadd.f32 %v543, %v555
      %560 = vset.pattern.permute.xlu0 2
      %561 = vperm.xlu0 %560, %v528
      %v562 = vpop.permute.xlu0 %561
      %564 = vset.pattern.permute.xlu0 2
      %565 = vperm.xlu0 %564, %v529
      %v566 = vpop.permute.xlu0 %565
      %v568 = vmul.f32 %v562, %v300
      %v569 = vmul.f32 %v562, %v301
      %v570 = vmul.f32 %v566, %v300
      %v571 = vmul.f32 %v566, %v301
      %v572 = vadd.f32 %v556, %v568
      %v573 = vadd.f32 %v557, %v569
      %v574 = vadd.f32 %v558, %v570
      %v575 = vadd.f32 %v559, %v571
      %576 = vset.pattern.permute.xlu0 3
      %577 = vperm.xlu0 %576, %v528
      %v578 = vpop.permute.xlu0 %577
      %580 = vset.pattern.permute.xlu0 3
      %581 = vperm.xlu0 %580, %v529
      %v582 = vpop.permute.xlu0 %581
      %v584 = vmul.f32 %v578, %v318
      %v585 = vmul.f32 %v578, %v319
      %v586 = vmul.f32 %v582, %v318
      %v587 = vmul.f32 %v582, %v319
      %v588 = vadd.f32 %v572, %v584
      %v589 = vadd.f32 %v573, %v585
      %v590 = vadd.f32 %v574, %v586
      %v591 = vadd.f32 %v575, %v587
      %592 = vset.pattern.permute.xlu0 4
      %593 = vperm.xlu0 %592, %v528
      %v594 = vpop.permute.xlu0 %593
      %596 = vset.pattern.permute.xlu0 4
      %597 = vperm.xlu0 %596, %v529
      %v598 = vpop.permute.xlu0 %597
      %v600 = vmul.f32 %v594, %v336
      %v601 = vmul.f32 %v594, %v337
      %v602 = vmul.f32 %v598, %v336
      %v603 = vmul.f32 %v598, %v337
      %v604 = vadd.f32 %v588, %v600
      %v605 = vadd.f32 %v589, %v601
      %v606 = vadd.f32 %v590, %v602
      %v607 = vadd.f32 %v591, %v603
      %608 = vset.pattern.permute.xlu0 5
      %609 = vperm.xlu0 %608, %v528
      %v610 = vpop.permute.xlu0 %609
      %612 = vset.pattern.permute.xlu0 5
      %613 = vperm.xlu0 %612, %v529
      %v614 = vpop.permute.xlu0 %613
      %v616 = vmul.f32 %v610, %v354
      %v617 = vmul.f32 %v610, %v355
      %v618 = vmul.f32 %v614, %v354
      %v619 = vmul.f32 %v614, %v355
      %v620 = vadd.f32 %v604, %v616
      %v621 = vadd.f32 %v605, %v617
      %v622 = vadd.f32 %v606, %v618
      %v623 = vadd.f32 %v607, %v619
      %624 = vset.pattern.permute.xlu0 6
      %625 = vperm.xlu0 %624, %v528
      %v626 = vpop.permute.xlu0 %625
      %628 = vset.pattern.permute.xlu0 6
      %629 = vperm.xlu0 %628, %v529
      %v630 = vpop.permute.xlu0 %629
      %v632 = vmul.f32 %v626, %v372
      %v633 = vmul.f32 %v626, %v373
      %v634 = vmul.f32 %v630, %v372
      %v635 = vmul.f32 %v630, %v373
      %v636 = vadd.f32 %v620, %v632
      %v637 = vadd.f32 %v621, %v633
      %v638 = vadd.f32 %v622, %v634
      %v639 = vadd.f32 %v623, %v635
      %640 = vset.pattern.permute.xlu0 7
      %641 = vperm.xlu0 %640, %v528
      %v642 = vpop.permute.xlu0 %641
      %644 = vset.pattern.permute.xlu0 7
      %645 = vperm.xlu0 %644, %v529
      %v646 = vpop.permute.xlu0 %645
      %v648 = vmul.f32 %v642, %v390
      %v649 = vmul.f32 %v642, %v391
      %v650 = vmul.f32 %v646, %v390
      %v651 = vmul.f32 %v646, %v391
      %v652 = vadd.f32 %v636, %v648
      %v653 = vadd.f32 %v637, %v649
      %v654 = vadd.f32 %v638, %v650
      %v655 = vadd.f32 %v639, %v651
      %v656 = vmax.f32 %v652, %v654
      %v657 = vrot.slane %v656, 4
      %v658 = vmax.f32 %v656, %v657
      %v659 = vrot.slane %v658, 2
      %v660 = vmax.f32 %v658, %v659
      %v661 = vrot.slane %v660, 1
      %v662 = vmax.f32 %v660, %v661
      %v663 = vmax.f32 %v653, %v655
      %v664 = vrot.slane %v663, 4
      %v665 = vmax.f32 %v663, %v664
      %v666 = vrot.slane %v665, 2
      %v667 = vmax.f32 %v665, %v666
      %v668 = vrot.slane %v667, 1
      %v669 = vmax.f32 %v667, %v668
      %vm670 = vcmp.ge.f32.partialorder %v652, %v662
      %vm671 = vcmp.ge.f32.partialorder %v653, %v669
      %vm672 = vcmp.ge.f32.partialorder %v654, %v662
      %vm673 = vcmp.ge.f32.partialorder %v655, %v669
      %v674 = vsel %vm670, %v158, 16
      %v675 = vsel %vm671, %v158, 16
      %v676 = vsel %vm672, %v159, 16
      %v677 = vsel %vm673, %v159, 16
      %vm678 = vcmp.lt.s32.totalorder %v674, %v676
      %v679 = vsel %vm678, %v674, %v676
      %v680 = vrot.slane %v679, 4
      %vm681 = vcmp.lt.s32.totalorder %v679, %v680
      %v682 = vsel %vm681, %v679, %v680
      %v683 = vrot.slane %v682, 2
      %vm684 = vcmp.lt.s32.totalorder %v682, %v683
      %v685 = vsel %vm684, %v682, %v683
      %v686 = vrot.slane %v685, 1
      %vm687 = vcmp.lt.s32.totalorder %v685, %v686
      %v688 = vsel %vm687, %v685, %v686
      %vm689 = vcmp.lt.s32.totalorder %v675, %v677
      %v690 = vsel %vm689, %v675, %v677
      %v691 = vrot.slane %v690, 4
      %vm692 = vcmp.lt.s32.totalorder %v690, %v691
      %v693 = vsel %vm692, %v690, %v691
      %v694 = vrot.slane %v693, 2
      %vm695 = vcmp.lt.s32.totalorder %v693, %v694
      %v696 = vsel %vm695, %v693, %v694
      %v697 = vrot.slane %v696, 1
      %vm698 = vcmp.lt.s32.totalorder %v696, %v697
      %v699 = vsel %vm698, %v696, %v697
      %vm700 = vcmp.eq.s32.totalorder %v688, %v158
      %vm701 = vcmp.eq.s32.totalorder %v699, %v158
      %vm702 = vcmp.eq.s32.totalorder %v688, %v159
      %vm703 = vcmp.eq.s32.totalorder %v699, %v159
      %v704 = vsel %vm700, 1, 0
      %v705 = vsel %vm701, 1, 0
      %v706 = vsel %vm702, 1, 0
      %v707 = vsel %vm703, 1, 0
      %v708 = vcvt.s32.f32 %v704
      %v709 = vcvt.s32.f32 %v705
      %v710 = vcvt.s32.f32 %v706
      %v711 = vcvt.s32.f32 %v707
      %712 = vmatpush.xpose.msra.mxu0 0.0
      %713 = vmatpush.xpose.msra.mxu0 0.0
      %714 = vmatpush.xpose.msra.mxu0 0.0
      %715 = vmatpush.xpose.msra.mxu0 0.0
      %716 = vmatpush.xpose.msra.mxu0 0.0
      %717 = vmatpush.xpose.msra.mxu0 0.0
      %718 = vmatpush.xpose.msra.mxu0 0.0
      %719 = vmatpush.xpose.msra.mxu0 0.0
      %720 = vmatpush.xpose.msra.mxu0 0.0
      %721 = vmatpush.xpose.msra.mxu0 0.0
      %722 = vmatpush.xpose.msra.mxu0 0.0
      %723 = vmatpush.xpose.msra.mxu0 0.0
      %724 = vmatpush.xpose.msra.mxu0 0.0
      %725 = vmatpush.xpose.msra.mxu0 0.0
      %726 = vmatpush.xpose.msra.mxu0 0.0
      %727 = vmatpush.xpose.msra.mxu0 %v155
      %728 = vmatmul.f32.gmra.mxu0 %v708
      %v729 = vpop.f32.mrf.mxu0
      %v730 = vadd.f32 0.0, %v729
      %731 = vmatmul.f32.gmra.mxu0 %v710
      %v732 = vpop.f32.mrf.mxu0
      %v733 = vadd.f32 0.0, %v732
      %734 = vdwg.mxu0
      %735 = vmatpush.xpose.msra.mxu0 0.0
      %736 = vmatpush.xpose.msra.mxu0 0.0
      %737 = vmatpush.xpose.msra.mxu0 0.0
      %738 = vmatpush.xpose.msra.mxu0 0.0
      %739 = vmatpush.xpose.msra.mxu0 0.0
      %740 = vmatpush.xpose.msra.mxu0 0.0
      %741 = vmatpush.xpose.msra.mxu0 0.0
      %742 = vmatpush.xpose.msra.mxu0 0.0
      %743 = vmatpush.xpose.msra.mxu0 0.0
      %744 = vmatpush.xpose.msra.mxu0 0.0
      %745 = vmatpush.xpose.msra.mxu0 0.0
      %746 = vmatpush.xpose.msra.mxu0 0.0
      %747 = vmatpush.xpose.msra.mxu0 0.0
      %748 = vmatpush.xpose.msra.mxu0 0.0
      %749 = vmatpush.xpose.msra.mxu0 0.0
      %750 = vmatpush.xpose.msra.mxu0 %v156
      %751 = vmatmul.f32.gmra.mxu0 %v709
      %v752 = vpop.f32.mrf.mxu0
      %v753 = vadd.f32 %v730, %v752
      %754 = vmatmul.f32.gmra.mxu0 %v711
      %v755 = vpop.f32.mrf.mxu0
      %v756 = vadd.f32 %v733, %v755
      %757 = vdwg.mxu0
      %v758 = vadd.f32 %v708, %v709
      %759 = vadd.xlane.f32.xlu0 %v758
      %v760 = vpop.xlane.xlu0 %759
      %v761 = vadd.f32 %v710, %v711
      %762 = vadd.xlane.f32.xlu0 %v761
      %v763 = vpop.xlane.xlu0 %762
      %vm764 = vcmp.gt.f32.partialorder %v760, 0.0
      %vm765 = vcmp.gt.f32.partialorder %v763, 0.0
      %v766 = vmax.f32 %v753, 1e-30
      %v767 = vmax.f32 %v756, 1e-30
      %v768 = vlog2.pop %v766
      %v769 = vmul.f32 %v768, 0.6931472
      %v770 = vlog2.pop %v767
      %v771 = vmul.f32 %v770, 0.6931472
      %v772 = vmax.f32 %v760, 1.0
      %v773 = vmax.f32 %v763, 1.0
      %v774 = vlog2.pop %v772
      %v775 = vmul.f32 %v774, 0.6931472
      %v776 = vlog2.pop %v773
      %v777 = vmul.f32 %v776, 0.6931472
      %v778 = vsub.f32 %v769, %v775
      %v779 = vsub.f32 %v771, %v777
      %v780 = vsel %vm764, 1, 0
      %v781 = vsel %vm765, 1, 0
      %vm782 = vcmp.eq.s32.totalorder %v780, 1
      %vm783 = vcmp.eq.s32.totalorder %v781, 1
      %v784 = vsel %vm782, %v778, -1e+18
      %v785 = vsel %vm783, %v779, -1e+18
      %787 = vset.pattern.permute.xlu0 0
      %788 = vperm.xlu0 %787, %v784
      %v789 = vpop.permute.xlu0 %788
      %792 = vset.pattern.permute.xlu0 0
      %793 = vperm.xlu0 %792, %v785
      %v794 = vpop.permute.xlu0 %793
      %v796 = vmul.f32 %v789, %v268
      %v797 = vmul.f32 %v789, %v269
      %v798 = vmul.f32 %v794, %v268
      %v799 = vmul.f32 %v794, %v269
      %800 = vset.pattern.permute.xlu0 1
      %801 = vperm.xlu0 %800, %v784
      %v802 = vpop.permute.xlu0 %801
      %804 = vset.pattern.permute.xlu0 1
      %805 = vperm.xlu0 %804, %v785
      %v806 = vpop.permute.xlu0 %805
      %v808 = vmul.f32 %v802, %v282
      %v809 = vmul.f32 %v802, %v283
      %v810 = vmul.f32 %v806, %v282
      %v811 = vmul.f32 %v806, %v283
      %v812 = vadd.f32 %v796, %v808
      %v813 = vadd.f32 %v797, %v809
      %v814 = vadd.f32 %v798, %v810
      %v815 = vadd.f32 %v799, %v811
      %816 = vset.pattern.permute.xlu0 2
      %817 = vperm.xlu0 %816, %v784
      %v818 = vpop.permute.xlu0 %817
      %820 = vset.pattern.permute.xlu0 2
      %821 = vperm.xlu0 %820, %v785
      %v822 = vpop.permute.xlu0 %821
      %v824 = vmul.f32 %v818, %v300
      %v825 = vmul.f32 %v818, %v301
      %v826 = vmul.f32 %v822, %v300
      %v827 = vmul.f32 %v822, %v301
      %v828 = vadd.f32 %v812, %v824
      %v829 = vadd.f32 %v813, %v825
      %v830 = vadd.f32 %v814, %v826
      %v831 = vadd.f32 %v815, %v827
      %832 = vset.pattern.permute.xlu0 3
      %833 = vperm.xlu0 %832, %v784
      %v834 = vpop.permute.xlu0 %833
      %836 = vset.pattern.permute.xlu0 3
      %837 = vperm.xlu0 %836, %v785
      %v838 = vpop.permute.xlu0 %837
      %v840 = vmul.f32 %v834, %v318
      %v841 = vmul.f32 %v834, %v319
      %v842 = vmul.f32 %v838, %v318
      %v843 = vmul.f32 %v838, %v319
      %v844 = vadd.f32 %v828, %v840
      %v845 = vadd.f32 %v829, %v841
      %v846 = vadd.f32 %v830, %v842
      %v847 = vadd.f32 %v831, %v843
      %848 = vset.pattern.permute.xlu0 4
      %849 = vperm.xlu0 %848, %v784
      %v850 = vpop.permute.xlu0 %849
      %852 = vset.pattern.permute.xlu0 4
      %853 = vperm.xlu0 %852, %v785
      %v854 = vpop.permute.xlu0 %853
      %v856 = vmul.f32 %v850, %v336
      %v857 = vmul.f32 %v850, %v337
      %v858 = vmul.f32 %v854, %v336
      %v859 = vmul.f32 %v854, %v337
      %v860 = vadd.f32 %v844, %v856
      %v861 = vadd.f32 %v845, %v857
      %v862 = vadd.f32 %v846, %v858
      %v863 = vadd.f32 %v847, %v859
      %864 = vset.pattern.permute.xlu0 5
      %865 = vperm.xlu0 %864, %v784
      %v866 = vpop.permute.xlu0 %865
      %868 = vset.pattern.permute.xlu0 5
      %869 = vperm.xlu0 %868, %v785
      %v870 = vpop.permute.xlu0 %869
      %v872 = vmul.f32 %v866, %v354
      %v873 = vmul.f32 %v866, %v355
      %v874 = vmul.f32 %v870, %v354
      %v875 = vmul.f32 %v870, %v355
      %v876 = vadd.f32 %v860, %v872
      %v877 = vadd.f32 %v861, %v873
      %v878 = vadd.f32 %v862, %v874
      %v879 = vadd.f32 %v863, %v875
      %880 = vset.pattern.permute.xlu0 6
      %881 = vperm.xlu0 %880, %v784
      %v882 = vpop.permute.xlu0 %881
      %884 = vset.pattern.permute.xlu0 6
      %885 = vperm.xlu0 %884, %v785
      %v886 = vpop.permute.xlu0 %885
      %v888 = vmul.f32 %v882, %v372
      %v889 = vmul.f32 %v882, %v373
      %v890 = vmul.f32 %v886, %v372
      %v891 = vmul.f32 %v886, %v373
      %v892 = vadd.f32 %v876, %v888
      %v893 = vadd.f32 %v877, %v889
      %v894 = vadd.f32 %v878, %v890
      %v895 = vadd.f32 %v879, %v891
      %896 = vset.pattern.permute.xlu0 7
      %897 = vperm.xlu0 %896, %v784
      %v898 = vpop.permute.xlu0 %897
      %900 = vset.pattern.permute.xlu0 7
      %901 = vperm.xlu0 %900, %v785
      %v902 = vpop.permute.xlu0 %901
      %v904 = vmul.f32 %v898, %v390
      %v905 = vmul.f32 %v898, %v391
      %v906 = vmul.f32 %v902, %v390
      %v907 = vmul.f32 %v902, %v391
      %v908 = vadd.f32 %v892, %v904
      %v909 = vadd.f32 %v893, %v905
      %v910 = vadd.f32 %v894, %v906
      %v911 = vadd.f32 %v895, %v907
      %v912 = vmax.f32 %v908, %v910
      %v913 = vrot.slane %v912, 4
      %v914 = vmax.f32 %v912, %v913
      %v915 = vrot.slane %v914, 2
      %v916 = vmax.f32 %v914, %v915
      %v917 = vrot.slane %v916, 1
      %v918 = vmax.f32 %v916, %v917
      %v919 = vmax.f32 %v909, %v911
      %v920 = vrot.slane %v919, 4
      %v921 = vmax.f32 %v919, %v920
      %v922 = vrot.slane %v921, 2
      %v923 = vmax.f32 %v921, %v922
      %v924 = vrot.slane %v923, 1
      %v925 = vmax.f32 %v923, %v924
      %vm926 = vcmp.ge.f32.partialorder %v908, %v918
      %vm927 = vcmp.ge.f32.partialorder %v909, %v925
      %vm928 = vcmp.ge.f32.partialorder %v910, %v918
      %vm929 = vcmp.ge.f32.partialorder %v911, %v925
      %v930 = vsel %vm926, %v158, 16
      %v931 = vsel %vm927, %v158, 16
      %v932 = vsel %vm928, %v159, 16
      %v933 = vsel %vm929, %v159, 16
      %vm934 = vcmp.lt.s32.totalorder %v930, %v932
      %v935 = vsel %vm934, %v930, %v932
      %v936 = vrot.slane %v935, 4
      %vm937 = vcmp.lt.s32.totalorder %v935, %v936
      %v938 = vsel %vm937, %v935, %v936
      %v939 = vrot.slane %v938, 2
      %vm940 = vcmp.lt.s32.totalorder %v938, %v939
      %v941 = vsel %vm940, %v938, %v939
      %v942 = vrot.slane %v941, 1
      %vm943 = vcmp.lt.s32.totalorder %v941, %v942
      %v944 = vsel %vm943, %v941, %v942
      %vm945 = vcmp.lt.s32.totalorder %v931, %v933
      %v946 = vsel %vm945, %v931, %v933
      %v947 = vrot.slane %v946, 4
      %vm948 = vcmp.lt.s32.totalorder %v946, %v947
      %v949 = vsel %vm948, %v946, %v947
      %v950 = vrot.slane %v949, 2
      %vm951 = vcmp.lt.s32.totalorder %v949, %v950
      %v952 = vsel %vm951, %v949, %v950
      %v953 = vrot.slane %v952, 1
      %vm954 = vcmp.lt.s32.totalorder %v952, %v953
      %v955 = vsel %vm954, %v952, %v953
      %vm956 = vcmp.eq.s32.totalorder %v944, %v158
      %vm957 = vcmp.eq.s32.totalorder %v955, %v158
      %vm958 = vcmp.eq.s32.totalorder %v944, %v159
      %vm959 = vcmp.eq.s32.totalorder %v955, %v159
      %v960 = vsel %vm956, 1, 0
      %v961 = vsel %vm957, 1, 0
      %v962 = vsel %vm958, 1, 0
      %v963 = vsel %vm959, 1, 0
      %v964 = vcvt.s32.f32 %v960
      %v965 = vcvt.s32.f32 %v961
      %v966 = vcvt.s32.f32 %v962
      %v967 = vcvt.s32.f32 %v963
      %968 = vmatpush.xpose.msra.mxu0 0.0
      %969 = vmatpush.xpose.msra.mxu0 0.0
      %970 = vmatpush.xpose.msra.mxu0 0.0
      %971 = vmatpush.xpose.msra.mxu0 0.0
      %972 = vmatpush.xpose.msra.mxu0 0.0
      %973 = vmatpush.xpose.msra.mxu0 0.0
      %974 = vmatpush.xpose.msra.mxu0 0.0
      %975 = vmatpush.xpose.msra.mxu0 0.0
      %976 = vmatpush.xpose.msra.mxu0 0.0
      %977 = vmatpush.xpose.msra.mxu0 0.0
      %978 = vmatpush.xpose.msra.mxu0 0.0
      %979 = vmatpush.xpose.msra.mxu0 0.0
      %980 = vmatpush.xpose.msra.mxu0 0.0
      %981 = vmatpush.xpose.msra.mxu0 0.0
      %982 = vmatpush.xpose.msra.mxu0 0.0
      %983 = vmatpush.xpose.msra.mxu0 %v155
      %984 = vmatmul.f32.gmra.mxu0 %v964
      %v985 = vpop.f32.mrf.mxu0
      %v986 = vadd.f32 0.0, %v985
      %987 = vmatmul.f32.gmra.mxu0 %v966
      %v988 = vpop.f32.mrf.mxu0
      %v989 = vadd.f32 0.0, %v988
      %990 = vdwg.mxu0
      %991 = vmatpush.xpose.msra.mxu0 0.0
      %992 = vmatpush.xpose.msra.mxu0 0.0
      %993 = vmatpush.xpose.msra.mxu0 0.0
      %994 = vmatpush.xpose.msra.mxu0 0.0
      %995 = vmatpush.xpose.msra.mxu0 0.0
      %996 = vmatpush.xpose.msra.mxu0 0.0
      %997 = vmatpush.xpose.msra.mxu0 0.0
      %998 = vmatpush.xpose.msra.mxu0 0.0
      %999 = vmatpush.xpose.msra.mxu0 0.0
      %1000 = vmatpush.xpose.msra.mxu0 0.0
      %1001 = vmatpush.xpose.msra.mxu0 0.0
      %1002 = vmatpush.xpose.msra.mxu0 0.0
      %1003 = vmatpush.xpose.msra.mxu0 0.0
      %1004 = vmatpush.xpose.msra.mxu0 0.0
      %1005 = vmatpush.xpose.msra.mxu0 0.0
      %1006 = vmatpush.xpose.msra.mxu0 %v156
      %1007 = vmatmul.f32.gmra.mxu0 %v965
      %v1008 = vpop.f32.mrf.mxu0
      %v1009 = vadd.f32 %v986, %v1008
      %1010 = vmatmul.f32.gmra.mxu0 %v967
      %v1011 = vpop.f32.mrf.mxu0
      %v1012 = vadd.f32 %v989, %v1011
      %1013 = vdwg.mxu0
      %v1014 = vadd.f32 %v964, %v965
      %1015 = vadd.xlane.f32.xlu0 %v1014
      %v1016 = vpop.xlane.xlu0 %1015
      %v1017 = vadd.f32 %v966, %v967
      %1018 = vadd.xlane.f32.xlu0 %v1017
      %v1019 = vpop.xlane.xlu0 %1018
      %vm1020 = vcmp.gt.f32.partialorder %v1016, 0.0
      %vm1021 = vcmp.gt.f32.partialorder %v1019, 0.0
      %v1022 = vmax.f32 %v1009, 1e-30
      %v1023 = vmax.f32 %v1012, 1e-30
      %v1024 = vlog2.pop %v1022
      %v1025 = vmul.f32 %v1024, 0.6931472
      %v1026 = vlog2.pop %v1023
      %v1027 = vmul.f32 %v1026, 0.6931472
      %v1028 = vmax.f32 %v1016, 1.0
      %v1029 = vmax.f32 %v1019, 1.0
      %v1030 = vlog2.pop %v1028
      %v1031 = vmul.f32 %v1030, 0.6931472
      %v1032 = vlog2.pop %v1029
      %v1033 = vmul.f32 %v1032, 0.6931472
      %v1034 = vsub.f32 %v1025, %v1031
      %v1035 = vsub.f32 %v1027, %v1033
      %v1036 = vsel %vm1020, 1, 0
      %v1037 = vsel %vm1021, 1, 0
      %vm1038 = vcmp.eq.s32.totalorder %v1036, 1
      %vm1039 = vcmp.eq.s32.totalorder %v1037, 1
      %v1040 = vsel %vm1038, %v1034, -1e+18
      %v1041 = vsel %vm1039, %v1035, -1e+18
      %1043 = vset.pattern.permute.xlu0 0
      %1044 = vperm.xlu0 %1043, %v1040
      %v1045 = vpop.permute.xlu0 %1044
      %1048 = vset.pattern.permute.xlu0 0
      %1049 = vperm.xlu0 %1048, %v1041
      %v1050 = vpop.permute.xlu0 %1049
      %v1052 = vmul.f32 %v1045, %v268
      %v1053 = vmul.f32 %v1045, %v269
      %v1054 = vmul.f32 %v1050, %v268
      %v1055 = vmul.f32 %v1050, %v269
      %1056 = vset.pattern.permute.xlu0 1
      %1057 = vperm.xlu0 %1056, %v1040
      %v1058 = vpop.permute.xlu0 %1057
      %1060 = vset.pattern.permute.xlu0 1
      %1061 = vperm.xlu0 %1060, %v1041
      %v1062 = vpop.permute.xlu0 %1061
      %v1064 = vmul.f32 %v1058, %v282
      %v1065 = vmul.f32 %v1058, %v283
      %v1066 = vmul.f32 %v1062, %v282
      %v1067 = vmul.f32 %v1062, %v283
      %v1068 = vadd.f32 %v1052, %v1064
      %v1069 = vadd.f32 %v1053, %v1065
      %v1070 = vadd.f32 %v1054, %v1066
      %v1071 = vadd.f32 %v1055, %v1067
      %1072 = vset.pattern.permute.xlu0 2
      %1073 = vperm.xlu0 %1072, %v1040
      %v1074 = vpop.permute.xlu0 %1073
      %1076 = vset.pattern.permute.xlu0 2
      %1077 = vperm.xlu0 %1076, %v1041
      %v1078 = vpop.permute.xlu0 %1077
      %v1080 = vmul.f32 %v1074, %v300
      %v1081 = vmul.f32 %v1074, %v301
      %v1082 = vmul.f32 %v1078, %v300
      %v1083 = vmul.f32 %v1078, %v301
      %v1084 = vadd.f32 %v1068, %v1080
      %v1085 = vadd.f32 %v1069, %v1081
      %v1086 = vadd.f32 %v1070, %v1082
      %v1087 = vadd.f32 %v1071, %v1083
      %1088 = vset.pattern.permute.xlu0 3
      %1089 = vperm.xlu0 %1088, %v1040
      %v1090 = vpop.permute.xlu0 %1089
      %1092 = vset.pattern.permute.xlu0 3
      %1093 = vperm.xlu0 %1092, %v1041
      %v1094 = vpop.permute.xlu0 %1093
      %v1096 = vmul.f32 %v1090, %v318
      %v1097 = vmul.f32 %v1090, %v319
      %v1098 = vmul.f32 %v1094, %v318
      %v1099 = vmul.f32 %v1094, %v319
      %v1100 = vadd.f32 %v1084, %v1096
      %v1101 = vadd.f32 %v1085, %v1097
      %v1102 = vadd.f32 %v1086, %v1098
      %v1103 = vadd.f32 %v1087, %v1099
      %1104 = vset.pattern.permute.xlu0 4
      %1105 = vperm.xlu0 %1104, %v1040
      %v1106 = vpop.permute.xlu0 %1105
      %1108 = vset.pattern.permute.xlu0 4
      %1109 = vperm.xlu0 %1108, %v1041
      %v1110 = vpop.permute.xlu0 %1109
      %v1112 = vmul.f32 %v1106, %v336
      %v1113 = vmul.f32 %v1106, %v337
      %v1114 = vmul.f32 %v1110, %v336
      %v1115 = vmul.f32 %v1110, %v337
      %v1116 = vadd.f32 %v1100, %v1112
      %v1117 = vadd.f32 %v1101, %v1113
      %v1118 = vadd.f32 %v1102, %v1114
      %v1119 = vadd.f32 %v1103, %v1115
      %1120 = vset.pattern.permute.xlu0 5
      %1121 = vperm.xlu0 %1120, %v1040
      %v1122 = vpop.permute.xlu0 %1121
      %1124 = vset.pattern.permute.xlu0 5
      %1125 = vperm.xlu0 %1124, %v1041
      %v1126 = vpop.permute.xlu0 %1125
      %v1128 = vmul.f32 %v1122, %v354
      %v1129 = vmul.f32 %v1122, %v355
      %v1130 = vmul.f32 %v1126, %v354
      %v1131 = vmul.f32 %v1126, %v355
      %v1132 = vadd.f32 %v1116, %v1128
      %v1133 = vadd.f32 %v1117, %v1129
      %v1134 = vadd.f32 %v1118, %v1130
      %v1135 = vadd.f32 %v1119, %v1131
      %1136 = vset.pattern.permute.xlu0 6
      %1137 = vperm.xlu0 %1136, %v1040
      %v1138 = vpop.permute.xlu0 %1137
      %1140 = vset.pattern.permute.xlu0 6
      %1141 = vperm.xlu0 %1140, %v1041
      %v1142 = vpop.permute.xlu0 %1141
      %v1144 = vmul.f32 %v1138, %v372
      %v1145 = vmul.f32 %v1138, %v373
      %v1146 = vmul.f32 %v1142, %v372
      %v1147 = vmul.f32 %v1142, %v373
      %v1148 = vadd.f32 %v1132, %v1144
      %v1149 = vadd.f32 %v1133, %v1145
      %v1150 = vadd.f32 %v1134, %v1146
      %v1151 = vadd.f32 %v1135, %v1147
      %1152 = vset.pattern.permute.xlu0 7
      %1153 = vperm.xlu0 %1152, %v1040
      %v1154 = vpop.permute.xlu0 %1153
      %1156 = vset.pattern.permute.xlu0 7
      %1157 = vperm.xlu0 %1156, %v1041
      %v1158 = vpop.permute.xlu0 %1157
      %v1160 = vmul.f32 %v1154, %v390
      %v1161 = vmul.f32 %v1154, %v391
      %v1162 = vmul.f32 %v1158, %v390
      %v1163 = vmul.f32 %v1158, %v391
      %v1164 = vadd.f32 %v1148, %v1160
      %v1165 = vadd.f32 %v1149, %v1161
      %v1166 = vadd.f32 %v1150, %v1162
      %v1167 = vadd.f32 %v1151, %v1163
      %v1168 = vmax.f32 %v1164, %v1166
      %v1169 = vrot.slane %v1168, 4
      %v1170 = vmax.f32 %v1168, %v1169
      %v1171 = vrot.slane %v1170, 2
      %v1172 = vmax.f32 %v1170, %v1171
      %v1173 = vrot.slane %v1172, 1
      %v1174 = vmax.f32 %v1172, %v1173
      %v1175 = vmax.f32 %v1165, %v1167
      %v1176 = vrot.slane %v1175, 4
      %v1177 = vmax.f32 %v1175, %v1176
      %v1178 = vrot.slane %v1177, 2
      %v1179 = vmax.f32 %v1177, %v1178
      %v1180 = vrot.slane %v1179, 1
      %v1181 = vmax.f32 %v1179, %v1180
      %vm1182 = vcmp.ge.f32.partialorder %v1164, %v1174
      %vm1183 = vcmp.ge.f32.partialorder %v1165, %v1181
      %vm1184 = vcmp.ge.f32.partialorder %v1166, %v1174
      %vm1185 = vcmp.ge.f32.partialorder %v1167, %v1181
      %v1186 = vsel %vm1182, %v158, 16
      %v1187 = vsel %vm1183, %v158, 16
      %v1188 = vsel %vm1184, %v159, 16
      %v1189 = vsel %vm1185, %v159, 16
      %vm1190 = vcmp.lt.s32.totalorder %v1186, %v1188
      %v1191 = vsel %vm1190, %v1186, %v1188
      %v1192 = vrot.slane %v1191, 4
      %vm1193 = vcmp.lt.s32.totalorder %v1191, %v1192
      %v1194 = vsel %vm1193, %v1191, %v1192
      %v1195 = vrot.slane %v1194, 2
      %vm1196 = vcmp.lt.s32.totalorder %v1194, %v1195
      %v1197 = vsel %vm1196, %v1194, %v1195
      %v1198 = vrot.slane %v1197, 1
      %vm1199 = vcmp.lt.s32.totalorder %v1197, %v1198
      %v1200 = vsel %vm1199, %v1197, %v1198
      %vm1201 = vcmp.lt.s32.totalorder %v1187, %v1189
      %v1202 = vsel %vm1201, %v1187, %v1189
      %v1203 = vrot.slane %v1202, 4
      %vm1204 = vcmp.lt.s32.totalorder %v1202, %v1203
      %v1205 = vsel %vm1204, %v1202, %v1203
      %v1206 = vrot.slane %v1205, 2
      %vm1207 = vcmp.lt.s32.totalorder %v1205, %v1206
      %v1208 = vsel %vm1207, %v1205, %v1206
      %v1209 = vrot.slane %v1208, 1
      %vm1210 = vcmp.lt.s32.totalorder %v1208, %v1209
      %v1211 = vsel %vm1210, %v1208, %v1209
      %vm1212 = vcmp.eq.s32.totalorder %v1200, %v158
      %vm1213 = vcmp.eq.s32.totalorder %v1211, %v158
      %vm1214 = vcmp.eq.s32.totalorder %v1200, %v159
      %vm1215 = vcmp.eq.s32.totalorder %v1211, %v159
      %v1216 = vsel %vm1212, 1, 0
      %v1217 = vsel %vm1213, 1, 0
      %v1218 = vsel %vm1214, 1, 0
      %v1219 = vsel %vm1215, 1, 0
      %v1220 = vcvt.s32.f32 %v1216
      %v1221 = vcvt.s32.f32 %v1217
      %v1222 = vcvt.s32.f32 %v1218
      %v1223 = vcvt.s32.f32 %v1219
      %1224 = vmatpush.xpose.msra.mxu0 0.0
      %1225 = vmatpush.xpose.msra.mxu0 0.0
      %1226 = vmatpush.xpose.msra.mxu0 0.0
      %1227 = vmatpush.xpose.msra.mxu0 0.0
      %1228 = vmatpush.xpose.msra.mxu0 0.0
      %1229 = vmatpush.xpose.msra.mxu0 0.0
      %1230 = vmatpush.xpose.msra.mxu0 0.0
      %1231 = vmatpush.xpose.msra.mxu0 0.0
      %1232 = vmatpush.xpose.msra.mxu0 0.0
      %1233 = vmatpush.xpose.msra.mxu0 0.0
      %1234 = vmatpush.xpose.msra.mxu0 0.0
      %1235 = vmatpush.xpose.msra.mxu0 0.0
      %1236 = vmatpush.xpose.msra.mxu0 0.0
      %1237 = vmatpush.xpose.msra.mxu0 0.0
      %1238 = vmatpush.xpose.msra.mxu0 0.0
      %1239 = vmatpush.xpose.msra.mxu0 %v155
      %1240 = vmatmul.f32.gmra.mxu0 %v1220
      %v1241 = vpop.f32.mrf.mxu0
      %v1242 = vadd.f32 0.0, %v1241
      %1243 = vmatmul.f32.gmra.mxu0 %v1222
      %v1244 = vpop.f32.mrf.mxu0
      %v1245 = vadd.f32 0.0, %v1244
      %1246 = vdwg.mxu0
      %1247 = vmatpush.xpose.msra.mxu0 0.0
      %1248 = vmatpush.xpose.msra.mxu0 0.0
      %1249 = vmatpush.xpose.msra.mxu0 0.0
      %1250 = vmatpush.xpose.msra.mxu0 0.0
      %1251 = vmatpush.xpose.msra.mxu0 0.0
      %1252 = vmatpush.xpose.msra.mxu0 0.0
      %1253 = vmatpush.xpose.msra.mxu0 0.0
      %1254 = vmatpush.xpose.msra.mxu0 0.0
      %1255 = vmatpush.xpose.msra.mxu0 0.0
      %1256 = vmatpush.xpose.msra.mxu0 0.0
      %1257 = vmatpush.xpose.msra.mxu0 0.0
      %1258 = vmatpush.xpose.msra.mxu0 0.0
      %1259 = vmatpush.xpose.msra.mxu0 0.0
      %1260 = vmatpush.xpose.msra.mxu0 0.0
      %1261 = vmatpush.xpose.msra.mxu0 0.0
      %1262 = vmatpush.xpose.msra.mxu0 %v156
      %1263 = vmatmul.f32.gmra.mxu0 %v1221
      %v1264 = vpop.f32.mrf.mxu0
      %v1265 = vadd.f32 %v1242, %v1264
      %1266 = vmatmul.f32.gmra.mxu0 %v1223
      %v1267 = vpop.f32.mrf.mxu0
      %v1268 = vadd.f32 %v1245, %v1267
      %1269 = vdwg.mxu0
      %v1270 = vadd.f32 %v1220, %v1221
      %1271 = vadd.xlane.f32.xlu0 %v1270
      %v1272 = vpop.xlane.xlu0 %1271
      %v1273 = vadd.f32 %v1222, %v1223
      %1274 = vadd.xlane.f32.xlu0 %v1273
      %v1275 = vpop.xlane.xlu0 %1274
      %vm1276 = vcmp.gt.f32.partialorder %v1272, 0.0
      %vm1277 = vcmp.gt.f32.partialorder %v1275, 0.0
      %v1278 = vmax.f32 %v1265, 1e-30
      %v1279 = vmax.f32 %v1268, 1e-30
      %v1280 = vlog2.pop %v1278
      %v1281 = vmul.f32 %v1280, 0.6931472
      %v1282 = vlog2.pop %v1279
      %v1283 = vmul.f32 %v1282, 0.6931472
      %v1284 = vmax.f32 %v1272, 1.0
      %v1285 = vmax.f32 %v1275, 1.0
      %v1286 = vlog2.pop %v1284
      %v1287 = vmul.f32 %v1286, 0.6931472
      %v1288 = vlog2.pop %v1285
      %v1289 = vmul.f32 %v1288, 0.6931472
      %v1290 = vsub.f32 %v1281, %v1287
      %v1291 = vsub.f32 %v1283, %v1289
      %v1292 = vsel %vm1276, 1, 0
      %v1293 = vsel %vm1277, 1, 0
      %vm1294 = vcmp.eq.s32.totalorder %v1292, 1
      %vm1295 = vcmp.eq.s32.totalorder %v1293, 1
      %v1296 = vsel %vm1294, %v1290, -1e+18
      %v1297 = vsel %vm1295, %v1291, -1e+18
      %1299 = vset.pattern.permute.xlu0 0
      %1300 = vperm.xlu0 %1299, %v1296
      %v1301 = vpop.permute.xlu0 %1300
      %1304 = vset.pattern.permute.xlu0 0
      %1305 = vperm.xlu0 %1304, %v1297
      %v1306 = vpop.permute.xlu0 %1305
      %v1308 = vmul.f32 %v1301, %v268
      %v1309 = vmul.f32 %v1301, %v269
      %v1310 = vmul.f32 %v1306, %v268
      %v1311 = vmul.f32 %v1306, %v269
      %1312 = vset.pattern.permute.xlu0 1
      %1313 = vperm.xlu0 %1312, %v1296
      %v1314 = vpop.permute.xlu0 %1313
      %1316 = vset.pattern.permute.xlu0 1
      %1317 = vperm.xlu0 %1316, %v1297
      %v1318 = vpop.permute.xlu0 %1317
      %v1320 = vmul.f32 %v1314, %v282
      %v1321 = vmul.f32 %v1314, %v283
      %v1322 = vmul.f32 %v1318, %v282
      %v1323 = vmul.f32 %v1318, %v283
      %v1324 = vadd.f32 %v1308, %v1320
      %v1325 = vadd.f32 %v1309, %v1321
      %v1326 = vadd.f32 %v1310, %v1322
      %v1327 = vadd.f32 %v1311, %v1323
      %1328 = vset.pattern.permute.xlu0 2
      %1329 = vperm.xlu0 %1328, %v1296
      %v1330 = vpop.permute.xlu0 %1329
      %1332 = vset.pattern.permute.xlu0 2
      %1333 = vperm.xlu0 %1332, %v1297
      %v1334 = vpop.permute.xlu0 %1333
      %v1336 = vmul.f32 %v1330, %v300
      %v1337 = vmul.f32 %v1330, %v301
      %v1338 = vmul.f32 %v1334, %v300
      %v1339 = vmul.f32 %v1334, %v301
      %v1340 = vadd.f32 %v1324, %v1336
      %v1341 = vadd.f32 %v1325, %v1337
      %v1342 = vadd.f32 %v1326, %v1338
      %v1343 = vadd.f32 %v1327, %v1339
      %1344 = vset.pattern.permute.xlu0 3
      %1345 = vperm.xlu0 %1344, %v1296
      %v1346 = vpop.permute.xlu0 %1345
      %1348 = vset.pattern.permute.xlu0 3
      %1349 = vperm.xlu0 %1348, %v1297
      %v1350 = vpop.permute.xlu0 %1349
      %v1352 = vmul.f32 %v1346, %v318
      %v1353 = vmul.f32 %v1346, %v319
      %v1354 = vmul.f32 %v1350, %v318
      %v1355 = vmul.f32 %v1350, %v319
      %v1356 = vadd.f32 %v1340, %v1352
      %v1357 = vadd.f32 %v1341, %v1353
      %v1358 = vadd.f32 %v1342, %v1354
      %v1359 = vadd.f32 %v1343, %v1355
      %1360 = vset.pattern.permute.xlu0 4
      %1361 = vperm.xlu0 %1360, %v1296
      %v1362 = vpop.permute.xlu0 %1361
      %1364 = vset.pattern.permute.xlu0 4
      %1365 = vperm.xlu0 %1364, %v1297
      %v1366 = vpop.permute.xlu0 %1365
      %v1368 = vmul.f32 %v1362, %v336
      %v1369 = vmul.f32 %v1362, %v337
      %v1370 = vmul.f32 %v1366, %v336
      %v1371 = vmul.f32 %v1366, %v337
      %v1372 = vadd.f32 %v1356, %v1368
      %v1373 = vadd.f32 %v1357, %v1369
      %v1374 = vadd.f32 %v1358, %v1370
      %v1375 = vadd.f32 %v1359, %v1371
      %1376 = vset.pattern.permute.xlu0 5
      %1377 = vperm.xlu0 %1376, %v1296
      %v1378 = vpop.permute.xlu0 %1377
      %1380 = vset.pattern.permute.xlu0 5
      %1381 = vperm.xlu0 %1380, %v1297
      %v1382 = vpop.permute.xlu0 %1381
      %v1384 = vmul.f32 %v1378, %v354
      %v1385 = vmul.f32 %v1378, %v355
      %v1386 = vmul.f32 %v1382, %v354
      %v1387 = vmul.f32 %v1382, %v355
      %v1388 = vadd.f32 %v1372, %v1384
      %v1389 = vadd.f32 %v1373, %v1385
      %v1390 = vadd.f32 %v1374, %v1386
      %v1391 = vadd.f32 %v1375, %v1387
      %1392 = vset.pattern.permute.xlu0 6
      %1393 = vperm.xlu0 %1392, %v1296
      %v1394 = vpop.permute.xlu0 %1393
      %1396 = vset.pattern.permute.xlu0 6
      %1397 = vperm.xlu0 %1396, %v1297
      %v1398 = vpop.permute.xlu0 %1397
      %v1400 = vmul.f32 %v1394, %v372
      %v1401 = vmul.f32 %v1394, %v373
      %v1402 = vmul.f32 %v1398, %v372
      %v1403 = vmul.f32 %v1398, %v373
      %v1404 = vadd.f32 %v1388, %v1400
      %v1405 = vadd.f32 %v1389, %v1401
      %v1406 = vadd.f32 %v1390, %v1402
      %v1407 = vadd.f32 %v1391, %v1403
      %1408 = vset.pattern.permute.xlu0 7
      %1409 = vperm.xlu0 %1408, %v1296
      %v1410 = vpop.permute.xlu0 %1409
      %1412 = vset.pattern.permute.xlu0 7
      %1413 = vperm.xlu0 %1412, %v1297
      %v1414 = vpop.permute.xlu0 %1413
      %v1416 = vmul.f32 %v1410, %v390
      %v1417 = vmul.f32 %v1410, %v391
      %v1418 = vmul.f32 %v1414, %v390
      %v1419 = vmul.f32 %v1414, %v391
      %v1420 = vadd.f32 %v1404, %v1416
      %v1421 = vadd.f32 %v1405, %v1417
      %v1422 = vadd.f32 %v1406, %v1418
      %v1423 = vadd.f32 %v1407, %v1419
      %v1424 = vmax.f32 %v1420, %v1422
      %v1425 = vrot.slane %v1424, 4
      %v1426 = vmax.f32 %v1424, %v1425
      %v1427 = vrot.slane %v1426, 2
      %v1428 = vmax.f32 %v1426, %v1427
      %v1429 = vrot.slane %v1428, 1
      %v1430 = vmax.f32 %v1428, %v1429
      %v1431 = vmax.f32 %v1421, %v1423
      %v1432 = vrot.slane %v1431, 4
      %v1433 = vmax.f32 %v1431, %v1432
      %v1434 = vrot.slane %v1433, 2
      %v1435 = vmax.f32 %v1433, %v1434
      %v1436 = vrot.slane %v1435, 1
      %v1437 = vmax.f32 %v1435, %v1436
      %vm1438 = vcmp.ge.f32.partialorder %v1420, %v1430
      %vm1439 = vcmp.ge.f32.partialorder %v1421, %v1437
      %vm1440 = vcmp.ge.f32.partialorder %v1422, %v1430
      %vm1441 = vcmp.ge.f32.partialorder %v1423, %v1437
      %v1442 = vsel %vm1438, %v158, 16
      %v1443 = vsel %vm1439, %v158, 16
      %v1444 = vsel %vm1440, %v159, 16
      %v1445 = vsel %vm1441, %v159, 16
      %vm1446 = vcmp.lt.s32.totalorder %v1442, %v1444
      %v1447 = vsel %vm1446, %v1442, %v1444
      %v1448 = vrot.slane %v1447, 4
      %vm1449 = vcmp.lt.s32.totalorder %v1447, %v1448
      %v1450 = vsel %vm1449, %v1447, %v1448
      %v1451 = vrot.slane %v1450, 2
      %vm1452 = vcmp.lt.s32.totalorder %v1450, %v1451
      %v1453 = vsel %vm1452, %v1450, %v1451
      %v1454 = vrot.slane %v1453, 1
      %vm1455 = vcmp.lt.s32.totalorder %v1453, %v1454
      %v1456 = vsel %vm1455, %v1453, %v1454
      %vm1457 = vcmp.lt.s32.totalorder %v1443, %v1445
      %v1458 = vsel %vm1457, %v1443, %v1445
      %v1459 = vrot.slane %v1458, 4
      %vm1460 = vcmp.lt.s32.totalorder %v1458, %v1459
      %v1461 = vsel %vm1460, %v1458, %v1459
      %v1462 = vrot.slane %v1461, 2
      %vm1463 = vcmp.lt.s32.totalorder %v1461, %v1462
      %v1464 = vsel %vm1463, %v1461, %v1462
      %v1465 = vrot.slane %v1464, 1
      %vm1466 = vcmp.lt.s32.totalorder %v1464, %v1465
      %v1467 = vsel %vm1466, %v1464, %v1465
      %vm1468 = vcmp.eq.s32.totalorder %v1456, %v158
      %vm1469 = vcmp.eq.s32.totalorder %v1467, %v158
      %vm1470 = vcmp.eq.s32.totalorder %v1456, %v159
      %vm1471 = vcmp.eq.s32.totalorder %v1467, %v159
      %v1472 = vsel %vm1468, 1, 0
      %v1473 = vsel %vm1469, 1, 0
      %v1474 = vsel %vm1470, 1, 0
      %v1475 = vsel %vm1471, 1, 0
      %v1476 = vcvt.s32.f32 %v1472
      %v1477 = vcvt.s32.f32 %v1473
      %v1478 = vcvt.s32.f32 %v1474
      %v1479 = vcvt.s32.f32 %v1475
      %1480 = vmatpush.xpose.msra.mxu0 0.0
      %1481 = vmatpush.xpose.msra.mxu0 0.0
      %1482 = vmatpush.xpose.msra.mxu0 0.0
      %1483 = vmatpush.xpose.msra.mxu0 0.0
      %1484 = vmatpush.xpose.msra.mxu0 0.0
      %1485 = vmatpush.xpose.msra.mxu0 0.0
      %1486 = vmatpush.xpose.msra.mxu0 0.0
      %1487 = vmatpush.xpose.msra.mxu0 0.0
      %1488 = vmatpush.xpose.msra.mxu0 0.0
      %1489 = vmatpush.xpose.msra.mxu0 0.0
      %1490 = vmatpush.xpose.msra.mxu0 0.0
      %1491 = vmatpush.xpose.msra.mxu0 0.0
      %1492 = vmatpush.xpose.msra.mxu0 0.0
      %1493 = vmatpush.xpose.msra.mxu0 0.0
      %1494 = vmatpush.xpose.msra.mxu0 0.0
      %1495 = vmatpush.xpose.msra.mxu0 %v155
      %1496 = vmatmul.f32.gmra.mxu0 %v1476
      %v1497 = vpop.f32.mrf.mxu0
      %v1498 = vadd.f32 0.0, %v1497
      %1499 = vmatmul.f32.gmra.mxu0 %v1478
      %v1500 = vpop.f32.mrf.mxu0
      %v1501 = vadd.f32 0.0, %v1500
      %1502 = vdwg.mxu0
      %1503 = vmatpush.xpose.msra.mxu0 0.0
      %1504 = vmatpush.xpose.msra.mxu0 0.0
      %1505 = vmatpush.xpose.msra.mxu0 0.0
      %1506 = vmatpush.xpose.msra.mxu0 0.0
      %1507 = vmatpush.xpose.msra.mxu0 0.0
      %1508 = vmatpush.xpose.msra.mxu0 0.0
      %1509 = vmatpush.xpose.msra.mxu0 0.0
      %1510 = vmatpush.xpose.msra.mxu0 0.0
      %1511 = vmatpush.xpose.msra.mxu0 0.0
      %1512 = vmatpush.xpose.msra.mxu0 0.0
      %1513 = vmatpush.xpose.msra.mxu0 0.0
      %1514 = vmatpush.xpose.msra.mxu0 0.0
      %1515 = vmatpush.xpose.msra.mxu0 0.0
      %1516 = vmatpush.xpose.msra.mxu0 0.0
      %1517 = vmatpush.xpose.msra.mxu0 0.0
      %1518 = vmatpush.xpose.msra.mxu0 %v156
      %1519 = vmatmul.f32.gmra.mxu0 %v1477
      %v1520 = vpop.f32.mrf.mxu0
      %v1521 = vadd.f32 %v1498, %v1520
      %1522 = vmatmul.f32.gmra.mxu0 %v1479
      %v1523 = vpop.f32.mrf.mxu0
      %v1524 = vadd.f32 %v1501, %v1523
      %1525 = vdwg.mxu0
      %v1526 = vadd.f32 %v1476, %v1477
      %1527 = vadd.xlane.f32.xlu0 %v1526
      %v1528 = vpop.xlane.xlu0 %1527
      %v1529 = vadd.f32 %v1478, %v1479
      %1530 = vadd.xlane.f32.xlu0 %v1529
      %v1531 = vpop.xlane.xlu0 %1530
      %vm1532 = vcmp.gt.f32.partialorder %v1528, 0.0
      %vm1533 = vcmp.gt.f32.partialorder %v1531, 0.0
      %v1534 = vmax.f32 %v1521, 1e-30
      %v1535 = vmax.f32 %v1524, 1e-30
      %v1536 = vlog2.pop %v1534
      %v1537 = vmul.f32 %v1536, 0.6931472
      %v1538 = vlog2.pop %v1535
      %v1539 = vmul.f32 %v1538, 0.6931472
      %v1540 = vmax.f32 %v1528, 1.0
      %v1541 = vmax.f32 %v1531, 1.0
      %v1542 = vlog2.pop %v1540
      %v1543 = vmul.f32 %v1542, 0.6931472
      %v1544 = vlog2.pop %v1541
      %v1545 = vmul.f32 %v1544, 0.6931472
      %v1546 = vsub.f32 %v1537, %v1543
      %v1547 = vsub.f32 %v1539, %v1545
      %v1548 = vsel %vm1532, 1, 0
      %v1549 = vsel %vm1533, 1, 0
      %vm1550 = vcmp.eq.s32.totalorder %v1548, 1
      %vm1551 = vcmp.eq.s32.totalorder %v1549, 1
      %v1552 = vsel %vm1550, %v1546, -1e+18
      %v1553 = vsel %vm1551, %v1547, -1e+18
      %1555 = vset.pattern.permute.xlu0 0
      %1556 = vperm.xlu0 %1555, %v1552
      %v1557 = vpop.permute.xlu0 %1556
      %1560 = vset.pattern.permute.xlu0 0
      %1561 = vperm.xlu0 %1560, %v1553
      %v1562 = vpop.permute.xlu0 %1561
      %v1564 = vmul.f32 %v1557, %v268
      %v1565 = vmul.f32 %v1557, %v269
      %v1566 = vmul.f32 %v1562, %v268
      %v1567 = vmul.f32 %v1562, %v269
      %1568 = vset.pattern.permute.xlu0 1
      %1569 = vperm.xlu0 %1568, %v1552
      %v1570 = vpop.permute.xlu0 %1569
      %1572 = vset.pattern.permute.xlu0 1
      %1573 = vperm.xlu0 %1572, %v1553
      %v1574 = vpop.permute.xlu0 %1573
      %v1576 = vmul.f32 %v1570, %v282
      %v1577 = vmul.f32 %v1570, %v283
      %v1578 = vmul.f32 %v1574, %v282
      %v1579 = vmul.f32 %v1574, %v283
      %v1580 = vadd.f32 %v1564, %v1576
      %v1581 = vadd.f32 %v1565, %v1577
      %v1582 = vadd.f32 %v1566, %v1578
      %v1583 = vadd.f32 %v1567, %v1579
      %1584 = vset.pattern.permute.xlu0 2
      %1585 = vperm.xlu0 %1584, %v1552
      %v1586 = vpop.permute.xlu0 %1585
      %1588 = vset.pattern.permute.xlu0 2
      %1589 = vperm.xlu0 %1588, %v1553
      %v1590 = vpop.permute.xlu0 %1589
      %v1592 = vmul.f32 %v1586, %v300
      %v1593 = vmul.f32 %v1586, %v301
      %v1594 = vmul.f32 %v1590, %v300
      %v1595 = vmul.f32 %v1590, %v301
      %v1596 = vadd.f32 %v1580, %v1592
      %v1597 = vadd.f32 %v1581, %v1593
      %v1598 = vadd.f32 %v1582, %v1594
      %v1599 = vadd.f32 %v1583, %v1595
      %1600 = vset.pattern.permute.xlu0 3
      %1601 = vperm.xlu0 %1600, %v1552
      %v1602 = vpop.permute.xlu0 %1601
      %1604 = vset.pattern.permute.xlu0 3
      %1605 = vperm.xlu0 %1604, %v1553
      %v1606 = vpop.permute.xlu0 %1605
      %v1608 = vmul.f32 %v1602, %v318
      %v1609 = vmul.f32 %v1602, %v319
      %v1610 = vmul.f32 %v1606, %v318
      %v1611 = vmul.f32 %v1606, %v319
      %v1612 = vadd.f32 %v1596, %v1608
      %v1613 = vadd.f32 %v1597, %v1609
      %v1614 = vadd.f32 %v1598, %v1610
      %v1615 = vadd.f32 %v1599, %v1611
      %1616 = vset.pattern.permute.xlu0 4
      %1617 = vperm.xlu0 %1616, %v1552
      %v1618 = vpop.permute.xlu0 %1617
      %1620 = vset.pattern.permute.xlu0 4
      %1621 = vperm.xlu0 %1620, %v1553
      %v1622 = vpop.permute.xlu0 %1621
      %v1624 = vmul.f32 %v1618, %v336
      %v1625 = vmul.f32 %v1618, %v337
      %v1626 = vmul.f32 %v1622, %v336
      %v1627 = vmul.f32 %v1622, %v337
      %v1628 = vadd.f32 %v1612, %v1624
      %v1629 = vadd.f32 %v1613, %v1625
      %v1630 = vadd.f32 %v1614, %v1626
      %v1631 = vadd.f32 %v1615, %v1627
      %1632 = vset.pattern.permute.xlu0 5
      %1633 = vperm.xlu0 %1632, %v1552
      %v1634 = vpop.permute.xlu0 %1633
      %1636 = vset.pattern.permute.xlu0 5
      %1637 = vperm.xlu0 %1636, %v1553
      %v1638 = vpop.permute.xlu0 %1637
      %v1640 = vmul.f32 %v1634, %v354
      %v1641 = vmul.f32 %v1634, %v355
      %v1642 = vmul.f32 %v1638, %v354
      %v1643 = vmul.f32 %v1638, %v355
      %v1644 = vadd.f32 %v1628, %v1640
      %v1645 = vadd.f32 %v1629, %v1641
      %v1646 = vadd.f32 %v1630, %v1642
      %v1647 = vadd.f32 %v1631, %v1643
      %1648 = vset.pattern.permute.xlu0 6
      %1649 = vperm.xlu0 %1648, %v1552
      %v1650 = vpop.permute.xlu0 %1649
      %1652 = vset.pattern.permute.xlu0 6
      %1653 = vperm.xlu0 %1652, %v1553
      %v1654 = vpop.permute.xlu0 %1653
      %v1656 = vmul.f32 %v1650, %v372
      %v1657 = vmul.f32 %v1650, %v373
      %v1658 = vmul.f32 %v1654, %v372
      %v1659 = vmul.f32 %v1654, %v373
      %v1660 = vadd.f32 %v1644, %v1656
      %v1661 = vadd.f32 %v1645, %v1657
      %v1662 = vadd.f32 %v1646, %v1658
      %v1663 = vadd.f32 %v1647, %v1659
      %1664 = vset.pattern.permute.xlu0 7
      %1665 = vperm.xlu0 %1664, %v1552
      %v1666 = vpop.permute.xlu0 %1665
      %1668 = vset.pattern.permute.xlu0 7
      %1669 = vperm.xlu0 %1668, %v1553
      %v1670 = vpop.permute.xlu0 %1669
      %v1672 = vmul.f32 %v1666, %v390
      %v1673 = vmul.f32 %v1666, %v391
      %v1674 = vmul.f32 %v1670, %v390
      %v1675 = vmul.f32 %v1670, %v391
      %v1676 = vadd.f32 %v1660, %v1672
      %v1677 = vadd.f32 %v1661, %v1673
      %v1678 = vadd.f32 %v1662, %v1674
      %v1679 = vadd.f32 %v1663, %v1675
      %v1680 = vmax.f32 %v1676, %v1678
      %v1681 = vrot.slane %v1680, 4
      %v1682 = vmax.f32 %v1680, %v1681
      %v1683 = vrot.slane %v1682, 2
      %v1684 = vmax.f32 %v1682, %v1683
      %v1685 = vrot.slane %v1684, 1
      %v1686 = vmax.f32 %v1684, %v1685
      %v1687 = vmax.f32 %v1677, %v1679
      %v1688 = vrot.slane %v1687, 4
      %v1689 = vmax.f32 %v1687, %v1688
      %v1690 = vrot.slane %v1689, 2
      %v1691 = vmax.f32 %v1689, %v1690
      %v1692 = vrot.slane %v1691, 1
      %v1693 = vmax.f32 %v1691, %v1692
      %vm1694 = vcmp.ge.f32.partialorder %v1676, %v1686
      %vm1695 = vcmp.ge.f32.partialorder %v1677, %v1693
      %vm1696 = vcmp.ge.f32.partialorder %v1678, %v1686
      %vm1697 = vcmp.ge.f32.partialorder %v1679, %v1693
      %v1698 = vsel %vm1694, %v158, 16
      %v1699 = vsel %vm1695, %v158, 16
      %v1700 = vsel %vm1696, %v159, 16
      %v1701 = vsel %vm1697, %v159, 16
      %vm1702 = vcmp.lt.s32.totalorder %v1698, %v1700
      %v1703 = vsel %vm1702, %v1698, %v1700
      %v1704 = vrot.slane %v1703, 4
      %vm1705 = vcmp.lt.s32.totalorder %v1703, %v1704
      %v1706 = vsel %vm1705, %v1703, %v1704
      %v1707 = vrot.slane %v1706, 2
      %vm1708 = vcmp.lt.s32.totalorder %v1706, %v1707
      %v1709 = vsel %vm1708, %v1706, %v1707
      %v1710 = vrot.slane %v1709, 1
      %vm1711 = vcmp.lt.s32.totalorder %v1709, %v1710
      %v1712 = vsel %vm1711, %v1709, %v1710
      %vm1713 = vcmp.lt.s32.totalorder %v1699, %v1701
      %v1714 = vsel %vm1713, %v1699, %v1701
      %v1715 = vrot.slane %v1714, 4
      %vm1716 = vcmp.lt.s32.totalorder %v1714, %v1715
      %v1717 = vsel %vm1716, %v1714, %v1715
      %v1718 = vrot.slane %v1717, 2
      %vm1719 = vcmp.lt.s32.totalorder %v1717, %v1718
      %v1720 = vsel %vm1719, %v1717, %v1718
      %v1721 = vrot.slane %v1720, 1
      %vm1722 = vcmp.lt.s32.totalorder %v1720, %v1721
      %v1723 = vsel %vm1722, %v1720, %v1721
      %vm1724 = vcmp.eq.s32.totalorder %v1712, %v158
      %vm1725 = vcmp.eq.s32.totalorder %v1723, %v158
      %vm1726 = vcmp.eq.s32.totalorder %v1712, %v159
      %vm1727 = vcmp.eq.s32.totalorder %v1723, %v159
      %v1728 = vsel %vm1724, 1, 0
      %v1729 = vsel %vm1725, 1, 0
      %v1730 = vsel %vm1726, 1, 0
      %v1731 = vsel %vm1727, 1, 0
      %v1732 = vcvt.s32.f32 %v1728
      %v1733 = vcvt.s32.f32 %v1729
      %v1734 = vcvt.s32.f32 %v1730
      %v1735 = vcvt.s32.f32 %v1731
      %1736 = vmatpush.xpose.msra.mxu0 0.0
      %1737 = vmatpush.xpose.msra.mxu0 0.0
      %1738 = vmatpush.xpose.msra.mxu0 0.0
      %1739 = vmatpush.xpose.msra.mxu0 0.0
      %1740 = vmatpush.xpose.msra.mxu0 0.0
      %1741 = vmatpush.xpose.msra.mxu0 0.0
      %1742 = vmatpush.xpose.msra.mxu0 0.0
      %1743 = vmatpush.xpose.msra.mxu0 0.0
      %1744 = vmatpush.xpose.msra.mxu0 0.0
      %1745 = vmatpush.xpose.msra.mxu0 0.0
      %1746 = vmatpush.xpose.msra.mxu0 0.0
      %1747 = vmatpush.xpose.msra.mxu0 0.0
      %1748 = vmatpush.xpose.msra.mxu0 0.0
      %1749 = vmatpush.xpose.msra.mxu0 0.0
      %1750 = vmatpush.xpose.msra.mxu0 0.0
      %1751 = vmatpush.xpose.msra.mxu0 %v155
      %1752 = vmatmul.f32.gmra.mxu0 %v1732
      %v1753 = vpop.f32.mrf.mxu0
      %v1754 = vadd.f32 0.0, %v1753
      %1755 = vmatmul.f32.gmra.mxu0 %v1734
      %v1756 = vpop.f32.mrf.mxu0
      %v1757 = vadd.f32 0.0, %v1756
      %1758 = vdwg.mxu0
      %1759 = vmatpush.xpose.msra.mxu0 0.0
      %1760 = vmatpush.xpose.msra.mxu0 0.0
      %1761 = vmatpush.xpose.msra.mxu0 0.0
      %1762 = vmatpush.xpose.msra.mxu0 0.0
      %1763 = vmatpush.xpose.msra.mxu0 0.0
      %1764 = vmatpush.xpose.msra.mxu0 0.0
      %1765 = vmatpush.xpose.msra.mxu0 0.0
      %1766 = vmatpush.xpose.msra.mxu0 0.0
      %1767 = vmatpush.xpose.msra.mxu0 0.0
      %1768 = vmatpush.xpose.msra.mxu0 0.0
      %1769 = vmatpush.xpose.msra.mxu0 0.0
      %1770 = vmatpush.xpose.msra.mxu0 0.0
      %1771 = vmatpush.xpose.msra.mxu0 0.0
      %1772 = vmatpush.xpose.msra.mxu0 0.0
      %1773 = vmatpush.xpose.msra.mxu0 0.0
      %1774 = vmatpush.xpose.msra.mxu0 %v156
      %1775 = vmatmul.f32.gmra.mxu0 %v1733
      %v1776 = vpop.f32.mrf.mxu0
      %v1777 = vadd.f32 %v1754, %v1776
      %1778 = vmatmul.f32.gmra.mxu0 %v1735
      %v1779 = vpop.f32.mrf.mxu0
      %v1780 = vadd.f32 %v1757, %v1779
      %1781 = vdwg.mxu0
      %v1782 = vadd.f32 %v1732, %v1733
      %1783 = vadd.xlane.f32.xlu0 %v1782
      %v1784 = vpop.xlane.xlu0 %1783
      %v1785 = vadd.f32 %v1734, %v1735
      %1786 = vadd.xlane.f32.xlu0 %v1785
      %v1787 = vpop.xlane.xlu0 %1786
      %vm1788 = vcmp.gt.f32.partialorder %v1784, 0.0
      %vm1789 = vcmp.gt.f32.partialorder %v1787, 0.0
      %v1790 = vmax.f32 %v1777, 1e-30
      %v1791 = vmax.f32 %v1780, 1e-30
      %v1792 = vlog2.pop %v1790
      %v1793 = vmul.f32 %v1792, 0.6931472
      %v1794 = vlog2.pop %v1791
      %v1795 = vmul.f32 %v1794, 0.6931472
      %v1796 = vmax.f32 %v1784, 1.0
      %v1797 = vmax.f32 %v1787, 1.0
      %v1798 = vlog2.pop %v1796
      %v1799 = vmul.f32 %v1798, 0.6931472
      %v1800 = vlog2.pop %v1797
      %v1801 = vmul.f32 %v1800, 0.6931472
      %v1802 = vsub.f32 %v1793, %v1799
      %v1803 = vsub.f32 %v1795, %v1801
      %v1804 = vsel %vm1788, 1, 0
      %v1805 = vsel %vm1789, 1, 0
      %vm1806 = vcmp.eq.s32.totalorder %v1804, 1
      %vm1807 = vcmp.eq.s32.totalorder %v1805, 1
      %v1808 = vsel %vm1806, %v1802, -1e+18
      %v1809 = vsel %vm1807, %v1803, -1e+18
      %1811 = vset.pattern.permute.xlu0 0
      %1812 = vperm.xlu0 %1811, %v1808
      %v1813 = vpop.permute.xlu0 %1812
      %1816 = vset.pattern.permute.xlu0 0
      %1817 = vperm.xlu0 %1816, %v1809
      %v1818 = vpop.permute.xlu0 %1817
      %v1820 = vmul.f32 %v1813, %v268
      %v1821 = vmul.f32 %v1813, %v269
      %v1822 = vmul.f32 %v1818, %v268
      %v1823 = vmul.f32 %v1818, %v269
      %1824 = vset.pattern.permute.xlu0 1
      %1825 = vperm.xlu0 %1824, %v1808
      %v1826 = vpop.permute.xlu0 %1825
      %1828 = vset.pattern.permute.xlu0 1
      %1829 = vperm.xlu0 %1828, %v1809
      %v1830 = vpop.permute.xlu0 %1829
      %v1832 = vmul.f32 %v1826, %v282
      %v1833 = vmul.f32 %v1826, %v283
      %v1834 = vmul.f32 %v1830, %v282
      %v1835 = vmul.f32 %v1830, %v283
      %v1836 = vadd.f32 %v1820, %v1832
      %v1837 = vadd.f32 %v1821, %v1833
      %v1838 = vadd.f32 %v1822, %v1834
      %v1839 = vadd.f32 %v1823, %v1835
      %1840 = vset.pattern.permute.xlu0 2
      %1841 = vperm.xlu0 %1840, %v1808
      %v1842 = vpop.permute.xlu0 %1841
      %1844 = vset.pattern.permute.xlu0 2
      %1845 = vperm.xlu0 %1844, %v1809
      %v1846 = vpop.permute.xlu0 %1845
      %v1848 = vmul.f32 %v1842, %v300
      %v1849 = vmul.f32 %v1842, %v301
      %v1850 = vmul.f32 %v1846, %v300
      %v1851 = vmul.f32 %v1846, %v301
      %v1852 = vadd.f32 %v1836, %v1848
      %v1853 = vadd.f32 %v1837, %v1849
      %v1854 = vadd.f32 %v1838, %v1850
      %v1855 = vadd.f32 %v1839, %v1851
      %1856 = vset.pattern.permute.xlu0 3
      %1857 = vperm.xlu0 %1856, %v1808
      %v1858 = vpop.permute.xlu0 %1857
      %1860 = vset.pattern.permute.xlu0 3
      %1861 = vperm.xlu0 %1860, %v1809
      %v1862 = vpop.permute.xlu0 %1861
      %v1864 = vmul.f32 %v1858, %v318
      %v1865 = vmul.f32 %v1858, %v319
      %v1866 = vmul.f32 %v1862, %v318
      %v1867 = vmul.f32 %v1862, %v319
      %v1868 = vadd.f32 %v1852, %v1864
      %v1869 = vadd.f32 %v1853, %v1865
      %v1870 = vadd.f32 %v1854, %v1866
      %v1871 = vadd.f32 %v1855, %v1867
      %1872 = vset.pattern.permute.xlu0 4
      %1873 = vperm.xlu0 %1872, %v1808
      %v1874 = vpop.permute.xlu0 %1873
      %1876 = vset.pattern.permute.xlu0 4
      %1877 = vperm.xlu0 %1876, %v1809
      %v1878 = vpop.permute.xlu0 %1877
      %v1880 = vmul.f32 %v1874, %v336
      %v1881 = vmul.f32 %v1874, %v337
      %v1882 = vmul.f32 %v1878, %v336
      %v1883 = vmul.f32 %v1878, %v337
      %v1884 = vadd.f32 %v1868, %v1880
      %v1885 = vadd.f32 %v1869, %v1881
      %v1886 = vadd.f32 %v1870, %v1882
      %v1887 = vadd.f32 %v1871, %v1883
      %1888 = vset.pattern.permute.xlu0 5
      %1889 = vperm.xlu0 %1888, %v1808
      %v1890 = vpop.permute.xlu0 %1889
      %1892 = vset.pattern.permute.xlu0 5
      %1893 = vperm.xlu0 %1892, %v1809
      %v1894 = vpop.permute.xlu0 %1893
      %v1896 = vmul.f32 %v1890, %v354
      %v1897 = vmul.f32 %v1890, %v355
      %v1898 = vmul.f32 %v1894, %v354
      %v1899 = vmul.f32 %v1894, %v355
      %v1900 = vadd.f32 %v1884, %v1896
      %v1901 = vadd.f32 %v1885, %v1897
      %v1902 = vadd.f32 %v1886, %v1898
      %v1903 = vadd.f32 %v1887, %v1899
      %1904 = vset.pattern.permute.xlu0 6
      %1905 = vperm.xlu0 %1904, %v1808
      %v1906 = vpop.permute.xlu0 %1905
      %1908 = vset.pattern.permute.xlu0 6
      %1909 = vperm.xlu0 %1908, %v1809
      %v1910 = vpop.permute.xlu0 %1909
      %v1912 = vmul.f32 %v1906, %v372
      %v1913 = vmul.f32 %v1906, %v373
      %v1914 = vmul.f32 %v1910, %v372
      %v1915 = vmul.f32 %v1910, %v373
      %v1916 = vadd.f32 %v1900, %v1912
      %v1917 = vadd.f32 %v1901, %v1913
      %v1918 = vadd.f32 %v1902, %v1914
      %v1919 = vadd.f32 %v1903, %v1915
      %1920 = vset.pattern.permute.xlu0 7
      %1921 = vperm.xlu0 %1920, %v1808
      %v1922 = vpop.permute.xlu0 %1921
      %1924 = vset.pattern.permute.xlu0 7
      %1925 = vperm.xlu0 %1924, %v1809
      %v1926 = vpop.permute.xlu0 %1925
      %v1928 = vmul.f32 %v1922, %v390
      %v1929 = vmul.f32 %v1922, %v391
      %v1930 = vmul.f32 %v1926, %v390
      %v1931 = vmul.f32 %v1926, %v391
      %v1932 = vadd.f32 %v1916, %v1928
      %v1933 = vadd.f32 %v1917, %v1929
      %v1934 = vadd.f32 %v1918, %v1930
      %v1935 = vadd.f32 %v1919, %v1931
      %v1936 = vmax.f32 %v1932, %v1934
      %v1937 = vrot.slane %v1936, 4
      %v1938 = vmax.f32 %v1936, %v1937
      %v1939 = vrot.slane %v1938, 2
      %v1940 = vmax.f32 %v1938, %v1939
      %v1941 = vrot.slane %v1940, 1
      %v1942 = vmax.f32 %v1940, %v1941
      %v1943 = vmax.f32 %v1933, %v1935
      %v1944 = vrot.slane %v1943, 4
      %v1945 = vmax.f32 %v1943, %v1944
      %v1946 = vrot.slane %v1945, 2
      %v1947 = vmax.f32 %v1945, %v1946
      %v1948 = vrot.slane %v1947, 1
      %v1949 = vmax.f32 %v1947, %v1948
      %vm1950 = vcmp.ge.f32.partialorder %v1932, %v1942
      %vm1951 = vcmp.ge.f32.partialorder %v1933, %v1949
      %vm1952 = vcmp.ge.f32.partialorder %v1934, %v1942
      %vm1953 = vcmp.ge.f32.partialorder %v1935, %v1949
      %v1954 = vsel %vm1950, %v158, 16
      %v1955 = vsel %vm1951, %v158, 16
      %v1956 = vsel %vm1952, %v159, 16
      %v1957 = vsel %vm1953, %v159, 16
      %vm1958 = vcmp.lt.s32.totalorder %v1954, %v1956
      %v1959 = vsel %vm1958, %v1954, %v1956
      %v1960 = vrot.slane %v1959, 4
      %vm1961 = vcmp.lt.s32.totalorder %v1959, %v1960
      %v1962 = vsel %vm1961, %v1959, %v1960
      %v1963 = vrot.slane %v1962, 2
      %vm1964 = vcmp.lt.s32.totalorder %v1962, %v1963
      %v1965 = vsel %vm1964, %v1962, %v1963
      %v1966 = vrot.slane %v1965, 1
      %vm1967 = vcmp.lt.s32.totalorder %v1965, %v1966
      %v1968 = vsel %vm1967, %v1965, %v1966
      %vm1969 = vcmp.lt.s32.totalorder %v1955, %v1957
      %v1970 = vsel %vm1969, %v1955, %v1957
      %v1971 = vrot.slane %v1970, 4
      %vm1972 = vcmp.lt.s32.totalorder %v1970, %v1971
      %v1973 = vsel %vm1972, %v1970, %v1971
      %v1974 = vrot.slane %v1973, 2
      %vm1975 = vcmp.lt.s32.totalorder %v1973, %v1974
      %v1976 = vsel %vm1975, %v1973, %v1974
      %v1977 = vrot.slane %v1976, 1
      %vm1978 = vcmp.lt.s32.totalorder %v1976, %v1977
      %v1979 = vsel %vm1978, %v1976, %v1977
      %vm1980 = vcmp.eq.s32.totalorder %v1968, %v158
      %vm1981 = vcmp.eq.s32.totalorder %v1979, %v158
      %vm1982 = vcmp.eq.s32.totalorder %v1968, %v159
      %vm1983 = vcmp.eq.s32.totalorder %v1979, %v159
      %v1984 = vsel %vm1980, 1, 0
      %v1985 = vsel %vm1981, 1, 0
      %v1986 = vsel %vm1982, 1, 0
      %v1987 = vsel %vm1983, 1, 0
      %v1988 = vcvt.s32.f32 %v1984
      %v1989 = vcvt.s32.f32 %v1985
      %v1990 = vcvt.s32.f32 %v1986
      %v1991 = vcvt.s32.f32 %v1987
      %1992 = vmatpush.xpose.msra.mxu0 0.0
      %1993 = vmatpush.xpose.msra.mxu0 0.0
      %1994 = vmatpush.xpose.msra.mxu0 0.0
      %1995 = vmatpush.xpose.msra.mxu0 0.0
      %1996 = vmatpush.xpose.msra.mxu0 0.0
      %1997 = vmatpush.xpose.msra.mxu0 0.0
      %1998 = vmatpush.xpose.msra.mxu0 0.0
      %1999 = vmatpush.xpose.msra.mxu0 0.0
      %2000 = vmatpush.xpose.msra.mxu0 0.0
      %2001 = vmatpush.xpose.msra.mxu0 0.0
      %2002 = vmatpush.xpose.msra.mxu0 0.0
      %2003 = vmatpush.xpose.msra.mxu0 0.0
      %2004 = vmatpush.xpose.msra.mxu0 0.0
      %2005 = vmatpush.xpose.msra.mxu0 0.0
      %2006 = vmatpush.xpose.msra.mxu0 0.0
      %2007 = vmatpush.xpose.msra.mxu0 %v155
      %2008 = vmatmul.f32.gmra.mxu0 %v1988
      %v2009 = vpop.f32.mrf.mxu0
      %v2010 = vadd.f32 0.0, %v2009
      %2011 = vmatmul.f32.gmra.mxu0 %v1990
      %v2012 = vpop.f32.mrf.mxu0
      %v2013 = vadd.f32 0.0, %v2012
      %2014 = vdwg.mxu0
      %2015 = vmatpush.xpose.msra.mxu0 0.0
      %2016 = vmatpush.xpose.msra.mxu0 0.0
      %2017 = vmatpush.xpose.msra.mxu0 0.0
      %2018 = vmatpush.xpose.msra.mxu0 0.0
      %2019 = vmatpush.xpose.msra.mxu0 0.0
      %2020 = vmatpush.xpose.msra.mxu0 0.0
      %2021 = vmatpush.xpose.msra.mxu0 0.0
      %2022 = vmatpush.xpose.msra.mxu0 0.0
      %2023 = vmatpush.xpose.msra.mxu0 0.0
      %2024 = vmatpush.xpose.msra.mxu0 0.0
      %2025 = vmatpush.xpose.msra.mxu0 0.0
      %2026 = vmatpush.xpose.msra.mxu0 0.0
      %2027 = vmatpush.xpose.msra.mxu0 0.0
      %2028 = vmatpush.xpose.msra.mxu0 0.0
      %2029 = vmatpush.xpose.msra.mxu0 0.0
      %2030 = vmatpush.xpose.msra.mxu0 %v156
      %2031 = vmatmul.f32.gmra.mxu0 %v1989
      %v2032 = vpop.f32.mrf.mxu0
      %v2033 = vadd.f32 %v2010, %v2032
      %2034 = vmatmul.f32.gmra.mxu0 %v1991
      %v2035 = vpop.f32.mrf.mxu0
      %v2036 = vadd.f32 %v2013, %v2035
      %2037 = vdwg.mxu0
      %v2038 = vadd.f32 %v1988, %v1989
      %2039 = vadd.xlane.f32.xlu0 %v2038
      %v2040 = vpop.xlane.xlu0 %2039
      %v2041 = vadd.f32 %v1990, %v1991
      %2042 = vadd.xlane.f32.xlu0 %v2041
      %v2043 = vpop.xlane.xlu0 %2042
      %vm2044 = vcmp.gt.f32.partialorder %v2040, 0.0
      %vm2045 = vcmp.gt.f32.partialorder %v2043, 0.0
      %v2046 = vmax.f32 %v2033, 1e-30
      %v2047 = vmax.f32 %v2036, 1e-30
      %v2048 = vlog2.pop %v2046
      %v2049 = vmul.f32 %v2048, 0.6931472
      %v2050 = vlog2.pop %v2047
      %v2051 = vmul.f32 %v2050, 0.6931472
      %v2052 = vmax.f32 %v2040, 1.0
      %v2053 = vmax.f32 %v2043, 1.0
      %v2054 = vlog2.pop %v2052
      %v2055 = vmul.f32 %v2054, 0.6931472
      %v2056 = vlog2.pop %v2053
      %v2057 = vmul.f32 %v2056, 0.6931472
      %v2058 = vsub.f32 %v2049, %v2055
      %v2059 = vsub.f32 %v2051, %v2057
      %v2060 = vsel %vm2044, 1, 0
      %v2061 = vsel %vm2045, 1, 0
      %vm2062 = vcmp.eq.s32.totalorder %v2060, 1
      %vm2063 = vcmp.eq.s32.totalorder %v2061, 1
      %v2064 = vsel %vm2062, %v2058, -1e+18
      %v2065 = vsel %vm2063, %v2059, -1e+18
      %2067 = vset.pattern.permute.xlu0 0
      %2068 = vperm.xlu0 %2067, %v2064
      %v2069 = vpop.permute.xlu0 %2068
      %2072 = vset.pattern.permute.xlu0 0
      %2073 = vperm.xlu0 %2072, %v2065
      %v2074 = vpop.permute.xlu0 %2073
      %v2076 = vmul.f32 %v2069, %v268
      %v2077 = vmul.f32 %v2069, %v269
      %v2078 = vmul.f32 %v2074, %v268
      %v2079 = vmul.f32 %v2074, %v269
      %2080 = vset.pattern.permute.xlu0 1
      %2081 = vperm.xlu0 %2080, %v2064
      %v2082 = vpop.permute.xlu0 %2081
      %2084 = vset.pattern.permute.xlu0 1
      %2085 = vperm.xlu0 %2084, %v2065
      %v2086 = vpop.permute.xlu0 %2085
      %v2088 = vmul.f32 %v2082, %v282
      %v2089 = vmul.f32 %v2082, %v283
      %v2090 = vmul.f32 %v2086, %v282
      %v2091 = vmul.f32 %v2086, %v283
      %v2092 = vadd.f32 %v2076, %v2088
      %v2093 = vadd.f32 %v2077, %v2089
      %v2094 = vadd.f32 %v2078, %v2090
      %v2095 = vadd.f32 %v2079, %v2091
      %2096 = vset.pattern.permute.xlu0 2
      %2097 = vperm.xlu0 %2096, %v2064
      %v2098 = vpop.permute.xlu0 %2097
      %2100 = vset.pattern.permute.xlu0 2
      %2101 = vperm.xlu0 %2100, %v2065
      %v2102 = vpop.permute.xlu0 %2101
      %v2104 = vmul.f32 %v2098, %v300
      %v2105 = vmul.f32 %v2098, %v301
      %v2106 = vmul.f32 %v2102, %v300
      %v2107 = vmul.f32 %v2102, %v301
      %v2108 = vadd.f32 %v2092, %v2104
      %v2109 = vadd.f32 %v2093, %v2105
      %v2110 = vadd.f32 %v2094, %v2106
      %v2111 = vadd.f32 %v2095, %v2107
      %2112 = vset.pattern.permute.xlu0 3
      %2113 = vperm.xlu0 %2112, %v2064
      %v2114 = vpop.permute.xlu0 %2113
      %2116 = vset.pattern.permute.xlu0 3
      %2117 = vperm.xlu0 %2116, %v2065
      %v2118 = vpop.permute.xlu0 %2117
      %v2120 = vmul.f32 %v2114, %v318
      %v2121 = vmul.f32 %v2114, %v319
      %v2122 = vmul.f32 %v2118, %v318
      %v2123 = vmul.f32 %v2118, %v319
      %v2124 = vadd.f32 %v2108, %v2120
      %v2125 = vadd.f32 %v2109, %v2121
      %v2126 = vadd.f32 %v2110, %v2122
      %v2127 = vadd.f32 %v2111, %v2123
      %2128 = vset.pattern.permute.xlu0 4
      %2129 = vperm.xlu0 %2128, %v2064
      %v2130 = vpop.permute.xlu0 %2129
      %2132 = vset.pattern.permute.xlu0 4
      %2133 = vperm.xlu0 %2132, %v2065
      %v2134 = vpop.permute.xlu0 %2133
      %v2136 = vmul.f32 %v2130, %v336
      %v2137 = vmul.f32 %v2130, %v337
      %v2138 = vmul.f32 %v2134, %v336
      %v2139 = vmul.f32 %v2134, %v337
      %v2140 = vadd.f32 %v2124, %v2136
      %v2141 = vadd.f32 %v2125, %v2137
      %v2142 = vadd.f32 %v2126, %v2138
      %v2143 = vadd.f32 %v2127, %v2139
      %2144 = vset.pattern.permute.xlu0 5
      %2145 = vperm.xlu0 %2144, %v2064
      %v2146 = vpop.permute.xlu0 %2145
      %2148 = vset.pattern.permute.xlu0 5
      %2149 = vperm.xlu0 %2148, %v2065
      %v2150 = vpop.permute.xlu0 %2149
      %v2152 = vmul.f32 %v2146, %v354
      %v2153 = vmul.f32 %v2146, %v355
      %v2154 = vmul.f32 %v2150, %v354
      %v2155 = vmul.f32 %v2150, %v355
      %v2156 = vadd.f32 %v2140, %v2152
      %v2157 = vadd.f32 %v2141, %v2153
      %v2158 = vadd.f32 %v2142, %v2154
      %v2159 = vadd.f32 %v2143, %v2155
      %2160 = vset.pattern.permute.xlu0 6
      %2161 = vperm.xlu0 %2160, %v2064
      %v2162 = vpop.permute.xlu0 %2161
      %2164 = vset.pattern.permute.xlu0 6
      %2165 = vperm.xlu0 %2164, %v2065
      %v2166 = vpop.permute.xlu0 %2165
      %v2168 = vmul.f32 %v2162, %v372
      %v2169 = vmul.f32 %v2162, %v373
      %v2170 = vmul.f32 %v2166, %v372
      %v2171 = vmul.f32 %v2166, %v373
      %v2172 = vadd.f32 %v2156, %v2168
      %v2173 = vadd.f32 %v2157, %v2169
      %v2174 = vadd.f32 %v2158, %v2170
      %v2175 = vadd.f32 %v2159, %v2171
      %2176 = vset.pattern.permute.xlu0 7
      %2177 = vperm.xlu0 %2176, %v2064
      %v2178 = vpop.permute.xlu0 %2177
      %2180 = vset.pattern.permute.xlu0 7
      %2181 = vperm.xlu0 %2180, %v2065
      %v2182 = vpop.permute.xlu0 %2181
      %v2184 = vmul.f32 %v2178, %v390
      %v2185 = vmul.f32 %v2178, %v391
      %v2186 = vmul.f32 %v2182, %v390
      %v2187 = vmul.f32 %v2182, %v391
      %v2188 = vadd.f32 %v2172, %v2184
      %v2189 = vadd.f32 %v2173, %v2185
      %v2190 = vadd.f32 %v2174, %v2186
      %v2191 = vadd.f32 %v2175, %v2187
      %v2192 = vmax.f32 %v2188, %v2190
      %v2193 = vrot.slane %v2192, 4
      %v2194 = vmax.f32 %v2192, %v2193
      %v2195 = vrot.slane %v2194, 2
      %v2196 = vmax.f32 %v2194, %v2195
      %v2197 = vrot.slane %v2196, 1
      %v2198 = vmax.f32 %v2196, %v2197
      %v2199 = vmax.f32 %v2189, %v2191
      %v2200 = vrot.slane %v2199, 4
      %v2201 = vmax.f32 %v2199, %v2200
      %v2202 = vrot.slane %v2201, 2
      %v2203 = vmax.f32 %v2201, %v2202
      %v2204 = vrot.slane %v2203, 1
      %v2205 = vmax.f32 %v2203, %v2204
      %vm2206 = vcmp.ge.f32.partialorder %v2188, %v2198
      %vm2207 = vcmp.ge.f32.partialorder %v2189, %v2205
      %vm2208 = vcmp.ge.f32.partialorder %v2190, %v2198
      %vm2209 = vcmp.ge.f32.partialorder %v2191, %v2205
      %v2210 = vsel %vm2206, %v158, 16
      %v2211 = vsel %vm2207, %v158, 16
      %v2212 = vsel %vm2208, %v159, 16
      %v2213 = vsel %vm2209, %v159, 16
      %vm2214 = vcmp.lt.s32.totalorder %v2210, %v2212
      %v2215 = vsel %vm2214, %v2210, %v2212
      %v2216 = vrot.slane %v2215, 4
      %vm2217 = vcmp.lt.s32.totalorder %v2215, %v2216
      %v2218 = vsel %vm2217, %v2215, %v2216
      %v2219 = vrot.slane %v2218, 2
      %vm2220 = vcmp.lt.s32.totalorder %v2218, %v2219
      %v2221 = vsel %vm2220, %v2218, %v2219
      %v2222 = vrot.slane %v2221, 1
      %vm2223 = vcmp.lt.s32.totalorder %v2221, %v2222
      %v2224 = vsel %vm2223, %v2221, %v2222
      %vm2225 = vcmp.lt.s32.totalorder %v2211, %v2213
      %v2226 = vsel %vm2225, %v2211, %v2213
      %v2227 = vrot.slane %v2226, 4
      %vm2228 = vcmp.lt.s32.totalorder %v2226, %v2227
      %v2229 = vsel %vm2228, %v2226, %v2227
      %v2230 = vrot.slane %v2229, 2
      %vm2231 = vcmp.lt.s32.totalorder %v2229, %v2230
      %v2232 = vsel %vm2231, %v2229, %v2230
      %v2233 = vrot.slane %v2232, 1
      %vm2234 = vcmp.lt.s32.totalorder %v2232, %v2233
      %v2235 = vsel %vm2234, %v2232, %v2233
      %vm2236 = vcmp.eq.s32.totalorder %v2224, %v158
      %vm2237 = vcmp.eq.s32.totalorder %v2235, %v158
      %vm2238 = vcmp.eq.s32.totalorder %v2224, %v159
      %vm2239 = vcmp.eq.s32.totalorder %v2235, %v159
      %v2240 = vsel %vm2236, 1, 0
      %v2241 = vsel %vm2237, 1, 0
      %v2242 = vsel %vm2238, 1, 0
      %v2243 = vsel %vm2239, 1, 0
      %v2244 = vcvt.s32.f32 %v2240
      %v2245 = vcvt.s32.f32 %v2241
      %v2246 = vcvt.s32.f32 %v2242
      %v2247 = vcvt.s32.f32 %v2243
      %2248 = vmatpush.xpose.msra.mxu0 0.0
      %2249 = vmatpush.xpose.msra.mxu0 0.0
      %2250 = vmatpush.xpose.msra.mxu0 0.0
      %2251 = vmatpush.xpose.msra.mxu0 0.0
      %2252 = vmatpush.xpose.msra.mxu0 0.0
      %2253 = vmatpush.xpose.msra.mxu0 0.0
      %2254 = vmatpush.xpose.msra.mxu0 0.0
      %2255 = vmatpush.xpose.msra.mxu0 0.0
      %2256 = vmatpush.xpose.msra.mxu0 0.0
      %2257 = vmatpush.xpose.msra.mxu0 0.0
      %2258 = vmatpush.xpose.msra.mxu0 0.0
      %2259 = vmatpush.xpose.msra.mxu0 0.0
      %2260 = vmatpush.xpose.msra.mxu0 0.0
      %2261 = vmatpush.xpose.msra.mxu0 0.0
      %2262 = vmatpush.xpose.msra.mxu0 0.0
      %2263 = vmatpush.xpose.msra.mxu0 %v155
      %2264 = vmatmul.f32.gmra.mxu0 %v2244
      %v2265 = vpop.f32.mrf.mxu0
      %v2266 = vadd.f32 0.0, %v2265
      %2267 = vmatmul.f32.gmra.mxu0 %v2246
      %v2268 = vpop.f32.mrf.mxu0
      %v2269 = vadd.f32 0.0, %v2268
      %2270 = vdwg.mxu0
      %2271 = vmatpush.xpose.msra.mxu0 0.0
      %2272 = vmatpush.xpose.msra.mxu0 0.0
      %2273 = vmatpush.xpose.msra.mxu0 0.0
      %2274 = vmatpush.xpose.msra.mxu0 0.0
      %2275 = vmatpush.xpose.msra.mxu0 0.0
      %2276 = vmatpush.xpose.msra.mxu0 0.0
      %2277 = vmatpush.xpose.msra.mxu0 0.0
      %2278 = vmatpush.xpose.msra.mxu0 0.0
      %2279 = vmatpush.xpose.msra.mxu0 0.0
      %2280 = vmatpush.xpose.msra.mxu0 0.0
      %2281 = vmatpush.xpose.msra.mxu0 0.0
      %2282 = vmatpush.xpose.msra.mxu0 0.0
      %2283 = vmatpush.xpose.msra.mxu0 0.0
      %2284 = vmatpush.xpose.msra.mxu0 0.0
      %2285 = vmatpush.xpose.msra.mxu0 0.0
      %2286 = vmatpush.xpose.msra.mxu0 %v156
      %2287 = vmatmul.f32.gmra.mxu0 %v2245
      %v2288 = vpop.f32.mrf.mxu0
      %v2289 = vadd.f32 %v2266, %v2288
      %2290 = vmatmul.f32.gmra.mxu0 %v2247
      %v2291 = vpop.f32.mrf.mxu0
      %v2292 = vadd.f32 %v2269, %v2291
      %2293 = vdwg.mxu0
      %v2294 = vadd.f32 %v2244, %v2245
      %2295 = vadd.xlane.f32.xlu0 %v2294
      %v2296 = vpop.xlane.xlu0 %2295
      %v2297 = vadd.f32 %v2246, %v2247
      %2298 = vadd.xlane.f32.xlu0 %v2297
      %v2299 = vpop.xlane.xlu0 %2298
      %vm2300 = vcmp.gt.f32.partialorder %v2296, 0.0
      %vm2301 = vcmp.gt.f32.partialorder %v2299, 0.0
      %v2302 = vmax.f32 %v2289, 1e-30
      %v2303 = vmax.f32 %v2292, 1e-30
      %v2304 = vlog2.pop %v2302
      %v2305 = vmul.f32 %v2304, 0.6931472
      %v2306 = vlog2.pop %v2303
      %v2307 = vmul.f32 %v2306, 0.6931472
      %v2308 = vmax.f32 %v2296, 1.0
      %v2309 = vmax.f32 %v2299, 1.0
      %v2310 = vlog2.pop %v2308
      %v2311 = vmul.f32 %v2310, 0.6931472
      %v2312 = vlog2.pop %v2309
      %v2313 = vmul.f32 %v2312, 0.6931472
      %v2314 = vsub.f32 %v2305, %v2311
      %v2315 = vsub.f32 %v2307, %v2313
      %v2316 = vsel %vm2300, 1, 0
      %v2317 = vsel %vm2301, 1, 0
      %vm2318 = vcmp.eq.s32.totalorder %v2316, 1
      %vm2319 = vcmp.eq.s32.totalorder %v2317, 1
      %v2320 = vsel %vm2318, %v2314, -1e+18
      %v2321 = vsel %vm2319, %v2315, -1e+18
      %2323 = vset.pattern.permute.xlu0 0
      %2324 = vperm.xlu0 %2323, %v2320
      %v2325 = vpop.permute.xlu0 %2324
      %2328 = vset.pattern.permute.xlu0 0
      %2329 = vperm.xlu0 %2328, %v2321
      %v2330 = vpop.permute.xlu0 %2329
      %v2332 = vmul.f32 %v2325, %v268
      %v2333 = vmul.f32 %v2325, %v269
      %v2334 = vmul.f32 %v2330, %v268
      %v2335 = vmul.f32 %v2330, %v269
      %2336 = vset.pattern.permute.xlu0 1
      %2337 = vperm.xlu0 %2336, %v2320
      %v2338 = vpop.permute.xlu0 %2337
      %2340 = vset.pattern.permute.xlu0 1
      %2341 = vperm.xlu0 %2340, %v2321
      %v2342 = vpop.permute.xlu0 %2341
      %v2344 = vmul.f32 %v2338, %v282
      %v2345 = vmul.f32 %v2338, %v283
      %v2346 = vmul.f32 %v2342, %v282
      %v2347 = vmul.f32 %v2342, %v283
      %v2348 = vadd.f32 %v2332, %v2344
      %v2349 = vadd.f32 %v2333, %v2345
      %v2350 = vadd.f32 %v2334, %v2346
      %v2351 = vadd.f32 %v2335, %v2347
      %2352 = vset.pattern.permute.xlu0 2
      %2353 = vperm.xlu0 %2352, %v2320
      %v2354 = vpop.permute.xlu0 %2353
      %2356 = vset.pattern.permute.xlu0 2
      %2357 = vperm.xlu0 %2356, %v2321
      %v2358 = vpop.permute.xlu0 %2357
      %v2360 = vmul.f32 %v2354, %v300
      %v2361 = vmul.f32 %v2354, %v301
      %v2362 = vmul.f32 %v2358, %v300
      %v2363 = vmul.f32 %v2358, %v301
      %v2364 = vadd.f32 %v2348, %v2360
      %v2365 = vadd.f32 %v2349, %v2361
      %v2366 = vadd.f32 %v2350, %v2362
      %v2367 = vadd.f32 %v2351, %v2363
      %2368 = vset.pattern.permute.xlu0 3
      %2369 = vperm.xlu0 %2368, %v2320
      %v2370 = vpop.permute.xlu0 %2369
      %2372 = vset.pattern.permute.xlu0 3
      %2373 = vperm.xlu0 %2372, %v2321
      %v2374 = vpop.permute.xlu0 %2373
      %v2376 = vmul.f32 %v2370, %v318
      %v2377 = vmul.f32 %v2370, %v319
      %v2378 = vmul.f32 %v2374, %v318
      %v2379 = vmul.f32 %v2374, %v319
      %v2380 = vadd.f32 %v2364, %v2376
      %v2381 = vadd.f32 %v2365, %v2377
      %v2382 = vadd.f32 %v2366, %v2378
      %v2383 = vadd.f32 %v2367, %v2379
      %2384 = vset.pattern.permute.xlu0 4
      %2385 = vperm.xlu0 %2384, %v2320
      %v2386 = vpop.permute.xlu0 %2385
      %2388 = vset.pattern.permute.xlu0 4
      %2389 = vperm.xlu0 %2388, %v2321
      %v2390 = vpop.permute.xlu0 %2389
      %v2392 = vmul.f32 %v2386, %v336
      %v2393 = vmul.f32 %v2386, %v337
      %v2394 = vmul.f32 %v2390, %v336
      %v2395 = vmul.f32 %v2390, %v337
      %v2396 = vadd.f32 %v2380, %v2392
      %v2397 = vadd.f32 %v2381, %v2393
      %v2398 = vadd.f32 %v2382, %v2394
      %v2399 = vadd.f32 %v2383, %v2395
      %2400 = vset.pattern.permute.xlu0 5
      %2401 = vperm.xlu0 %2400, %v2320
      %v2402 = vpop.permute.xlu0 %2401
      %2404 = vset.pattern.permute.xlu0 5
      %2405 = vperm.xlu0 %2404, %v2321
      %v2406 = vpop.permute.xlu0 %2405
      %v2408 = vmul.f32 %v2402, %v354
      %v2409 = vmul.f32 %v2402, %v355
      %v2410 = vmul.f32 %v2406, %v354
      %v2411 = vmul.f32 %v2406, %v355
      %v2412 = vadd.f32 %v2396, %v2408
      %v2413 = vadd.f32 %v2397, %v2409
      %v2414 = vadd.f32 %v2398, %v2410
      %v2415 = vadd.f32 %v2399, %v2411
      %2416 = vset.pattern.permute.xlu0 6
      %2417 = vperm.xlu0 %2416, %v2320
      %v2418 = vpop.permute.xlu0 %2417
      %2420 = vset.pattern.permute.xlu0 6
      %2421 = vperm.xlu0 %2420, %v2321
      %v2422 = vpop.permute.xlu0 %2421
      %v2424 = vmul.f32 %v2418, %v372
      %v2425 = vmul.f32 %v2418, %v373
      %v2426 = vmul.f32 %v2422, %v372
      %v2427 = vmul.f32 %v2422, %v373
      %v2428 = vadd.f32 %v2412, %v2424
      %v2429 = vadd.f32 %v2413, %v2425
      %v2430 = vadd.f32 %v2414, %v2426
      %v2431 = vadd.f32 %v2415, %v2427
      %2432 = vset.pattern.permute.xlu0 7
      %2433 = vperm.xlu0 %2432, %v2320
      %v2434 = vpop.permute.xlu0 %2433
      %2436 = vset.pattern.permute.xlu0 7
      %2437 = vperm.xlu0 %2436, %v2321
      %v2438 = vpop.permute.xlu0 %2437
      %v2440 = vmul.f32 %v2434, %v390
      %v2441 = vmul.f32 %v2434, %v391
      %v2442 = vmul.f32 %v2438, %v390
      %v2443 = vmul.f32 %v2438, %v391
      %v2444 = vadd.f32 %v2428, %v2440
      %v2445 = vadd.f32 %v2429, %v2441
      %v2446 = vadd.f32 %v2430, %v2442
      %v2447 = vadd.f32 %v2431, %v2443
      %v2448 = vmax.f32 %v2444, %v2446
      %v2449 = vrot.slane %v2448, 4
      %v2450 = vmax.f32 %v2448, %v2449
      %v2451 = vrot.slane %v2450, 2
      %v2452 = vmax.f32 %v2450, %v2451
      %v2453 = vrot.slane %v2452, 1
      %v2454 = vmax.f32 %v2452, %v2453
      %v2455 = vmax.f32 %v2445, %v2447
      %v2456 = vrot.slane %v2455, 4
      %v2457 = vmax.f32 %v2455, %v2456
      %v2458 = vrot.slane %v2457, 2
      %v2459 = vmax.f32 %v2457, %v2458
      %v2460 = vrot.slane %v2459, 1
      %v2461 = vmax.f32 %v2459, %v2460
      %vm2462 = vcmp.ge.f32.partialorder %v2444, %v2454
      %vm2463 = vcmp.ge.f32.partialorder %v2445, %v2461
      %vm2464 = vcmp.ge.f32.partialorder %v2446, %v2454
      %vm2465 = vcmp.ge.f32.partialorder %v2447, %v2461
      %v2466 = vsel %vm2462, %v158, 16
      %v2467 = vsel %vm2463, %v158, 16
      %v2468 = vsel %vm2464, %v159, 16
      %v2469 = vsel %vm2465, %v159, 16
      %vm2470 = vcmp.lt.s32.totalorder %v2466, %v2468
      %v2471 = vsel %vm2470, %v2466, %v2468
      %v2472 = vrot.slane %v2471, 4
      %vm2473 = vcmp.lt.s32.totalorder %v2471, %v2472
      %v2474 = vsel %vm2473, %v2471, %v2472
      %v2475 = vrot.slane %v2474, 2
      %vm2476 = vcmp.lt.s32.totalorder %v2474, %v2475
      %v2477 = vsel %vm2476, %v2474, %v2475
      %v2478 = vrot.slane %v2477, 1
      %vm2479 = vcmp.lt.s32.totalorder %v2477, %v2478
      %v2480 = vsel %vm2479, %v2477, %v2478
      %vm2481 = vcmp.lt.s32.totalorder %v2467, %v2469
      %v2482 = vsel %vm2481, %v2467, %v2469
      %v2483 = vrot.slane %v2482, 4
      %vm2484 = vcmp.lt.s32.totalorder %v2482, %v2483
      %v2485 = vsel %vm2484, %v2482, %v2483
      %v2486 = vrot.slane %v2485, 2
      %vm2487 = vcmp.lt.s32.totalorder %v2485, %v2486
      %v2488 = vsel %vm2487, %v2485, %v2486
      %v2489 = vrot.slane %v2488, 1
      %vm2490 = vcmp.lt.s32.totalorder %v2488, %v2489
      %v2491 = vsel %vm2490, %v2488, %v2489
      %vm2492 = vcmp.eq.s32.totalorder %v2480, %v158
      %vm2493 = vcmp.eq.s32.totalorder %v2491, %v158
      %vm2494 = vcmp.eq.s32.totalorder %v2480, %v159
      %vm2495 = vcmp.eq.s32.totalorder %v2491, %v159
      %v2496 = vsel %vm2492, 1, 0
      %v2497 = vsel %vm2493, 1, 0
      %v2498 = vsel %vm2494, 1, 0
      %v2499 = vsel %vm2495, 1, 0
      %v2500 = vcvt.s32.f32 %v2496
      %v2501 = vcvt.s32.f32 %v2497
      %v2502 = vcvt.s32.f32 %v2498
      %v2503 = vcvt.s32.f32 %v2499
      %2504 = vmatpush.xpose.msra.mxu0 0.0
      %2505 = vmatpush.xpose.msra.mxu0 0.0
      %2506 = vmatpush.xpose.msra.mxu0 0.0
      %2507 = vmatpush.xpose.msra.mxu0 0.0
      %2508 = vmatpush.xpose.msra.mxu0 0.0
      %2509 = vmatpush.xpose.msra.mxu0 0.0
      %2510 = vmatpush.xpose.msra.mxu0 0.0
      %2511 = vmatpush.xpose.msra.mxu0 0.0
      %2512 = vmatpush.xpose.msra.mxu0 0.0
      %2513 = vmatpush.xpose.msra.mxu0 0.0
      %2514 = vmatpush.xpose.msra.mxu0 0.0
      %2515 = vmatpush.xpose.msra.mxu0 0.0
      %2516 = vmatpush.xpose.msra.mxu0 0.0
      %2517 = vmatpush.xpose.msra.mxu0 0.0
      %2518 = vmatpush.xpose.msra.mxu0 0.0
      %2519 = vmatpush.xpose.msra.mxu0 %v155
      %2520 = vmatmul.f32.gmra.mxu0 %v2500
      %v2521 = vpop.f32.mrf.mxu0
      %v2522 = vadd.f32 0.0, %v2521
      %2523 = vmatmul.f32.gmra.mxu0 %v2502
      %v2524 = vpop.f32.mrf.mxu0
      %v2525 = vadd.f32 0.0, %v2524
      %2526 = vdwg.mxu0
      %2527 = vmatpush.xpose.msra.mxu0 0.0
      %2528 = vmatpush.xpose.msra.mxu0 0.0
      %2529 = vmatpush.xpose.msra.mxu0 0.0
      %2530 = vmatpush.xpose.msra.mxu0 0.0
      %2531 = vmatpush.xpose.msra.mxu0 0.0
      %2532 = vmatpush.xpose.msra.mxu0 0.0
      %2533 = vmatpush.xpose.msra.mxu0 0.0
      %2534 = vmatpush.xpose.msra.mxu0 0.0
      %2535 = vmatpush.xpose.msra.mxu0 0.0
      %2536 = vmatpush.xpose.msra.mxu0 0.0
      %2537 = vmatpush.xpose.msra.mxu0 0.0
      %2538 = vmatpush.xpose.msra.mxu0 0.0
      %2539 = vmatpush.xpose.msra.mxu0 0.0
      %2540 = vmatpush.xpose.msra.mxu0 0.0
      %2541 = vmatpush.xpose.msra.mxu0 0.0
      %2542 = vmatpush.xpose.msra.mxu0 %v156
      %2543 = vmatmul.f32.gmra.mxu0 %v2501
      %v2544 = vpop.f32.mrf.mxu0
      %v2545 = vadd.f32 %v2522, %v2544
      %2546 = vmatmul.f32.gmra.mxu0 %v2503
      %v2547 = vpop.f32.mrf.mxu0
      %v2548 = vadd.f32 %v2525, %v2547
      %2549 = vdwg.mxu0
      %v2550 = vadd.f32 %v2500, %v2501
      %2551 = vadd.xlane.f32.xlu0 %v2550
      %v2552 = vpop.xlane.xlu0 %2551
      %v2553 = vadd.f32 %v2502, %v2503
      %2554 = vadd.xlane.f32.xlu0 %v2553
      %v2555 = vpop.xlane.xlu0 %2554
      %vm2556 = vcmp.gt.f32.partialorder %v2552, 0.0
      %vm2557 = vcmp.gt.f32.partialorder %v2555, 0.0
      %v2558 = vmax.f32 %v2545, 1e-30
      %v2559 = vmax.f32 %v2548, 1e-30
      %v2560 = vlog2.pop %v2558
      %v2561 = vmul.f32 %v2560, 0.6931472
      %v2562 = vlog2.pop %v2559
      %v2563 = vmul.f32 %v2562, 0.6931472
      %v2564 = vmax.f32 %v2552, 1.0
      %v2565 = vmax.f32 %v2555, 1.0
      %v2566 = vlog2.pop %v2564
      %v2567 = vmul.f32 %v2566, 0.6931472
      %v2568 = vlog2.pop %v2565
      %v2569 = vmul.f32 %v2568, 0.6931472
      %v2570 = vsub.f32 %v2561, %v2567
      %v2571 = vsub.f32 %v2563, %v2569
      %v2572 = vsel %vm2556, 1, 0
      %v2573 = vsel %vm2557, 1, 0
      %vm2574 = vcmp.eq.s32.totalorder %v2572, 1
      %vm2575 = vcmp.eq.s32.totalorder %v2573, 1
      %v2576 = vsel %vm2574, %v2570, -1e+18
      %v2577 = vsel %vm2575, %v2571, -1e+18
      %2579 = vset.pattern.permute.xlu0 0
      %2580 = vperm.xlu0 %2579, %v2576
      %v2581 = vpop.permute.xlu0 %2580
      %2584 = vset.pattern.permute.xlu0 0
      %2585 = vperm.xlu0 %2584, %v2577
      %v2586 = vpop.permute.xlu0 %2585
      %v2588 = vmul.f32 %v2581, %v268
      %v2589 = vmul.f32 %v2581, %v269
      %v2590 = vmul.f32 %v2586, %v268
      %v2591 = vmul.f32 %v2586, %v269
      %2592 = vset.pattern.permute.xlu0 1
      %2593 = vperm.xlu0 %2592, %v2576
      %v2594 = vpop.permute.xlu0 %2593
      %2596 = vset.pattern.permute.xlu0 1
      %2597 = vperm.xlu0 %2596, %v2577
      %v2598 = vpop.permute.xlu0 %2597
      %v2600 = vmul.f32 %v2594, %v282
      %v2601 = vmul.f32 %v2594, %v283
      %v2602 = vmul.f32 %v2598, %v282
      %v2603 = vmul.f32 %v2598, %v283
      %v2604 = vadd.f32 %v2588, %v2600
      %v2605 = vadd.f32 %v2589, %v2601
      %v2606 = vadd.f32 %v2590, %v2602
      %v2607 = vadd.f32 %v2591, %v2603
      %2608 = vset.pattern.permute.xlu0 2
      %2609 = vperm.xlu0 %2608, %v2576
      %v2610 = vpop.permute.xlu0 %2609
      %2612 = vset.pattern.permute.xlu0 2
      %2613 = vperm.xlu0 %2612, %v2577
      %v2614 = vpop.permute.xlu0 %2613
      %v2616 = vmul.f32 %v2610, %v300
      %v2617 = vmul.f32 %v2610, %v301
      %v2618 = vmul.f32 %v2614, %v300
      %v2619 = vmul.f32 %v2614, %v301
      %v2620 = vadd.f32 %v2604, %v2616
      %v2621 = vadd.f32 %v2605, %v2617
      %v2622 = vadd.f32 %v2606, %v2618
      %v2623 = vadd.f32 %v2607, %v2619
      %2624 = vset.pattern.permute.xlu0 3
      %2625 = vperm.xlu0 %2624, %v2576
      %v2626 = vpop.permute.xlu0 %2625
      %2628 = vset.pattern.permute.xlu0 3
      %2629 = vperm.xlu0 %2628, %v2577
      %v2630 = vpop.permute.xlu0 %2629
      %v2632 = vmul.f32 %v2626, %v318
      %v2633 = vmul.f32 %v2626, %v319
      %v2634 = vmul.f32 %v2630, %v318
      %v2635 = vmul.f32 %v2630, %v319
      %v2636 = vadd.f32 %v2620, %v2632
      %v2637 = vadd.f32 %v2621, %v2633
      %v2638 = vadd.f32 %v2622, %v2634
      %v2639 = vadd.f32 %v2623, %v2635
      %2640 = vset.pattern.permute.xlu0 4
      %2641 = vperm.xlu0 %2640, %v2576
      %v2642 = vpop.permute.xlu0 %2641
      %2644 = vset.pattern.permute.xlu0 4
      %2645 = vperm.xlu0 %2644, %v2577
      %v2646 = vpop.permute.xlu0 %2645
      %v2648 = vmul.f32 %v2642, %v336
      %v2649 = vmul.f32 %v2642, %v337
      %v2650 = vmul.f32 %v2646, %v336
      %v2651 = vmul.f32 %v2646, %v337
      %v2652 = vadd.f32 %v2636, %v2648
      %v2653 = vadd.f32 %v2637, %v2649
      %v2654 = vadd.f32 %v2638, %v2650
      %v2655 = vadd.f32 %v2639, %v2651
      %2656 = vset.pattern.permute.xlu0 5
      %2657 = vperm.xlu0 %2656, %v2576
      %v2658 = vpop.permute.xlu0 %2657
      %2660 = vset.pattern.permute.xlu0 5
      %2661 = vperm.xlu0 %2660, %v2577
      %v2662 = vpop.permute.xlu0 %2661
      %v2664 = vmul.f32 %v2658, %v354
      %v2665 = vmul.f32 %v2658, %v355
      %v2666 = vmul.f32 %v2662, %v354
      %v2667 = vmul.f32 %v2662, %v355
      %v2668 = vadd.f32 %v2652, %v2664
      %v2669 = vadd.f32 %v2653, %v2665
      %v2670 = vadd.f32 %v2654, %v2666
      %v2671 = vadd.f32 %v2655, %v2667
      %2672 = vset.pattern.permute.xlu0 6
      %2673 = vperm.xlu0 %2672, %v2576
      %v2674 = vpop.permute.xlu0 %2673
      %2676 = vset.pattern.permute.xlu0 6
      %2677 = vperm.xlu0 %2676, %v2577
      %v2678 = vpop.permute.xlu0 %2677
      %v2680 = vmul.f32 %v2674, %v372
      %v2681 = vmul.f32 %v2674, %v373
      %v2682 = vmul.f32 %v2678, %v372
      %v2683 = vmul.f32 %v2678, %v373
      %v2684 = vadd.f32 %v2668, %v2680
      %v2685 = vadd.f32 %v2669, %v2681
      %v2686 = vadd.f32 %v2670, %v2682
      %v2687 = vadd.f32 %v2671, %v2683
      %2688 = vset.pattern.permute.xlu0 7
      %2689 = vperm.xlu0 %2688, %v2576
      %v2690 = vpop.permute.xlu0 %2689
      %2692 = vset.pattern.permute.xlu0 7
      %2693 = vperm.xlu0 %2692, %v2577
      %v2694 = vpop.permute.xlu0 %2693
      %v2696 = vmul.f32 %v2690, %v390
      %v2697 = vmul.f32 %v2690, %v391
      %v2698 = vmul.f32 %v2694, %v390
      %v2699 = vmul.f32 %v2694, %v391
      %v2700 = vadd.f32 %v2684, %v2696
      %v2701 = vadd.f32 %v2685, %v2697
      %v2702 = vadd.f32 %v2686, %v2698
      %v2703 = vadd.f32 %v2687, %v2699
      %v2704 = vmax.f32 %v2700, %v2702
      %v2705 = vrot.slane %v2704, 4
      %v2706 = vmax.f32 %v2704, %v2705
      %v2707 = vrot.slane %v2706, 2
      %v2708 = vmax.f32 %v2706, %v2707
      %v2709 = vrot.slane %v2708, 1
      %v2710 = vmax.f32 %v2708, %v2709
      %v2711 = vmax.f32 %v2701, %v2703
      %v2712 = vrot.slane %v2711, 4
      %v2713 = vmax.f32 %v2711, %v2712
      %v2714 = vrot.slane %v2713, 2
      %v2715 = vmax.f32 %v2713, %v2714
      %v2716 = vrot.slane %v2715, 1
      %v2717 = vmax.f32 %v2715, %v2716
      %vm2718 = vcmp.ge.f32.partialorder %v2700, %v2710
      %vm2719 = vcmp.ge.f32.partialorder %v2701, %v2717
      %vm2720 = vcmp.ge.f32.partialorder %v2702, %v2710
      %vm2721 = vcmp.ge.f32.partialorder %v2703, %v2717
      %v2722 = vsel %vm2718, %v158, 16
      %v2723 = vsel %vm2719, %v158, 16
      %v2724 = vsel %vm2720, %v159, 16
      %v2725 = vsel %vm2721, %v159, 16
      %vm2726 = vcmp.lt.s32.totalorder %v2722, %v2724
      %v2727 = vsel %vm2726, %v2722, %v2724
      %v2728 = vrot.slane %v2727, 4
      %vm2729 = vcmp.lt.s32.totalorder %v2727, %v2728
      %v2730 = vsel %vm2729, %v2727, %v2728
      %v2731 = vrot.slane %v2730, 2
      %vm2732 = vcmp.lt.s32.totalorder %v2730, %v2731
      %v2733 = vsel %vm2732, %v2730, %v2731
      %v2734 = vrot.slane %v2733, 1
      %vm2735 = vcmp.lt.s32.totalorder %v2733, %v2734
      %v2736 = vsel %vm2735, %v2733, %v2734
      %vm2737 = vcmp.lt.s32.totalorder %v2723, %v2725
      %v2738 = vsel %vm2737, %v2723, %v2725
      %v2739 = vrot.slane %v2738, 4
      %vm2740 = vcmp.lt.s32.totalorder %v2738, %v2739
      %v2741 = vsel %vm2740, %v2738, %v2739
      %v2742 = vrot.slane %v2741, 2
      %vm2743 = vcmp.lt.s32.totalorder %v2741, %v2742
      %v2744 = vsel %vm2743, %v2741, %v2742
      %v2745 = vrot.slane %v2744, 1
      %vm2746 = vcmp.lt.s32.totalorder %v2744, %v2745
      %v2747 = vsel %vm2746, %v2744, %v2745
      %vm2748 = vcmp.eq.s32.totalorder %v2736, %v158
      %vm2749 = vcmp.eq.s32.totalorder %v2747, %v158
      %vm2750 = vcmp.eq.s32.totalorder %v2736, %v159
      %vm2751 = vcmp.eq.s32.totalorder %v2747, %v159
      %v2752 = vsel %vm2748, 1, 0
      %v2753 = vsel %vm2749, 1, 0
      %v2754 = vsel %vm2750, 1, 0
      %v2755 = vsel %vm2751, 1, 0
      %v2756 = vcvt.s32.f32 %v2752
      %v2757 = vcvt.s32.f32 %v2753
      %v2758 = vcvt.s32.f32 %v2754
      %v2759 = vcvt.s32.f32 %v2755
      %v2760 = vadd.f32 %v2756, %v2757
      %2761 = vadd.xlane.f32.xlu0 %v2760
      %v2762 = vpop.xlane.xlu0 %2761
      %v2763 = vadd.f32 %v2758, %v2759
      %2764 = vadd.xlane.f32.xlu0 %v2763
      %v2765 = vpop.xlane.xlu0 %2764
      %vm2766 = vcmp.gt.f32.partialorder %v2762, 0.0
      %vm2767 = vcmp.gt.f32.partialorder %v2765, 0.0
      %v2768 = vsel %vm2766, 1, 0
      %v2769 = vsel %vm2767, 1, 0
      %vm2770 = vcmp.lt.s32.totalorder %v158, %v2736
      %vm2771 = vcmp.lt.s32.totalorder %v158, %v2747
      %vm2772 = vcmp.lt.s32.totalorder %v159, %v2736
      %vm2773 = vcmp.lt.s32.totalorder %v159, %v2747
      %v2774 = vsel %vm2770, 1, 0
      %v2775 = vsel %vm2771, 1, 0
      %v2776 = vsel %vm2772, 1, 0
      %v2777 = vsel %vm2773, 1, 0
      %v2778 = vmul.u32 %v2774, %v2768
      %v2779 = vmul.u32 %v2775, %v2768
      %v2780 = vmul.u32 %v2776, %v2769
      %v2781 = vmul.u32 %v2777, %v2769
      %v2782 = vadd.s32 %v2778, %v2780
      %v2783 = vrot.slane %v2782, 4
      %v2784 = vadd.s32 %v2782, %v2783
      %v2785 = vrot.slane %v2784, 2
      %v2786 = vadd.s32 %v2784, %v2785
      %v2787 = vrot.slane %v2786, 1
      %v2788 = vadd.s32 %v2786, %v2787
      %v2789 = vadd.s32 %v2779, %v2781
      %v2790 = vrot.slane %v2789, 4
      %v2791 = vadd.s32 %v2789, %v2790
      %v2792 = vrot.slane %v2791, 2
      %v2793 = vadd.s32 %v2791, %v2792
      %v2794 = vrot.slane %v2793, 1
      %v2795 = vadd.s32 %v2793, %v2794
      %v2796 = vrot.slane %v2795, 7
      %vm2797 = vcmask 1040384
      %v2798 = vsel %vm2797, %v2788, %v2796
      %v2799 = vlaneseq
      %vm2800 = vcmp.ge.s32.totalorder %v2799, 0
      %vm2801 = vcmp.lt.s32.totalorder %v2799, 256
      %vm2802 = vmand %vm2800, %vm2801
      %2803 = vst.msk [vmem:[%s147] sm:$0x3] %vm2802, %v2798
      %v2804 = vadd.s32 %v2768, %v2769
      %v2805 = vrot.slane %v2804, 4
      %v2806 = vadd.s32 %v2804, %v2805
      %v2807 = vrot.slane %v2806, 2
      %v2808 = vadd.s32 %v2806, %v2807
      %v2809 = vrot.slane %v2808, 1
      %v2810 = vadd.s32 %v2808, %v2809
      %2811 = vst [vmem:[%s150] sm:$0x1] %v2810
      %p2812 = scmp.lt.s32.totalorder %s14, 1
      %s2813 = scalar_select %p2812, %s14, 1
      %s2814 = smul.addr %s2813, 2
      %s2815 = scalar_lea.vmem %s1, %s2814
      %p2816 = scmp.lt.s32.totalorder %s14, 1
      %s2817 = scalar_select %p2816, %s14, 1
      %s2818 = scalar_lea.vmem %s2, %s2817
      // Predicated region
      $region25: #{dfc_kl.1} parent=23 // pred_check
        %p2819 = pneg %p58
      $region26: #{dfc_kl.1} parent=23 // pred_check_branch
        %2821 = sbr.rel (%p2819) target = $region28
      $region27: #{dfc_kl.1} parent=23 // pred_region
        _
      $region28: #{dfc_kl.1} parent=23 // pred_fallthru
        _
      // Predicated region
      $region29: #{dfc_kl.1} parent=23 // pred_check
        %p2822 = pneg %p84
      $region30: #{dfc_kl.1} parent=23 // pred_check_branch
        %2824 = sbr.rel (%p2822) target = $region32
      $region31: #{dfc_kl.1} parent=23 // pred_region
        _
      $region32: #{dfc_kl.1} parent=23 // pred_fallthru
        _
    $region24: #{dfc_kl.1} parent=5 // pred_fallthru
      _
    %p2825 = scmp.le.s32.totalorder 2, %s9
    // Predicated region
    $region33: #{dfc_kl.1} parent=5 // pred_check
      %p2826 = pneg %p2825
    $region34: #{dfc_kl.1} parent=5 // pred_check_branch
      %2828 = sbr.rel (%p2826) target = $region36
    $region35: #{dfc_kl.1} parent=5 // pred_region
      %s2829 = ssub.s32 %s9, 2
      // Predicated region
      $region37: #{dfc_kl.1} parent=35 // pred_check
        %p2830 = pneg %p64
      $region38: #{dfc_kl.1} parent=35 // pred_check_branch
        %2832 = sbr.rel (%p2830) target = $region40
      $region39: #{dfc_kl.1} parent=35 // pred_region
        %p2833 = scmp.lt.s32.totalorder %s15, 1
        %s2834 = scalar_select %p2833, %s15, 1
        %s2835 = smul.addr %s2834, 2
        %s2836 = scalar_lea.vmem %s1, %s2835
      $region40: #{dfc_kl.1} parent=35 // pred_fallthru
        _
      // Predicated region
      $region41: #{dfc_kl.1} parent=35 // pred_check
        %p2837 = pneg %p90
      $region42: #{dfc_kl.1} parent=35 // pred_check_branch
        %2839 = sbr.rel (%p2837) target = $region44
      $region43: #{dfc_kl.1} parent=35 // pred_region
        %p2840 = scmp.lt.s32.totalorder %s15, 1
        %s2841 = scalar_select %p2840, %s15, 1
        %s2842 = scalar_lea.vmem %s2, %s2841
      $region44: #{dfc_kl.1} parent=35 // pred_fallthru
        _
    $region36: #{dfc_kl.1} parent=5 // pred_fallthru
      _
  $region6: #{dfc_kl.1} parent=0 // loop_footer
    %s13 = sadd.s32 1, %s9
  $region7: #{dfc_kl.1} parent=0 // loop_footer_branch
    %8 = sbr.rel target = $region3
  $region8: #{dfc_kl.1} parent=0 // loop_exit
    _

</llo_original>
